<compile_context>
chip_gen: v5e
topology: v5e:2x2
jax: 0.10.0
libtpu: 0.0.40
codegen_flags: <defaults>
</compile_context>

<pallas_src>
import jax
import jax.numpy as jnp
from jax import lax
from jax.experimental import pallas as pl
from jax.experimental.pallas import tpu as pltpu


def _round_up(x, m):
    return (x + m - 1) // m * m


# ---------------------------------------------------------------------------
# Fused kernel: per time chunk
#   Stage 1 (one big MXU matmul): gx = x_chunk @ W_ih + b_ih  -> VMEM scratch
#   Stage 2 (serial fori_loop):   GRU recurrence over the chunk's time steps
#
#   x_ref   : (Tc*Bp, nInp)  bf16
#   wih_ref : (nInp, 3*Hp)   bf16   (gate slabs lane-aligned)
#   bih_ref : (1, 3*Hp)      f32
#   whh_ref : (Hp, 3*Hp)     bf16
#   bhh_ref : (1, 3*Hp)      f32
#   out_ref : (Tc*Bp, Hp)    f32
#   gx_ref  : (Tc*Bp, 3*Hp)  f32    VMEM scratch (never touches HBM)
#   h_ref   : (Bp, Hp)       f32    hidden state, persists across grid steps
# ---------------------------------------------------------------------------
def _gru_fused_kernel(x_ref, wih_ref, bih_ref, whh_ref, bhh_ref,
                      out_ref, gx_ref, h_ref):
    bp, hp = h_ref.shape
    tc = out_ref.shape[0] // bp

    @pl.when(pl.program_id(0) == 0)
    def _():
        h_ref[...] = jnp.zeros_like(h_ref)

    # Fused Stage 1: one weight push of W_ih amortized over Tc*Bp rows.
    gx_ref[...] = (
        jnp.dot(x_ref[...], wih_ref[...], preferred_element_type=jnp.float32)
        + bih_ref[...]
    )

    # Loop invariants hoisted out of the time loop (JAX does not CSE the
    # broadcast; keeping whh as a single value encourages Mosaic to keep the
    # recurrent weight resident across the unrolled steps).
    whh = whh_ref[...]                                    # (Hp, 3Hp) bf16
    bhh = jnp.broadcast_to(bhh_ref[...], (bp, 3 * hp))    # (Bp, 3Hp) f32

    h0 = h_ref[...]
    carry0 = (h0.astype(jnp.bfloat16), h0)                # (bf16 for MXU, f32)

    def step(s, carry):
        h_bf, h_f32 = carry
        row = pl.multiple_of(s * bp, 8)
        gx_t = gx_ref[pl.ds(row, bp), :]                   # (Bp, 3Hp) f32 view
        # TODO(synk): at Bp=8 the W_hh weight push dominates this matmul; if a
        # bundle dump shows Mosaic re-pushing W_hh every step, drive the MXU
        # explicitly (pltpu.matmul_push_rhs once per chunk + acc_lhs/pop).
        gh = jnp.dot(h_bf, whh, preferred_element_type=jnp.float32) + bhh
        # PyTorch gate order: r, z, n — each slab is a 128-lane-aligned view.
        rz = jax.nn.sigmoid(gx_t[:, :2 * hp] + gh[:, :2 * hp])
        r = rz[:, :hp]
        z = rz[:, hp:]
        n = jnp.tanh(gx_t[:, 2 * hp:] + r * gh[:, 2 * hp:])
        h_new = (1.0 - z) * n + z * h_f32
        out_ref[pl.ds(row, bp), :] = h_new.astype(out_ref.dtype)
        return (h_new.astype(jnp.bfloat16), h_new)

    # Integer unroll so large chunks keep LLO visibility on the short body.
    _, h_last = lax.fori_loop(0, tc, step, carry0, unroll=min(8, tc))
    # NOTE: when T is padded to a multiple of Tc, the padded tail steps keep
    # evolving h with gx = b_ih (zero-padded x).  Outputs are sliced away so
    # y is correct, but h after the last chunk is NOT a valid h_T.
    h_ref[...] = h_last


def gru_forward_pallas(x, w_ih, w_hh, b_ih, b_hh, *, time_chunk=32):
    """x: (T, B, nIn); w_ih: (3H, nIn); w_hh: (3H, H); b_ih/b_hh: (3H,)."""
    T, B, nIn = x.shape
    H = w_hh.shape[1]

    Bp = _round_up(B, 8)            # sublane alignment
    Hp = _round_up(H, 128)          # lane alignment (each gate slab)
    nInp = _round_up(nIn, 16)       # bf16 sublane packing only — NOT 128
    # Choose chunking with minimal padded-time waste.
    n_chunks = pl.cdiv(T, min(time_chunk, T))
    Tc = pl.cdiv(T, n_chunks)       # time steps per grid iteration
    Tp = n_chunks * Tc
    # NOTE(v5e): re-sweep time_chunk there (different MXU/EUP balance).

    # ---- wrapper-side glue: pack weights so each gate slab (r,z,n) starts on
    #      a 128-lane boundary; matmul operands bf16, biases kept f32.
    def pack_w(w, in_dim, in_dim_p):
        slabs = []
        for g in range(3):
            wg = w[g * H:(g + 1) * H, :].T.astype(jnp.float32)      # (in, H)
            wg = jnp.pad(wg, ((0, in_dim_p - in_dim), (0, Hp - H)))
            slabs.append(wg)
        return jnp.concatenate(slabs, axis=1).astype(jnp.bfloat16)  # (in_p,3Hp)

    def pack_b(b):
        slabs = [jnp.pad(b[g * H:(g + 1) * H].astype(jnp.float32), (0, Hp - H))
                 for g in range(3)]
        return jnp.concatenate(slabs)[None, :]                      # (1, 3Hp)

    w_ih_p = pack_w(jnp.asarray(w_ih), nIn, nInp)
    w_hh_p = pack_w(jnp.asarray(w_hh), H, Hp)
    b_ih_p = pack_b(jnp.asarray(b_ih))
    b_hh_p = pack_b(jnp.asarray(b_hh))

    # Cast to bf16 BEFORE padding/reshaping (avoids a padded f32 copy in HBM).
    x_bf = jnp.asarray(x).astype(jnp.bfloat16)
    x_bf = jnp.pad(x_bf, ((0, Tp - T), (0, Bp - B), (0, nInp - nIn)))
    x_2d = x_bf.reshape(Tp * Bp, nInp)

    def run(single_buffer_weights):
        # Single-buffer the loop-invariant weights/biases (they are re-used by
        # every grid step); inputs/outputs that move per chunk stay pipelined.
        def wspec(shape):
            if single_buffer_weights:
                return pl.BlockSpec(shape, lambda c: (0,) * len(shape),
                                    pipeline_mode=pl.Buffered(1))
            return pl.BlockSpec(shape, lambda c: (0,) * len(shape))

        weight_bufs = 1 if single_buffer_weights else 2
        vmem_bytes = (
            2 * (Tc * Bp) * nInp * 2                    # x blocks (bf16, 2-buf)
            + 2 * (Tc * Bp) * Hp * 4                    # out blocks (f32, 2-buf)
            + weight_bufs * (nInp + Hp) * (3 * Hp) * 2  # W_ih + W_hh (bf16)
            + weight_bufs * 2 * (3 * Hp) * 4            # biases (f32)
            + (Tc * Bp) * (3 * Hp) * 4                  # gx scratch
            + Bp * Hp * 4                               # h scratch
        )
        vmem_limit = int(min(max(32 << 20, int(vmem_bytes * 1.25) + (1 << 20)),
                             96 << 20))

        return pl.pallas_call(
            _gru_fused_kernel,
            out_shape=jax.ShapeDtypeStruct((Tp * Bp, Hp), jnp.float32),
            grid_spec=pltpu.PrefetchScalarGridSpec(
                num_scalar_prefetch=0,
                grid=(n_chunks,),
                in_specs=[
                    pl.BlockSpec((Tc * Bp, nInp), lambda c: (c, 0)),
                    wspec((nInp, 3 * Hp)),
                    wspec((1, 3 * Hp)),
                    wspec((Hp, 3 * Hp)),
                    wspec((1, 3 * Hp)),
                ],
                out_specs=pl.BlockSpec((Tc * Bp, Hp), lambda c: (c, 0)),
                scratch_shapes=[
                    pltpu.VMEM((Tc * Bp, 3 * Hp), jnp.float32),  # gx scratch
                    pltpu.VMEM((Bp, Hp), jnp.float32),           # hidden state
                ],
            ),
            compiler_params=pltpu.CompilerParams(
                # Hidden state is carried across the time-chunk axis.
                dimension_semantics=("arbitrary",),
                vmem_limit_bytes=vmem_limit,
            ),
        )(x_2d, w_ih_p, b_ih_p, w_hh_p, b_hh_p)

    try:
        out_2d = run(single_buffer_weights=True)
    except Exception:
        # Fallback if this JAX build rejects pl.Buffered(1) single-buffering.
        out_2d = run(single_buffer_weights=False)

    return out_2d.reshape(Tp, Bp, Hp)[:T, :B, :H]


def gru_forward_ref(x, w_ih, w_hh, b_ih, b_hh):
    """Pure-JAX reference mirroring torch.nn.GRU semantics (h0 = 0) with the
    same bf16-matmul / f32-accumulation recipe as the kernel."""
    T, B, nIn = x.shape
    H = w_hh.shape[1]
    x_bf = x.astype(jnp.bfloat16)
    wih_t = w_ih.astype(jnp.bfloat16).T
    whh_t = w_hh.astype(jnp.bfloat16).T
    b_ih = b_ih.astype(jnp.float32)
    b_hh = b_hh.astype(jnp.float32)
    h0 = jnp.zeros((B, H), jnp.float32)

    def step(h, x_t):
        gx = jnp.dot(x_t, wih_t, preferred_element_type=jnp.float32) + b_ih
        gh = jnp.dot(h.astype(jnp.bfloat16), whh_t,
                     preferred_element_type=jnp.float32) + b_hh
        r = jax.nn.sigmoid(gx[:, :H] + gh[:, :H])
        z = jax.nn.sigmoid(gx[:, H:2 * H] + gh[:, H:2 * H])
        n = jnp.tanh(gx[:, 2 * H:] + r * gh[:, 2 * H:])
        h_new = (1.0 - z) * n + z * h
        return h_new, h_new

    _, ys = lax.scan(step, h0, x_bf)
    return ys


if __name__ == "__main__":
    # Small shapes consistent with the module's forward: (seq, batch, nIn).
    T, B, nIn, nHidden = 8, 4, 16, 32

    key = jax.random.PRNGKey(0)
    k_x, k_wih, k_whh, k_bih, k_bhh = jax.random.split(key, 5)

    bound = 1.0 / jnp.sqrt(jnp.float32(nHidden))
    w_ih = jax.random.uniform(k_wih, (3 * nHidden, nIn), jnp.float32, -bound, bound)
    w_hh = jax.random.uniform(k_whh, (3 * nHidden, nHidden), jnp.float32, -bound, bound)
    b_ih = jax.random.uniform(k_bih, (3 * nHidden,), jnp.float32, -bound, bound)
    b_hh = jax.random.uniform(k_bhh, (3 * nHidden,), jnp.float32, -bound, bound)

    x = jax.random.normal(k_x, (T, B, nIn), jnp.float32)

    out = gru_forward_pallas(x, w_ih, w_hh, b_ih, b_hh)
    out = jax.block_until_ready(out)

    ref = gru_forward_ref(x, w_ih, w_hh, b_ih, b_hh)
    assert out.shape == (T, B, nHidden)
    max_err = float(jnp.max(jnp.abs(out - ref)))
    assert max_err < 2e-3, f"Pallas GRU mismatch vs reference: max abs err {max_err}"

    print("KERNEL_OK")
</pallas_src>

<mosaic_0001>
module attributes {stable_mosaic.version = 11 : i64} {
  func.func @_gru_fused_kernel(%arg0: i32, %arg1: memref<64x16xbf16, #tpu.memory_space<vmem>>, %arg2: memref<16x384xbf16, #tpu.memory_space<vmem>>, %arg3: memref<1x384xf32, #tpu.memory_space<vmem>>, %arg4: memref<128x384xbf16, #tpu.memory_space<vmem>>, %arg5: memref<1x384xf32, #tpu.memory_space<vmem>>, %arg6: memref<64x128xf32, #tpu.memory_space<vmem>>, %arg7: memref<64x384xf32, #tpu.memory_space<vmem>>, %arg8: memref<8x128xf32, #tpu.memory_space<vmem>>) attributes {dimension_semantics = [#tpu.dimension_semantics<arbitrary>], iteration_bounds = array<i64: 1>, scalar_prefetch = 0 : i64, scratch_operands = 2 : i64, tpu.core_type = #tpu.core_type<tc>, window_params = [{transform_indices = @transform_0, window_bounds = array<i64: 64, 16>}, {pipeline_mode = #tpu.pipeline_mode<synchronous>, transform_indices = @transform_1, window_bounds = array<i64: 16, 384>}, {pipeline_mode = #tpu.pipeline_mode<synchronous>, transform_indices = @transform_2, window_bounds = array<i64: 1, 384>}, {pipeline_mode = #tpu.pipeline_mode<synchronous>, transform_indices = @transform_3, window_bounds = array<i64: 128, 384>}, {pipeline_mode = #tpu.pipeline_mode<synchronous>, transform_indices = @transform_4, window_bounds = array<i64: 1, 384>}, {transform_indices = @transform_5, window_bounds = array<i64: 64, 128>}]} {
    %c0_i32 = arith.constant 0 : i32
    %0 = arith.cmpi eq, %arg0, %c0_i32 : i32
    %1 = arith.extui %0 : i1 to i32
    %c0_i32_0 = arith.constant 0 : i32
    %2 = arith.cmpi ne, %1, %c0_i32_0 : i32
    scf.if %2 {
      %cst_65 = arith.constant 0.000000e+00 : f32
      %249 = vector.broadcast %cst_65 : f32 to vector<8x128xf32>
      %c0_66 = arith.constant 0 : index
      %c0_67 = arith.constant 0 : index
      %250 = vector.load %arg8[%c0_66, %c0_67] : memref<8x128xf32, #tpu.memory_space<vmem>>, vector<8x128xf32>
      tpu.vector_store %arg8[%c0_66, %c0_67], %249 {strides = array<i32>} : memref<8x128xf32, #tpu.memory_space<vmem>>, vector<8x128xf32>,
    } else {
    }
    %c0 = arith.constant 0 : index
    %c0_1 = arith.constant 0 : index
    %3 = vector.load %arg1[%c0, %c0_1] : memref<64x16xbf16, #tpu.memory_space<vmem>>, vector<64x16xbf16>
    %c0_2 = arith.constant 0 : index
    %c0_3 = arith.constant 0 : index
    %4 = vector.load %arg2[%c0_2, %c0_3] : memref<16x384xbf16, #tpu.memory_space<vmem>>, vector<16x384xbf16>
    %cst = arith.constant dense<0.000000e+00> : vector<64x384xf32>
    %5 = tpu.matmul %3, %4, %cst {dimension_numbers = #tpu.dot_dimension_numbers<[1], [0], [0], [1], [0, 0, 1, 1], [], []>} : vector<64x16xbf16>, vector<16x384xbf16>, vector<64x384xf32> -> vector<64x384xf32>
    %c0_4 = arith.constant 0 : index
    %c0_5 = arith.constant 0 : index
    %6 = vector.load %arg3[%c0_4, %c0_5] : memref<1x384xf32, #tpu.memory_space<vmem>>, vector<1x384xf32>
    %7 = vector.broadcast %6 : vector<1x384xf32> to vector<64x384xf32>
    %8 = arith.addf %5, %7 : vector<64x384xf32>
    %c0_6 = arith.constant 0 : index
    %c0_7 = arith.constant 0 : index
    %9 = vector.load %arg7[%c0_6, %c0_7] : memref<64x384xf32, #tpu.memory_space<vmem>>, vector<64x384xf32>
    tpu.vector_store %arg7[%c0_6, %c0_7], %8 {strides = array<i32>} : memref<64x384xf32, #tpu.memory_space<vmem>>, vector<64x384xf32>,
    %c0_8 = arith.constant 0 : index
    %c0_9 = arith.constant 0 : index
    %10 = vector.load %arg4[%c0_8, %c0_9] : memref<128x384xbf16, #tpu.memory_space<vmem>>, vector<128x384xbf16>
    %c0_10 = arith.constant 0 : index
    %c0_11 = arith.constant 0 : index
    %11 = vector.load %arg5[%c0_10, %c0_11] : memref<1x384xf32, #tpu.memory_space<vmem>>, vector<1x384xf32>
    %12 = vector.shape_cast %11 : vector<1x384xf32> to vector<1x384xf32>
    %13 = vector.broadcast %12 : vector<1x384xf32> to vector<8x384xf32>
    %c0_12 = arith.constant 0 : index
    %c0_13 = arith.constant 0 : index
    %14 = vector.load %arg8[%c0_12, %c0_13] : memref<8x128xf32, #tpu.memory_space<vmem>>, vector<8x128xf32>
    %15 = arith.truncf %14 : vector<8x128xf32> to vector<8x128xbf16>
    %c0_i32_14 = arith.constant 0 : i32
    %c8_i32 = arith.constant 8 : i32
    %16 = arith.muli %c0_i32_14, %c8_i32 : i32
    %17 = tpu.assume_multiple %16, 8 : i32
    %18 = arith.index_cast %17 : i32 to index
    %c0_15 = arith.constant 0 : index
    %19 = vector.load %arg7[%18, %c0_15] : memref<64x384xf32, #tpu.memory_space<vmem>>, vector<8x384xf32>
    %cst_16 = arith.constant dense<0.000000e+00> : vector<8x384xf32>
    %20 = tpu.matmul %15, %10, %cst_16 {dimension_numbers = #tpu.dot_dimension_numbers<[1], [0], [0], [1], [0, 0, 1, 1], [], []>} : vector<8x128xbf16>, vector<128x384xbf16>, vector<8x384xf32> -> vector<8x384xf32>
    %21 = arith.addf %20, %13 : vector<8x384xf32>
    %22 = vector.extract_strided_slice %19 {offsets = [0, 0], sizes = [8, 256], strides = [1, 1]} : vector<8x384xf32> to vector<8x256xf32>
    %23 = vector.extract_strided_slice %21 {offsets = [0, 0], sizes = [8, 256], strides = [1, 1]} : vector<8x384xf32> to vector<8x256xf32>
    %24 = arith.addf %22, %23 : vector<8x256xf32>
    %25 = arith.negf %24 : vector<8x256xf32>
    %26 = math.exp %25 : vector<8x256xf32>
    %cst_17 = arith.constant 1.000000e+00 : f32
    %27 = vector.broadcast %cst_17 : f32 to vector<8x256xf32>
    %28 = arith.addf %27, %26 : vector<8x256xf32>
    %29 = arith.divf %27, %28 : vector<8x256xf32>
    %30 = vector.extract_strided_slice %29 {offsets = [0, 0], sizes = [8, 128], strides = [1, 1]} : vector<8x256xf32> to vector<8x128xf32>
    %31 = vector.extract_strided_slice %29 {offsets = [0, 128], sizes = [8, 128], strides = [1, 1]} : vector<8x256xf32> to vector<8x128xf32>
    %32 = vector.extract_strided_slice %19 {offsets = [0, 256], sizes = [8, 128], strides = [1, 1]} : vector<8x384xf32> to vector<8x128xf32>
    %33 = vector.extract_strided_slice %21 {offsets = [0, 256], sizes = [8, 128], strides = [1, 1]} : vector<8x384xf32> to vector<8x128xf32>
    %34 = arith.mulf %30, %33 : vector<8x128xf32>
    %35 = arith.addf %32, %34 : vector<8x128xf32>
    %36 = math.tanh %35 : vector<8x128xf32>
    %cst_18 = arith.constant 1.000000e+00 : f32
    %37 = vector.broadcast %cst_18 : f32 to vector<8x128xf32>
    %38 = arith.subf %37, %31 : vector<8x128xf32>
    %39 = arith.mulf %38, %36 : vector<8x128xf32>
    %40 = arith.mulf %31, %14 : vector<8x128xf32>
    %41 = arith.addf %39, %40 : vector<8x128xf32>
    %42 = arith.index_cast %17 : i32 to index
    %c0_19 = arith.constant 0 : index
    %43 = vector.load %arg6[%42, %c0_19] : memref<64x128xf32, #tpu.memory_space<vmem>>, vector<8x128xf32>
    tpu.vector_store %arg6[%42, %c0_19], %41 {strides = array<i32>} : memref<64x128xf32, #tpu.memory_space<vmem>>, vector<8x128xf32>,
    %44 = arith.truncf %41 : vector<8x128xf32> to vector<8x128xbf16>
    %c1_i32 = arith.constant 1 : i32
    %c8_i32_20 = arith.constant 8 : i32
    %45 = arith.muli %c1_i32, %c8_i32_20 : i32
    %46 = tpu.assume_multiple %45, 8 : i32
    %47 = arith.index_cast %46 : i32 to index
    %c0_21 = arith.constant 0 : index
    %48 = vector.load %arg7[%47, %c0_21] : memref<64x384xf32, #tpu.memory_space<vmem>>, vector<8x384xf32>
    %cst_22 = arith.constant dense<0.000000e+00> : vector<8x384xf32>
    %49 = tpu.matmul %44, %10, %cst_22 {dimension_numbers = #tpu.dot_dimension_numbers<[1], [0], [0], [1], [0, 0, 1, 1], [], []>} : vector<8x128xbf16>, vector<128x384xbf16>, vector<8x384xf32> -> vector<8x384xf32>
    %50 = arith.addf %49, %13 : vector<8x384xf32>
    %51 = vector.extract_strided_slice %48 {offsets = [0, 0], sizes = [8, 256], strides = [1, 1]} : vector<8x384xf32> to vector<8x256xf32>
    %52 = vector.extract_strided_slice %50 {offsets = [0, 0], sizes = [8, 256], strides = [1, 1]} : vector<8x384xf32> to vector<8x256xf32>
    %53 = arith.addf %51, %52 : vector<8x256xf32>
    %54 = arith.negf %53 : vector<8x256xf32>
    %55 = math.exp %54 : vector<8x256xf32>
    %cst_23 = arith.constant 1.000000e+00 : f32
    %56 = vector.broadcast %cst_23 : f32 to vector<8x256xf32>
    %57 = arith.addf %56, %55 : vector<8x256xf32>
    %58 = arith.divf %56, %57 : vector<8x256xf32>
    %59 = vector.extract_strided_slice %58 {offsets = [0, 0], sizes = [8, 128], strides = [1, 1]} : vector<8x256xf32> to vector<8x128xf32>
    %60 = vector.extract_strided_slice %58 {offsets = [0, 128], sizes = [8, 128], strides = [1, 1]} : vector<8x256xf32> to vector<8x128xf32>
    %61 = vector.extract_strided_slice %48 {offsets = [0, 256], sizes = [8, 128], strides = [1, 1]} : vector<8x384xf32> to vector<8x128xf32>
    %62 = vector.extract_strided_slice %50 {offsets = [0, 256], sizes = [8, 128], strides = [1, 1]} : vector<8x384xf32> to vector<8x128xf32>
    %63 = arith.mulf %59, %62 : vector<8x128xf32>
    %64 = arith.addf %61, %63 : vector<8x128xf32>
    %65 = math.tanh %64 : vector<8x128xf32>
    %cst_24 = arith.constant 1.000000e+00 : f32
    %66 = vector.broadcast %cst_24 : f32 to vector<8x128xf32>
    %67 = arith.subf %66, %60 : vector<8x128xf32>
    %68 = arith.mulf %67, %65 : vector<8x128xf32>
    %69 = arith.mulf %60, %41 : vector<8x128xf32>
    %70 = arith.addf %68, %69 : vector<8x128xf32>
    %71 = arith.index_cast %46 : i32 to index
    %c0_25 = arith.constant 0 : index
    %72 = vector.load %arg6[%71, %c0_25] : memref<64x128xf32, #tpu.memory_space<vmem>>, vector<8x128xf32>
    tpu.vector_store %arg6[%71, %c0_25], %70 {strides = array<i32>} : memref<64x128xf32, #tpu.memory_space<vmem>>, vector<8x128xf32>,
    %73 = arith.truncf %70 : vector<8x128xf32> to vector<8x128xbf16>
    %c2_i32 = arith.constant 2 : i32
    %c8_i32_26 = arith.constant 8 : i32
    %74 = arith.muli %c2_i32, %c8_i32_26 : i32
    %75 = tpu.assume_multiple %74, 8 : i32
    %76 = arith.index_cast %75 : i32 to index
    %c0_27 = arith.constant 0 : index
    %77 = vector.load %arg7[%76, %c0_27] : memref<64x384xf32, #tpu.memory_space<vmem>>, vector<8x384xf32>
    %cst_28 = arith.constant dense<0.000000e+00> : vector<8x384xf32>
    %78 = tpu.matmul %73, %10, %cst_28 {dimension_numbers = #tpu.dot_dimension_numbers<[1], [0], [0], [1], [0, 0, 1, 1], [], []>} : vector<8x128xbf16>, vector<128x384xbf16>, vector<8x384xf32> -> vector<8x384xf32>
    %79 = arith.addf %78, %13 : vector<8x384xf32>
    %80 = vector.extract_strided_slice %77 {offsets = [0, 0], sizes = [8, 256], strides = [1, 1]} : vector<8x384xf32> to vector<8x256xf32>
    %81 = vector.extract_strided_slice %79 {offsets = [0, 0], sizes = [8, 256], strides = [1, 1]} : vector<8x384xf32> to vector<8x256xf32>
    %82 = arith.addf %80, %81 : vector<8x256xf32>
    %83 = arith.negf %82 : vector<8x256xf32>
    %84 = math.exp %83 : vector<8x256xf32>
    %cst_29 = arith.constant 1.000000e+00 : f32
    %85 = vector.broadcast %cst_29 : f32 to vector<8x256xf32>
    %86 = arith.addf %85, %84 : vector<8x256xf32>
    %87 = arith.divf %85, %86 : vector<8x256xf32>
    %88 = vector.extract_strided_slice %87 {offsets = [0, 0], sizes = [8, 128], strides = [1, 1]} : vector<8x256xf32> to vector<8x128xf32>
    %89 = vector.extract_strided_slice %87 {offsets = [0, 128], sizes = [8, 128], strides = [1, 1]} : vector<8x256xf32> to vector<8x128xf32>
    %90 = vector.extract_strided_slice %77 {offsets = [0, 256], sizes = [8, 128], strides = [1, 1]} : vector<8x384xf32> to vector<8x128xf32>
    %91 = vector.extract_strided_slice %79 {offsets = [0, 256], sizes = [8, 128], strides = [1, 1]} : vector<8x384xf32> to vector<8x128xf32>
    %92 = arith.mulf %88, %91 : vector<8x128xf32>
    %93 = arith.addf %90, %92 : vector<8x128xf32>
    %94 = math.tanh %93 : vector<8x128xf32>
    %cst_30 = arith.constant 1.000000e+00 : f32
    %95 = vector.broadcast %cst_30 : f32 to vector<8x128xf32>
    %96 = arith.subf %95, %89 : vector<8x128xf32>
    %97 = arith.mulf %96, %94 : vector<8x128xf32>
    %98 = arith.mulf %89, %70 : vector<8x128xf32>
    %99 = arith.addf %97, %98 : vector<8x128xf32>
    %100 = arith.index_cast %75 : i32 to index
    %c0_31 = arith.constant 0 : index
    %101 = vector.load %arg6[%100, %c0_31] : memref<64x128xf32, #tpu.memory_space<vmem>>, vector<8x128xf32>
    tpu.vector_store %arg6[%100, %c0_31], %99 {strides = array<i32>} : memref<64x128xf32, #tpu.memory_space<vmem>>, vector<8x128xf32>,
    %102 = arith.truncf %99 : vector<8x128xf32> to vector<8x128xbf16>
    %c3_i32 = arith.constant 3 : i32
    %c8_i32_32 = arith.constant 8 : i32
    %103 = arith.muli %c3_i32, %c8_i32_32 : i32
    %104 = tpu.assume_multiple %103, 8 : i32
    %105 = arith.index_cast %104 : i32 to index
    %c0_33 = arith.constant 0 : index
    %106 = vector.load %arg7[%105, %c0_33] : memref<64x384xf32, #tpu.memory_space<vmem>>, vector<8x384xf32>
    %cst_34 = arith.constant dense<0.000000e+00> : vector<8x384xf32>
    %107 = tpu.matmul %102, %10, %cst_34 {dimension_numbers = #tpu.dot_dimension_numbers<[1], [0], [0], [1], [0, 0, 1, 1], [], []>} : vector<8x128xbf16>, vector<128x384xbf16>, vector<8x384xf32> -> vector<8x384xf32>
    %108 = arith.addf %107, %13 : vector<8x384xf32>
    %109 = vector.extract_strided_slice %106 {offsets = [0, 0], sizes = [8, 256], strides = [1, 1]} : vector<8x384xf32> to vector<8x256xf32>
    %110 = vector.extract_strided_slice %108 {offsets = [0, 0], sizes = [8, 256], strides = [1, 1]} : vector<8x384xf32> to vector<8x256xf32>
    %111 = arith.addf %109, %110 : vector<8x256xf32>
    %112 = arith.negf %111 : vector<8x256xf32>
    %113 = math.exp %112 : vector<8x256xf32>
    %cst_35 = arith.constant 1.000000e+00 : f32
    %114 = vector.broadcast %cst_35 : f32 to vector<8x256xf32>
    %115 = arith.addf %114, %113 : vector<8x256xf32>
    %116 = arith.divf %114, %115 : vector<8x256xf32>
    %117 = vector.extract_strided_slice %116 {offsets = [0, 0], sizes = [8, 128], strides = [1, 1]} : vector<8x256xf32> to vector<8x128xf32>
    %118 = vector.extract_strided_slice %116 {offsets = [0, 128], sizes = [8, 128], strides = [1, 1]} : vector<8x256xf32> to vector<8x128xf32>
    %119 = vector.extract_strided_slice %106 {offsets = [0, 256], sizes = [8, 128], strides = [1, 1]} : vector<8x384xf32> to vector<8x128xf32>
    %120 = vector.extract_strided_slice %108 {offsets = [0, 256], sizes = [8, 128], strides = [1, 1]} : vector<8x384xf32> to vector<8x128xf32>
    %121 = arith.mulf %117, %120 : vector<8x128xf32>
    %122 = arith.addf %119, %121 : vector<8x128xf32>
    %123 = math.tanh %122 : vector<8x128xf32>
    %cst_36 = arith.constant 1.000000e+00 : f32
    %124 = vector.broadcast %cst_36 : f32 to vector<8x128xf32>
    %125 = arith.subf %124, %118 : vector<8x128xf32>
    %126 = arith.mulf %125, %123 : vector<8x128xf32>
    %127 = arith.mulf %118, %99 : vector<8x128xf32>
    %128 = arith.addf %126, %127 : vector<8x128xf32>
    %129 = arith.index_cast %104 : i32 to index
    %c0_37 = arith.constant 0 : index
    %130 = vector.load %arg6[%129, %c0_37] : memref<64x128xf32, #tpu.memory_space<vmem>>, vector<8x128xf32>
    tpu.vector_store %arg6[%129, %c0_37], %128 {strides = array<i32>} : memref<64x128xf32, #tpu.memory_space<vmem>>, vector<8x128xf32>,
    %131 = arith.truncf %128 : vector<8x128xf32> to vector<8x128xbf16>
    %c4_i32 = arith.constant 4 : i32
    %c8_i32_38 = arith.constant 8 : i32
    %132 = arith.muli %c4_i32, %c8_i32_38 : i32
    %133 = tpu.assume_multiple %132, 8 : i32
    %134 = arith.index_cast %133 : i32 to index
    %c0_39 = arith.constant 0 : index
    %135 = vector.load %arg7[%134, %c0_39] : memref<64x384xf32, #tpu.memory_space<vmem>>, vector<8x384xf32>
    %cst_40 = arith.constant dense<0.000000e+00> : vector<8x384xf32>
    %136 = tpu.matmul %131, %10, %cst_40 {dimension_numbers = #tpu.dot_dimension_numbers<[1], [0], [0], [1], [0, 0, 1, 1], [], []>} : vector<8x128xbf16>, vector<128x384xbf16>, vector<8x384xf32> -> vector<8x384xf32>
    %137 = arith.addf %136, %13 : vector<8x384xf32>
    %138 = vector.extract_strided_slice %135 {offsets = [0, 0], sizes = [8, 256], strides = [1, 1]} : vector<8x384xf32> to vector<8x256xf32>
    %139 = vector.extract_strided_slice %137 {offsets = [0, 0], sizes = [8, 256], strides = [1, 1]} : vector<8x384xf32> to vector<8x256xf32>
    %140 = arith.addf %138, %139 : vector<8x256xf32>
    %141 = arith.negf %140 : vector<8x256xf32>
    %142 = math.exp %141 : vector<8x256xf32>
    %cst_41 = arith.constant 1.000000e+00 : f32
    %143 = vector.broadcast %cst_41 : f32 to vector<8x256xf32>
    %144 = arith.addf %143, %142 : vector<8x256xf32>
    %145 = arith.divf %143, %144 : vector<8x256xf32>
    %146 = vector.extract_strided_slice %145 {offsets = [0, 0], sizes = [8, 128], strides = [1, 1]} : vector<8x256xf32> to vector<8x128xf32>
    %147 = vector.extract_strided_slice %145 {offsets = [0, 128], sizes = [8, 128], strides = [1, 1]} : vector<8x256xf32> to vector<8x128xf32>
    %148 = vector.extract_strided_slice %135 {offsets = [0, 256], sizes = [8, 128], strides = [1, 1]} : vector<8x384xf32> to vector<8x128xf32>
    %149 = vector.extract_strided_slice %137 {offsets = [0, 256], sizes = [8, 128], strides = [1, 1]} : vector<8x384xf32> to vector<8x128xf32>
    %150 = arith.mulf %146, %149 : vector<8x128xf32>
    %151 = arith.addf %148, %150 : vector<8x128xf32>
    %152 = math.tanh %151 : vector<8x128xf32>
    %cst_42 = arith.constant 1.000000e+00 : f32
    %153 = vector.broadcast %cst_42 : f32 to vector<8x128xf32>
    %154 = arith.subf %153, %147 : vector<8x128xf32>
    %155 = arith.mulf %154, %152 : vector<8x128xf32>
    %156 = arith.mulf %147, %128 : vector<8x128xf32>
    %157 = arith.addf %155, %156 : vector<8x128xf32>
    %158 = arith.index_cast %133 : i32 to index
    %c0_43 = arith.constant 0 : index
    %159 = vector.load %arg6[%158, %c0_43] : memref<64x128xf32, #tpu.memory_space<vmem>>, vector<8x128xf32>
    tpu.vector_store %arg6[%158, %c0_43], %157 {strides = array<i32>} : memref<64x128xf32, #tpu.memory_space<vmem>>, vector<8x128xf32>,
    %160 = arith.truncf %157 : vector<8x128xf32> to vector<8x128xbf16>
    %c5_i32 = arith.constant 5 : i32
    %c8_i32_44 = arith.constant 8 : i32
    %161 = arith.muli %c5_i32, %c8_i32_44 : i32
    %162 = tpu.assume_multiple %161, 8 : i32
    %163 = arith.index_cast %162 : i32 to index
    %c0_45 = arith.constant 0 : index
    %164 = vector.load %arg7[%163, %c0_45] : memref<64x384xf32, #tpu.memory_space<vmem>>, vector<8x384xf32>
    %cst_46 = arith.constant dense<0.000000e+00> : vector<8x384xf32>
    %165 = tpu.matmul %160, %10, %cst_46 {dimension_numbers = #tpu.dot_dimension_numbers<[1], [0], [0], [1], [0, 0, 1, 1], [], []>} : vector<8x128xbf16>, vector<128x384xbf16>, vector<8x384xf32> -> vector<8x384xf32>
    %166 = arith.addf %165, %13 : vector<8x384xf32>
    %167 = vector.extract_strided_slice %164 {offsets = [0, 0], sizes = [8, 256], strides = [1, 1]} : vector<8x384xf32> to vector<8x256xf32>
    %168 = vector.extract_strided_slice %166 {offsets = [0, 0], sizes = [8, 256], strides = [1, 1]} : vector<8x384xf32> to vector<8x256xf32>
    %169 = arith.addf %167, %168 : vector<8x256xf32>
    %170 = arith.negf %169 : vector<8x256xf32>
    %171 = math.exp %170 : vector<8x256xf32>
    %cst_47 = arith.constant 1.000000e+00 : f32
    %172 = vector.broadcast %cst_47 : f32 to vector<8x256xf32>
    %173 = arith.addf %172, %171 : vector<8x256xf32>
    %174 = arith.divf %172, %173 : vector<8x256xf32>
    %175 = vector.extract_strided_slice %174 {offsets = [0, 0], sizes = [8, 128], strides = [1, 1]} : vector<8x256xf32> to vector<8x128xf32>
    %176 = vector.extract_strided_slice %174 {offsets = [0, 128], sizes = [8, 128], strides = [1, 1]} : vector<8x256xf32> to vector<8x128xf32>
    %177 = vector.extract_strided_slice %164 {offsets = [0, 256], sizes = [8, 128], strides = [1, 1]} : vector<8x384xf32> to vector<8x128xf32>
    %178 = vector.extract_strided_slice %166 {offsets = [0, 256], sizes = [8, 128], strides = [1, 1]} : vector<8x384xf32> to vector<8x128xf32>
    %179 = arith.mulf %175, %178 : vector<8x128xf32>
    %180 = arith.addf %177, %179 : vector<8x128xf32>
    %181 = math.tanh %180 : vector<8x128xf32>
    %cst_48 = arith.constant 1.000000e+00 : f32
    %182 = vector.broadcast %cst_48 : f32 to vector<8x128xf32>
    %183 = arith.subf %182, %176 : vector<8x128xf32>
    %184 = arith.mulf %183, %181 : vector<8x128xf32>
    %185 = arith.mulf %176, %157 : vector<8x128xf32>
    %186 = arith.addf %184, %185 : vector<8x128xf32>
    %187 = arith.index_cast %162 : i32 to index
    %c0_49 = arith.constant 0 : index
    %188 = vector.load %arg6[%187, %c0_49] : memref<64x128xf32, #tpu.memory_space<vmem>>, vector<8x128xf32>
    tpu.vector_store %arg6[%187, %c0_49], %186 {strides = array<i32>} : memref<64x128xf32, #tpu.memory_space<vmem>>, vector<8x128xf32>,
    %189 = arith.truncf %186 : vector<8x128xf32> to vector<8x128xbf16>
    %c6_i32 = arith.constant 6 : i32
    %c8_i32_50 = arith.constant 8 : i32
    %190 = arith.muli %c6_i32, %c8_i32_50 : i32
    %191 = tpu.assume_multiple %190, 8 : i32
    %192 = arith.index_cast %191 : i32 to index
    %c0_51 = arith.constant 0 : index
    %193 = vector.load %arg7[%192, %c0_51] : memref<64x384xf32, #tpu.memory_space<vmem>>, vector<8x384xf32>
    %cst_52 = arith.constant dense<0.000000e+00> : vector<8x384xf32>
    %194 = tpu.matmul %189, %10, %cst_52 {dimension_numbers = #tpu.dot_dimension_numbers<[1], [0], [0], [1], [0, 0, 1, 1], [], []>} : vector<8x128xbf16>, vector<128x384xbf16>, vector<8x384xf32> -> vector<8x384xf32>
    %195 = arith.addf %194, %13 : vector<8x384xf32>
    %196 = vector.extract_strided_slice %193 {offsets = [0, 0], sizes = [8, 256], strides = [1, 1]} : vector<8x384xf32> to vector<8x256xf32>
    %197 = vector.extract_strided_slice %195 {offsets = [0, 0], sizes = [8, 256], strides = [1, 1]} : vector<8x384xf32> to vector<8x256xf32>
    %198 = arith.addf %196, %197 : vector<8x256xf32>
    %199 = arith.negf %198 : vector<8x256xf32>
    %200 = math.exp %199 : vector<8x256xf32>
    %cst_53 = arith.constant 1.000000e+00 : f32
    %201 = vector.broadcast %cst_53 : f32 to vector<8x256xf32>
    %202 = arith.addf %201, %200 : vector<8x256xf32>
    %203 = arith.divf %201, %202 : vector<8x256xf32>
    %204 = vector.extract_strided_slice %203 {offsets = [0, 0], sizes = [8, 128], strides = [1, 1]} : vector<8x256xf32> to vector<8x128xf32>
    %205 = vector.extract_strided_slice %203 {offsets = [0, 128], sizes = [8, 128], strides = [1, 1]} : vector<8x256xf32> to vector<8x128xf32>
    %206 = vector.extract_strided_slice %193 {offsets = [0, 256], sizes = [8, 128], strides = [1, 1]} : vector<8x384xf32> to vector<8x128xf32>
    %207 = vector.extract_strided_slice %195 {offsets = [0, 256], sizes = [8, 128], strides = [1, 1]} : vector<8x384xf32> to vector<8x128xf32>
    %208 = arith.mulf %204, %207 : vector<8x128xf32>
    %209 = arith.addf %206, %208 : vector<8x128xf32>
    %210 = math.tanh %209 : vector<8x128xf32>
    %cst_54 = arith.constant 1.000000e+00 : f32
    %211 = vector.broadcast %cst_54 : f32 to vector<8x128xf32>
    %212 = arith.subf %211, %205 : vector<8x128xf32>
    %213 = arith.mulf %212, %210 : vector<8x128xf32>
    %214 = arith.mulf %205, %186 : vector<8x128xf32>
    %215 = arith.addf %213, %214 : vector<8x128xf32>
    %216 = arith.index_cast %191 : i32 to index
    %c0_55 = arith.constant 0 : index
    %217 = vector.load %arg6[%216, %c0_55] : memref<64x128xf32, #tpu.memory_space<vmem>>, vector<8x128xf32>
    tpu.vector_store %arg6[%216, %c0_55], %215 {strides = array<i32>} : memref<64x128xf32, #tpu.memory_space<vmem>>, vector<8x128xf32>,
    %218 = arith.truncf %215 : vector<8x128xf32> to vector<8x128xbf16>
    %c7_i32 = arith.constant 7 : i32
    %c8_i32_56 = arith.constant 8 : i32
    %219 = arith.muli %c7_i32, %c8_i32_56 : i32
    %220 = tpu.assume_multiple %219, 8 : i32
    %221 = arith.index_cast %220 : i32 to index
    %c0_57 = arith.constant 0 : index
    %222 = vector.load %arg7[%221, %c0_57] : memref<64x384xf32, #tpu.memory_space<vmem>>, vector<8x384xf32>
    %cst_58 = arith.constant dense<0.000000e+00> : vector<8x384xf32>
    %223 = tpu.matmul %218, %10, %cst_58 {dimension_numbers = #tpu.dot_dimension_numbers<[1], [0], [0], [1], [0, 0, 1, 1], [], []>} : vector<8x128xbf16>, vector<128x384xbf16>, vector<8x384xf32> -> vector<8x384xf32>
    %224 = arith.addf %223, %13 : vector<8x384xf32>
    %225 = vector.extract_strided_slice %222 {offsets = [0, 0], sizes = [8, 256], strides = [1, 1]} : vector<8x384xf32> to vector<8x256xf32>
    %226 = vector.extract_strided_slice %224 {offsets = [0, 0], sizes = [8, 256], strides = [1, 1]} : vector<8x384xf32> to vector<8x256xf32>
    %227 = arith.addf %225, %226 : vector<8x256xf32>
    %228 = arith.negf %227 : vector<8x256xf32>
    %229 = math.exp %228 : vector<8x256xf32>
    %cst_59 = arith.constant 1.000000e+00 : f32
    %230 = vector.broadcast %cst_59 : f32 to vector<8x256xf32>
    %231 = arith.addf %230, %229 : vector<8x256xf32>
    %232 = arith.divf %230, %231 : vector<8x256xf32>
    %233 = vector.extract_strided_slice %232 {offsets = [0, 0], sizes = [8, 128], strides = [1, 1]} : vector<8x256xf32> to vector<8x128xf32>
    %234 = vector.extract_strided_slice %232 {offsets = [0, 128], sizes = [8, 128], strides = [1, 1]} : vector<8x256xf32> to vector<8x128xf32>
    %235 = vector.extract_strided_slice %222 {offsets = [0, 256], sizes = [8, 128], strides = [1, 1]} : vector<8x384xf32> to vector<8x128xf32>
    %236 = vector.extract_strided_slice %224 {offsets = [0, 256], sizes = [8, 128], strides = [1, 1]} : vector<8x384xf32> to vector<8x128xf32>
    %237 = arith.mulf %233, %236 : vector<8x128xf32>
    %238 = arith.addf %235, %237 : vector<8x128xf32>
    %239 = math.tanh %238 : vector<8x128xf32>
    %cst_60 = arith.constant 1.000000e+00 : f32
    %240 = vector.broadcast %cst_60 : f32 to vector<8x128xf32>
    %241 = arith.subf %240, %234 : vector<8x128xf32>
    %242 = arith.mulf %241, %239 : vector<8x128xf32>
    %243 = arith.mulf %234, %215 : vector<8x128xf32>
    %244 = arith.addf %242, %243 : vector<8x128xf32>
    %245 = arith.index_cast %220 : i32 to index
    %c0_61 = arith.constant 0 : index
    %246 = vector.load %arg6[%245, %c0_61] : memref<64x128xf32, #tpu.memory_space<vmem>>, vector<8x128xf32>
    tpu.vector_store %arg6[%245, %c0_61], %244 {strides = array<i32>} : memref<64x128xf32, #tpu.memory_space<vmem>>, vector<8x128xf32>,
    %247 = arith.truncf %244 : vector<8x128xf32> to vector<8x128xbf16>
    %c8_i32_62 = arith.constant 8 : i32
    %c0_63 = arith.constant 0 : index
    %c0_64 = arith.constant 0 : index
    %248 = vector.load %arg8[%c0_63, %c0_64] : memref<8x128xf32, #tpu.memory_space<vmem>>, vector<8x128xf32>
    tpu.vector_store %arg8[%c0_63, %c0_64], %244 {strides = array<i32>} : memref<8x128xf32, #tpu.memory_space<vmem>>, vector<8x128xf32>,
    return
  }
  func.func @transform_0(%arg0: i32) -> (i32, i32) {
    %c0_i32 = arith.constant 0 : i32
    %c0_i32_0 = arith.constant 0 : i32
    return %arg0, %c0_i32 : i32, i32
  }
  func.func @transform_1(%arg0: i32) -> (i32, i32) {
    %c0_i32 = arith.constant 0 : i32
    %c0_i32_0 = arith.constant 0 : i32
    %c0_i32_1 = arith.constant 0 : i32
    return %c0_i32, %c0_i32_0 : i32, i32
  }
  func.func @transform_2(%arg0: i32) -> (i32, i32) {
    %c0_i32 = arith.constant 0 : i32
    %c0_i32_0 = arith.constant 0 : i32
    %c0_i32_1 = arith.constant 0 : i32
    return %c0_i32, %c0_i32_0 : i32, i32
  }
  func.func @transform_3(%arg0: i32) -> (i32, i32) {
    %c0_i32 = arith.constant 0 : i32
    %c0_i32_0 = arith.constant 0 : i32
    %c0_i32_1 = arith.constant 0 : i32
    return %c0_i32, %c0_i32_0 : i32, i32
  }
  func.func @transform_4(%arg0: i32) -> (i32, i32) {
    %c0_i32 = arith.constant 0 : i32
    %c0_i32_0 = arith.constant 0 : i32
    %c0_i32_1 = arith.constant 0 : i32
    return %c0_i32, %c0_i32_0 : i32, i32
  }
  func.func @transform_5(%arg0: i32) -> (i32, i32) {
    %c0_i32 = arith.constant 0 : i32
    %c0_i32_0 = arith.constant 0 : i32
    return %arg0, %c0_i32 : i32, i32
  }
}

module attributes {stable_mosaic.version = 11 : i64} {
  func.func @_gru_fused_kernel(%arg0: i32, %arg1: memref<64x16xbf16, #tpu.memory_space<vmem>>, %arg2: memref<16x384xbf16, #tpu.memory_space<vmem>>, %arg3: memref<1x384xf32, #tpu.memory_space<vmem>>, %arg4: memref<128x384xbf16, #tpu.memory_space<vmem>>, %arg5: memref<1x384xf32, #tpu.memory_space<vmem>>, %arg6: memref<64x128xf32, #tpu.memory_space<vmem>>, %arg7: memref<64x384xf32, #tpu.memory_space<vmem>>, %arg8: memref<8x128xf32, #tpu.memory_space<vmem>>) attributes {dimension_semantics = [#tpu.dimension_semantics<arbitrary>], iteration_bounds = array<i64: 1>, scalar_prefetch = 0 : i64, scratch_operands = 2 : i64, tpu.core_type = #tpu.core_type<tc>, window_params = [{transform_indices = @transform_0, window_bounds = array<i64: 64, 16>}, {pipeline_mode = #tpu.pipeline_mode<synchronous>, transform_indices = @transform_1, window_bounds = array<i64: 16, 384>}, {pipeline_mode = #tpu.pipeline_mode<synchronous>, transform_indices = @transform_2, window_bounds = array<i64: 1, 384>}, {pipeline_mode = #tpu.pipeline_mode<synchronous>, transform_indices = @transform_3, window_bounds = array<i64: 128, 384>}, {pipeline_mode = #tpu.pipeline_mode<synchronous>, transform_indices = @transform_4, window_bounds = array<i64: 1, 384>}, {transform_indices = @transform_5, window_bounds = array<i64: 64, 128>}]} {
    %c0_i32 = arith.constant 0 : i32
    %0 = arith.cmpi eq, %arg0, %c0_i32 : i32
    %1 = arith.extui %0 : i1 to i32
    %c0_i32_0 = arith.constant 0 : i32
    %2 = arith.cmpi ne, %1, %c0_i32_0 : i32
    scf.if %2 {
      %cst_65 = arith.constant 0.000000e+00 : f32
      %249 = vector.broadcast %cst_65 : f32 to vector<8x128xf32>
      %c0_66 = arith.constant 0 : index
      %c0_67 = arith.constant 0 : index
      %250 = vector.load %arg8[%c0_66, %c0_67] : memref<8x128xf32, #tpu.memory_space<vmem>>, vector<8x128xf32>
      tpu.vector_store %arg8[%c0_66, %c0_67], %249 {strides = array<i32>} : memref<8x128xf32, #tpu.memory_space<vmem>>, vector<8x128xf32>,
    } else {
    }
    %c0 = arith.constant 0 : index
    %c0_1 = arith.constant 0 : index
    %3 = vector.load %arg1[%c0, %c0_1] : memref<64x16xbf16, #tpu.memory_space<vmem>>, vector<64x16xbf16>
    %c0_2 = arith.constant 0 : index
    %c0_3 = arith.constant 0 : index
    %4 = vector.load %arg2[%c0_2, %c0_3] : memref<16x384xbf16, #tpu.memory_space<vmem>>, vector<16x384xbf16>
    %cst = arith.constant dense<0.000000e+00> : vector<64x384xf32>
    %5 = tpu.matmul %3, %4, %cst {dimension_numbers = #tpu.dot_dimension_numbers<[1], [0], [0], [1], [0, 0, 1, 1], [], []>} : vector<64x16xbf16>, vector<16x384xbf16>, vector<64x384xf32> -> vector<64x384xf32>
    %c0_4 = arith.constant 0 : index
    %c0_5 = arith.constant 0 : index
    %6 = vector.load %arg3[%c0_4, %c0_5] : memref<1x384xf32, #tpu.memory_space<vmem>>, vector<1x384xf32>
    %7 = vector.broadcast %6 : vector<1x384xf32> to vector<64x384xf32>
    %8 = arith.addf %5, %7 : vector<64x384xf32>
    %c0_6 = arith.constant 0 : index
    %c0_7 = arith.constant 0 : index
    %9 = vector.load %arg7[%c0_6, %c0_7] : memref<64x384xf32, #tpu.memory_space<vmem>>, vector<64x384xf32>
    tpu.vector_store %arg7[%c0_6, %c0_7], %8 {strides = array<i32>} : memref<64x384xf32, #tpu.memory_space<vmem>>, vector<64x384xf32>,
    %c0_8 = arith.constant 0 : index
    %c0_9 = arith.constant 0 : index
    %10 = vector.load %arg4[%c0_8, %c0_9] : memref<128x384xbf16, #tpu.memory_space<vmem>>, vector<128x384xbf16>
    %c0_10 = arith.constant 0 : index
    %c0_11 = arith.constant 0 : index
    %11 = vector.load %arg5[%c0_10, %c0_11] : memref<1x384xf32, #tpu.memory_space<vmem>>, vector<1x384xf32>
    %12 = vector.shape_cast %11 : vector<1x384xf32> to vector<1x384xf32>
    %13 = vector.broadcast %12 : vector<1x384xf32> to vector<8x384xf32>
    %c0_12 = arith.constant 0 : index
    %c0_13 = arith.constant 0 : index
    %14 = vector.load %arg8[%c0_12, %c0_13] : memref<8x128xf32, #tpu.memory_space<vmem>>, vector<8x128xf32>
    %15 = arith.truncf %14 : vector<8x128xf32> to vector<8x128xbf16>
    %c0_i32_14 = arith.constant 0 : i32
    %c8_i32 = arith.constant 8 : i32
    %16 = arith.muli %c0_i32_14, %c8_i32 : i32
    %17 = tpu.assume_multiple %16, 8 : i32
    %18 = arith.index_cast %17 : i32 to index
    %c0_15 = arith.constant 0 : index
    %19 = vector.load %arg7[%18, %c0_15] : memref<64x384xf32, #tpu.memory_space<vmem>>, vector<8x384xf32>
    %cst_16 = arith.constant dense<0.000000e+00> : vector<8x384xf32>
    %20 = tpu.matmul %15, %10, %cst_16 {dimension_numbers = #tpu.dot_dimension_numbers<[1], [0], [0], [1], [0, 0, 1, 1], [], []>} : vector<8x128xbf16>, vector<128x384xbf16>, vector<8x384xf32> -> vector<8x384xf32>
    %21 = arith.addf %20, %13 : vector<8x384xf32>
    %22 = vector.extract_strided_slice %19 {offsets = [0, 0], sizes = [8, 256], strides = [1, 1]} : vector<8x384xf32> to vector<8x256xf32>
    %23 = vector.extract_strided_slice %21 {offsets = [0, 0], sizes = [8, 256], strides = [1, 1]} : vector<8x384xf32> to vector<8x256xf32>
    %24 = arith.addf %22, %23 : vector<8x256xf32>
    %25 = arith.negf %24 : vector<8x256xf32>
    %26 = math.exp %25 : vector<8x256xf32>
    %cst_17 = arith.constant 1.000000e+00 : f32
    %27 = vector.broadcast %cst_17 : f32 to vector<8x256xf32>
    %28 = arith.addf %27, %26 : vector<8x256xf32>
    %29 = arith.divf %27, %28 : vector<8x256xf32>
    %30 = vector.extract_strided_slice %29 {offsets = [0, 0], sizes = [8, 128], strides = [1, 1]} : vector<8x256xf32> to vector<8x128xf32>
    %31 = vector.extract_strided_slice %29 {offsets = [0, 128], sizes = [8, 128], strides = [1, 1]} : vector<8x256xf32> to vector<8x128xf32>
    %32 = vector.extract_strided_slice %19 {offsets = [0, 256], sizes = [8, 128], strides = [1, 1]} : vector<8x384xf32> to vector<8x128xf32>
    %33 = vector.extract_strided_slice %21 {offsets = [0, 256], sizes = [8, 128], strides = [1, 1]} : vector<8x384xf32> to vector<8x128xf32>
    %34 = arith.mulf %30, %33 : vector<8x128xf32>
    %35 = arith.addf %32, %34 : vector<8x128xf32>
    %36 = math.tanh %35 : vector<8x128xf32>
    %cst_18 = arith.constant 1.000000e+00 : f32
    %37 = vector.broadcast %cst_18 : f32 to vector<8x128xf32>
    %38 = arith.subf %37, %31 : vector<8x128xf32>
    %39 = arith.mulf %38, %36 : vector<8x128xf32>
    %40 = arith.mulf %31, %14 : vector<8x128xf32>
    %41 = arith.addf %39, %40 : vector<8x128xf32>
    %42 = arith.index_cast %17 : i32 to index
    %c0_19 = arith.constant 0 : index
    %43 = vector.load %arg6[%42, %c0_19] : memref<64x128xf32, #tpu.memory_space<vmem>>, vector<8x128xf32>
    tpu.vector_store %arg6[%42, %c0_19], %41 {strides = array<i32>} : memref<64x128xf32, #tpu.memory_space<vmem>>, vector<8x128xf32>,
    %44 = arith.truncf %41 : vector<8x128xf32> to vector<8x128xbf16>
    %c1_i32 = arith.constant 1 : i32
    %c8_i32_20 = arith.constant 8 : i32
    %45 = arith.muli %c1_i32, %c8_i32_20 : i32
    %46 = tpu.assume_multiple %45, 8 : i32
    %47 = arith.index_cast %46 : i32 to index
    %c0_21 = arith.constant 0 : index
    %48 = vector.load %arg7[%47, %c0_21] : memref<64x384xf32, #tpu.memory_space<vmem>>, vector<8x384xf32>
    %cst_22 = arith.constant dense<0.000000e+00> : vector<8x384xf32>
    %49 = tpu.matmul %44, %10, %cst_22 {dimension_numbers = #tpu.dot_dimension_numbers<[1], [0], [0], [1], [0, 0, 1, 1], [], []>} : vector<8x128xbf16>, vector<128x384xbf16>, vector<8x384xf32> -> vector<8x384xf32>
    %50 = arith.addf %49, %13 : vector<8x384xf32>
    %51 = vector.extract_strided_slice %48 {offsets = [0, 0], sizes = [8, 256], strides = [1, 1]} : vector<8x384xf32> to vector<8x256xf32>
    %52 = vector.extract_strided_slice %50 {offsets = [0, 0], sizes = [8, 256], strides = [1, 1]} : vector<8x384xf32> to vector<8x256xf32>
    %53 = arith.addf %51, %52 : vector<8x256xf32>
    %54 = arith.negf %53 : vector<8x256xf32>
    %55 = math.exp %54 : vector<8x256xf32>
    %cst_23 = arith.constant 1.000000e+00 : f32
    %56 = vector.broadcast %cst_23 : f32 to vector<8x256xf32>
    %57 = arith.addf %56, %55 : vector<8x256xf32>
    %58 = arith.divf %56, %57 : vector<8x256xf32>
    %59 = vector.extract_strided_slice %58 {offsets = [0, 0], sizes = [8, 128], strides = [1, 1]} : vector<8x256xf32> to vector<8x128xf32>
    %60 = vector.extract_strided_slice %58 {offsets = [0, 128], sizes = [8, 128], strides = [1, 1]} : vector<8x256xf32> to vector<8x128xf32>
    %61 = vector.extract_strided_slice %48 {offsets = [0, 256], sizes = [8, 128], strides = [1, 1]} : vector<8x384xf32> to vector<8x128xf32>
    %62 = vector.extract_strided_slice %50 {offsets = [0, 256], sizes = [8, 128], strides = [1, 1]} : vector<8x384xf32> to vector<8x128xf32>
    %63 = arith.mulf %59, %62 : vector<8x128xf32>
    %64 = arith.addf %61, %63 : vector<8x128xf32>
    %65 = math.tanh %64 : vector<8x128xf32>
    %cst_24 = arith.constant 1.000000e+00 : f32
    %66 = vector.broadcast %cst_24 : f32 to vector<8x128xf32>
    %67 = arith.subf %66, %60 : vector<8x128xf32>
    %68 = arith.mulf %67, %65 : vector<8x128xf32>
    %69 = arith.mulf %60, %41 : vector<8x128xf32>
    %70 = arith.addf %68, %69 : vector<8x128xf32>
    %71 = arith.index_cast %46 : i32 to index
    %c0_25 = arith.constant 0 : index
    %72 = vector.load %arg6[%71, %c0_25] : memref<64x128xf32, #tpu.memory_space<vmem>>, vector<8x128xf32>
    tpu.vector_store %arg6[%71, %c0_25], %70 {strides = array<i32>} : memref<64x128xf32, #tpu.memory_space<vmem>>, vector<8x128xf32>,
    %73 = arith.truncf %70 : vector<8x128xf32> to vector<8x128xbf16>
    %c2_i32 = arith.constant 2 : i32
    %c8_i32_26 = arith.constant 8 : i32
    %74 = arith.muli %c2_i32, %c8_i32_26 : i32
    %75 = tpu.assume_multiple %74, 8 : i32
    %76 = arith.index_cast %75 : i32 to index
    %c0_27 = arith.constant 0 : index
    %77 = vector.load %arg7[%76, %c0_27] : memref<64x384xf32, #tpu.memory_space<vmem>>, vector<8x384xf32>
    %cst_28 = arith.constant dense<0.000000e+00> : vector<8x384xf32>
    %78 = tpu.matmul %73, %10, %cst_28 {dimension_numbers = #tpu.dot_dimension_numbers<[1], [0], [0], [1], [0, 0, 1, 1], [], []>} : vector<8x128xbf16>, vector<128x384xbf16>, vector<8x384xf32> -> vector<8x384xf32>
    %79 = arith.addf %78, %13 : vector<8x384xf32>
    %80 = vector.extract_strided_slice %77 {offsets = [0, 0], sizes = [8, 256], strides = [1, 1]} : vector<8x384xf32> to vector<8x256xf32>
    %81 = vector.extract_strided_slice %79 {offsets = [0, 0], sizes = [8, 256], strides = [1, 1]} : vector<8x384xf32> to vector<8x256xf32>
    %82 = arith.addf %80, %81 : vector<8x256xf32>
    %83 = arith.negf %82 : vector<8x256xf32>
    %84 = math.exp %83 : vector<8x256xf32>
    %cst_29 = arith.constant 1.000000e+00 : f32
    %85 = vector.broadcast %cst_29 : f32 to vector<8x256xf32>
    %86 = arith.addf %85, %84 : vector<8x256xf32>
    %87 = arith.divf %85, %86 : vector<8x256xf32>
    %88 = vector.extract_strided_slice %87 {offsets = [0, 0], sizes = [8, 128], strides = [1, 1]} : vector<8x256xf32> to vector<8x128xf32>
    %89 = vector.extract_strided_slice %87 {offsets = [0, 128], sizes = [8, 128], strides = [1, 1]} : vector<8x256xf32> to vector<8x128xf32>
    %90 = vector.extract_strided_slice %77 {offsets = [0, 256], sizes = [8, 128], strides = [1, 1]} : vector<8x384xf32> to vector<8x128xf32>
    %91 = vector.extract_strided_slice %79 {offsets = [0, 256], sizes = [8, 128], strides = [1, 1]} : vector<8x384xf32> to vector<8x128xf32>
    %92 = arith.mulf %88, %91 : vector<8x128xf32>
    %93 = arith.addf %90, %92 : vector<8x128xf32>
    %94 = math.tanh %93 : vector<8x128xf32>
    %cst_30 = arith.constant 1.000000e+00 : f32
    %95 = vector.broadcast %cst_30 : f32 to vector<8x128xf32>
    %96 = arith.subf %95, %89 : vector<8x128xf32>
    %97 = arith.mulf %96, %94 : vector<8x128xf32>
    %98 = arith.mulf %89, %70 : vector<8x128xf32>
    %99 = arith.addf %97, %98 : vector<8x128xf32>
    %100 = arith.index_cast %75 : i32 to index
    %c0_31 = arith.constant 0 : index
    %101 = vector.load %arg6[%100, %c0_31] : memref<64x128xf32, #tpu.memory_space<vmem>>, vector<8x128xf32>
    tpu.vector_store %arg6[%100, %c0_31], %99 {strides = array<i32>} : memref<64x128xf32, #tpu.memory_space<vmem>>, vector<8x128xf32>,
    %102 = arith.truncf %99 : vector<8x128xf32> to vector<8x128xbf16>
    %c3_i32 = arith.constant 3 : i32
    %c8_i32_32 = arith.constant 8 : i32
    %103 = arith.muli %c3_i32, %c8_i32_32 : i32
    %104 = tpu.assume_multiple %103, 8 : i32
    %105 = arith.index_cast %104 : i32 to index
    %c0_33 = arith.constant 0 : index
    %106 = vector.load %arg7[%105, %c0_33] : memref<64x384xf32, #tpu.memory_space<vmem>>, vector<8x384xf32>
    %cst_34 = arith.constant dense<0.000000e+00> : vector<8x384xf32>
    %107 = tpu.matmul %102, %10, %cst_34 {dimension_numbers = #tpu.dot_dimension_numbers<[1], [0], [0], [1], [0, 0, 1, 1], [], []>} : vector<8x128xbf16>, vector<128x384xbf16>, vector<8x384xf32> -> vector<8x384xf32>
    %108 = arith.addf %107, %13 : vector<8x384xf32>
    %109 = vector.extract_strided_slice %106 {offsets = [0, 0], sizes = [8, 256], strides = [1, 1]} : vector<8x384xf32> to vector<8x256xf32>
    %110 = vector.extract_strided_slice %108 {offsets = [0, 0], sizes = [8, 256], strides = [1, 1]} : vector<8x384xf32> to vector<8x256xf32>
    %111 = arith.addf %109, %110 : vector<8x256xf32>
    %112 = arith.negf %111 : vector<8x256xf32>
    %113 = math.exp %112 : vector<8x256xf32>
    %cst_35 = arith.constant 1.000000e+00 : f32
    %114 = vector.broadcast %cst_35 : f32 to vector<8x256xf32>
    %115 = arith.addf %114, %113 : vector<8x256xf32>
    %116 = arith.divf %114, %115 : vector<8x256xf32>
    %117 = vector.extract_strided_slice %116 {offsets = [0, 0], sizes = [8, 128], strides = [1, 1]} : vector<8x256xf32> to vector<8x128xf32>
    %118 = vector.extract_strided_slice %116 {offsets = [0, 128], sizes = [8, 128], strides = [1, 1]} : vector<8x256xf32> to vector<8x128xf32>
    %119 = vector.extract_strided_slice %106 {offsets = [0, 256], sizes = [8, 128], strides = [1, 1]} : vector<8x384xf32> to vector<8x128xf32>
    %120 = vector.extract_strided_slice %108 {offsets = [0, 256], sizes = [8, 128], strides = [1, 1]} : vector<8x384xf32> to vector<8x128xf32>
    %121 = arith.mulf %117, %120 : vector<8x128xf32>
    %122 = arith.addf %119, %121 : vector<8x128xf32>
    %123 = math.tanh %122 : vector<8x128xf32>
    %cst_36 = arith.constant 1.000000e+00 : f32
    %124 = vector.broadcast %cst_36 : f32 to vector<8x128xf32>
    %125 = arith.subf %124, %118 : vector<8x128xf32>
    %126 = arith.mulf %125, %123 : vector<8x128xf32>
    %127 = arith.mulf %118, %99 : vector<8x128xf32>
    %128 = arith.addf %126, %127 : vector<8x128xf32>
    %129 = arith.index_cast %104 : i32 to index
    %c0_37 = arith.constant 0 : index
    %130 = vector.load %arg6[%129, %c0_37] : memref<64x128xf32, #tpu.memory_space<vmem>>, vector<8x128xf32>
    tpu.vector_store %arg6[%129, %c0_37], %128 {strides = array<i32>} : memref<64x128xf32, #tpu.memory_space<vmem>>, vector<8x128xf32>,
    %131 = arith.truncf %128 : vector<8x128xf32> to vector<8x128xbf16>
    %c4_i32 = arith.constant 4 : i32
    %c8_i32_38 = arith.constant 8 : i32
    %132 = arith.muli %c4_i32, %c8_i32_38 : i32
    %133 = tpu.assume_multiple %132, 8 : i32
    %134 = arith.index_cast %133 : i32 to index
    %c0_39 = arith.constant 0 : index
    %135 = vector.load %arg7[%134, %c0_39] : memref<64x384xf32, #tpu.memory_space<vmem>>, vector<8x384xf32>
    %cst_40 = arith.constant dense<0.000000e+00> : vector<8x384xf32>
    %136 = tpu.matmul %131, %10, %cst_40 {dimension_numbers = #tpu.dot_dimension_numbers<[1], [0], [0], [1], [0, 0, 1, 1], [], []>} : vector<8x128xbf16>, vector<128x384xbf16>, vector<8x384xf32> -> vector<8x384xf32>
    %137 = arith.addf %136, %13 : vector<8x384xf32>
    %138 = vector.extract_strided_slice %135 {offsets = [0, 0], sizes = [8, 256], strides = [1, 1]} : vector<8x384xf32> to vector<8x256xf32>
    %139 = vector.extract_strided_slice %137 {offsets = [0, 0], sizes = [8, 256], strides = [1, 1]} : vector<8x384xf32> to vector<8x256xf32>
    %140 = arith.addf %138, %139 : vector<8x256xf32>
    %141 = arith.negf %140 : vector<8x256xf32>
    %142 = math.exp %141 : vector<8x256xf32>
    %cst_41 = arith.constant 1.000000e+00 : f32
    %143 = vector.broadcast %cst_41 : f32 to vector<8x256xf32>
    %144 = arith.addf %143, %142 : vector<8x256xf32>
    %145 = arith.divf %143, %144 : vector<8x256xf32>
    %146 = vector.extract_strided_slice %145 {offsets = [0, 0], sizes = [8, 128], strides = [1, 1]} : vector<8x256xf32> to vector<8x128xf32>
    %147 = vector.extract_strided_slice %145 {offsets = [0, 128], sizes = [8, 128], strides = [1, 1]} : vector<8x256xf32> to vector<8x128xf32>
    %148 = vector.extract_strided_slice %135 {offsets = [0, 256], sizes = [8, 128], strides = [1, 1]} : vector<8x384xf32> to vector<8x128xf32>
    %149 = vector.extract_strided_slice %137 {offsets = [0, 256], sizes = [8, 128], strides = [1, 1]} : vector<8x384xf32> to vector<8x128xf32>
    %150 = arith.mulf %146, %149 : vector<8x128xf32>
    %151 = arith.addf %148, %150 : vector<8x128xf32>
    %152 = math.tanh %151 : vector<8x128xf32>
    %cst_42 = arith.constant 1.000000e+00 : f32
    %153 = vector.broadcast %cst_42 : f32 to vector<8x128xf32>
    %154 = arith.subf %153, %147 : vector<8x128xf32>
    %155 = arith.mulf %154, %152 : vector<8x128xf32>
    %156 = arith.mulf %147, %128 : vector<8x128xf32>
    %157 = arith.addf %155, %156 : vector<8x128xf32>
    %158 = arith.index_cast %133 : i32 to index
    %c0_43 = arith.constant 0 : index
    %159 = vector.load %arg6[%158, %c0_43] : memref<64x128xf32, #tpu.memory_space<vmem>>, vector<8x128xf32>
    tpu.vector_store %arg6[%158, %c0_43], %157 {strides = array<i32>} : memref<64x128xf32, #tpu.memory_space<vmem>>, vector<8x128xf32>,
    %160 = arith.truncf %157 : vector<8x128xf32> to vector<8x128xbf16>
    %c5_i32 = arith.constant 5 : i32
    %c8_i32_44 = arith.constant 8 : i32
    %161 = arith.muli %c5_i32, %c8_i32_44 : i32
    %162 = tpu.assume_multiple %161, 8 : i32
    %163 = arith.index_cast %162 : i32 to index
    %c0_45 = arith.constant 0 : index
    %164 = vector.load %arg7[%163, %c0_45] : memref<64x384xf32, #tpu.memory_space<vmem>>, vector<8x384xf32>
    %cst_46 = arith.constant dense<0.000000e+00> : vector<8x384xf32>
    %165 = tpu.matmul %160, %10, %cst_46 {dimension_numbers = #tpu.dot_dimension_numbers<[1], [0], [0], [1], [0, 0, 1, 1], [], []>} : vector<8x128xbf16>, vector<128x384xbf16>, vector<8x384xf32> -> vector<8x384xf32>
    %166 = arith.addf %165, %13 : vector<8x384xf32>
    %167 = vector.extract_strided_slice %164 {offsets = [0, 0], sizes = [8, 256], strides = [1, 1]} : vector<8x384xf32> to vector<8x256xf32>
    %168 = vector.extract_strided_slice %166 {offsets = [0, 0], sizes = [8, 256], strides = [1, 1]} : vector<8x384xf32> to vector<8x256xf32>
    %169 = arith.addf %167, %168 : vector<8x256xf32>
    %170 = arith.negf %169 : vector<8x256xf32>
    %171 = math.exp %170 : vector<8x256xf32>
    %cst_47 = arith.constant 1.000000e+00 : f32
    %172 = vector.broadcast %cst_47 : f32 to vector<8x256xf32>
    %173 = arith.addf %172, %171 : vector<8x256xf32>
    %174 = arith.divf %172, %173 : vector<8x256xf32>
    %175 = vector.extract_strided_slice %174 {offsets = [0, 0], sizes = [8, 128], strides = [1, 1]} : vector<8x256xf32> to vector<8x128xf32>
    %176 = vector.extract_strided_slice %174 {offsets = [0, 128], sizes = [8, 128], strides = [1, 1]} : vector<8x256xf32> to vector<8x128xf32>
    %177 = vector.extract_strided_slice %164 {offsets = [0, 256], sizes = [8, 128], strides = [1, 1]} : vector<8x384xf32> to vector<8x128xf32>
    %178 = vector.extract_strided_slice %166 {offsets = [0, 256], sizes = [8, 128], strides = [1, 1]} : vector<8x384xf32> to vector<8x128xf32>
    %179 = arith.mulf %175, %178 : vector<8x128xf32>
    %180 = arith.addf %177, %179 : vector<8x128xf32>
    %181 = math.tanh %180 : vector<8x128xf32>
    %cst_48 = arith.constant 1.000000e+00 : f32
    %182 = vector.broadcast %cst_48 : f32 to vector<8x128xf32>
    %183 = arith.subf %182, %176 : vector<8x128xf32>
    %184 = arith.mulf %183, %181 : vector<8x128xf32>
    %185 = arith.mulf %176, %157 : vector<8x128xf32>
    %186 = arith.addf %184, %185 : vector<8x128xf32>
    %187 = arith.index_cast %162 : i32 to index
    %c0_49 = arith.constant 0 : index
    %188 = vector.load %arg6[%187, %c0_49] : memref<64x128xf32, #tpu.memory_space<vmem>>, vector<8x128xf32>
    tpu.vector_store %arg6[%187, %c0_49], %186 {strides = array<i32>} : memref<64x128xf32, #tpu.memory_space<vmem>>, vector<8x128xf32>,
    %189 = arith.truncf %186 : vector<8x128xf32> to vector<8x128xbf16>
    %c6_i32 = arith.constant 6 : i32
    %c8_i32_50 = arith.constant 8 : i32
    %190 = arith.muli %c6_i32, %c8_i32_50 : i32
    %191 = tpu.assume_multiple %190, 8 : i32
    %192 = arith.index_cast %191 : i32 to index
    %c0_51 = arith.constant 0 : index
    %193 = vector.load %arg7[%192, %c0_51] : memref<64x384xf32, #tpu.memory_space<vmem>>, vector<8x384xf32>
    %cst_52 = arith.constant dense<0.000000e+00> : vector<8x384xf32>
    %194 = tpu.matmul %189, %10, %cst_52 {dimension_numbers = #tpu.dot_dimension_numbers<[1], [0], [0], [1], [0, 0, 1, 1], [], []>} : vector<8x128xbf16>, vector<128x384xbf16>, vector<8x384xf32> -> vector<8x384xf32>
    %195 = arith.addf %194, %13 : vector<8x384xf32>
    %196 = vector.extract_strided_slice %193 {offsets = [0, 0], sizes = [8, 256], strides = [1, 1]} : vector<8x384xf32> to vector<8x256xf32>
    %197 = vector.extract_strided_slice %195 {offsets = [0, 0], sizes = [8, 256], strides = [1, 1]} : vector<8x384xf32> to vector<8x256xf32>
    %198 = arith.addf %196, %197 : vector<8x256xf32>
    %199 = arith.negf %198 : vector<8x256xf32>
    %200 = math.exp %199 : vector<8x256xf32>
    %cst_53 = arith.constant 1.000000e+00 : f32
    %201 = vector.broadcast %cst_53 : f32 to vector<8x256xf32>
    %202 = arith.addf %201, %200 : vector<8x256xf32>
    %203 = arith.divf %201, %202 : vector<8x256xf32>
    %204 = vector.extract_strided_slice %203 {offsets = [0, 0], sizes = [8, 128], strides = [1, 1]} : vector<8x256xf32> to vector<8x128xf32>
    %205 = vector.extract_strided_slice %203 {offsets = [0, 128], sizes = [8, 128], strides = [1, 1]} : vector<8x256xf32> to vector<8x128xf32>
    %206 = vector.extract_strided_slice %193 {offsets = [0, 256], sizes = [8, 128], strides = [1, 1]} : vector<8x384xf32> to vector<8x128xf32>
    %207 = vector.extract_strided_slice %195 {offsets = [0, 256], sizes = [8, 128], strides = [1, 1]} : vector<8x384xf32> to vector<8x128xf32>
    %208 = arith.mulf %204, %207 : vector<8x128xf32>
    %209 = arith.addf %206, %208 : vector<8x128xf32>
    %210 = math.tanh %209 : vector<8x128xf32>
    %cst_54 = arith.constant 1.000000e+00 : f32
    %211 = vector.broadcast %cst_54 : f32 to vector<8x128xf32>
    %212 = arith.subf %211, %205 : vector<8x128xf32>
    %213 = arith.mulf %212, %210 : vector<8x128xf32>
    %214 = arith.mulf %205, %186 : vector<8x128xf32>
    %215 = arith.addf %213, %214 : vector<8x128xf32>
    %216 = arith.index_cast %191 : i32 to index
    %c0_55 = arith.constant 0 : index
    %217 = vector.load %arg6[%216, %c0_55] : memref<64x128xf32, #tpu.memory_space<vmem>>, vector<8x128xf32>
    tpu.vector_store %arg6[%216, %c0_55], %215 {strides = array<i32>} : memref<64x128xf32, #tpu.memory_space<vmem>>, vector<8x128xf32>,
    %218 = arith.truncf %215 : vector<8x128xf32> to vector<8x128xbf16>
    %c7_i32 = arith.constant 7 : i32
    %c8_i32_56 = arith.constant 8 : i32
    %219 = arith.muli %c7_i32, %c8_i32_56 : i32
    %220 = tpu.assume_multiple %219, 8 : i32
    %221 = arith.index_cast %220 : i32 to index
    %c0_57 = arith.constant 0 : index
    %222 = vector.load %arg7[%221, %c0_57] : memref<64x384xf32, #tpu.memory_space<vmem>>, vector<8x384xf32>
    %cst_58 = arith.constant dense<0.000000e+00> : vector<8x384xf32>
    %223 = tpu.matmul %218, %10, %cst_58 {dimension_numbers = #tpu.dot_dimension_numbers<[1], [0], [0], [1], [0, 0, 1, 1], [], []>} : vector<8x128xbf16>, vector<128x384xbf16>, vector<8x384xf32> -> vector<8x384xf32>
    %224 = arith.addf %223, %13 : vector<8x384xf32>
    %225 = vector.extract_strided_slice %222 {offsets = [0, 0], sizes = [8, 256], strides = [1, 1]} : vector<8x384xf32> to vector<8x256xf32>
    %226 = vector.extract_strided_slice %224 {offsets = [0, 0], sizes = [8, 256], strides = [1, 1]} : vector<8x384xf32> to vector<8x256xf32>
    %227 = arith.addf %225, %226 : vector<8x256xf32>
    %228 = arith.negf %227 : vector<8x256xf32>
    %229 = math.exp %228 : vector<8x256xf32>
    %cst_59 = arith.constant 1.000000e+00 : f32
    %230 = vector.broadcast %cst_59 : f32 to vector<8x256xf32>
    %231 = arith.addf %230, %229 : vector<8x256xf32>
    %232 = arith.divf %230, %231 : vector<8x256xf32>
    %233 = vector.extract_strided_slice %232 {offsets = [0, 0], sizes = [8, 128], strides = [1, 1]} : vector<8x256xf32> to vector<8x128xf32>
    %234 = vector.extract_strided_slice %232 {offsets = [0, 128], sizes = [8, 128], strides = [1, 1]} : vector<8x256xf32> to vector<8x128xf32>
    %235 = vector.extract_strided_slice %222 {offsets = [0, 256], sizes = [8, 128], strides = [1, 1]} : vector<8x384xf32> to vector<8x128xf32>
    %236 = vector.extract_strided_slice %224 {offsets = [0, 256], sizes = [8, 128], strides = [1, 1]} : vector<8x384xf32> to vector<8x128xf32>
    %237 = arith.mulf %233, %236 : vector<8x128xf32>
    %238 = arith.addf %235, %237 : vector<8x128xf32>
    %239 = math.tanh %238 : vector<8x128xf32>
    %cst_60 = arith.constant 1.000000e+00 : f32
    %240 = vector.broadcast %cst_60 : f32 to vector<8x128xf32>
    %241 = arith.subf %240, %234 : vector<8x128xf32>
    %242 = arith.mulf %241, %239 : vector<8x128xf32>
    %243 = arith.mulf %234, %215 : vector<8x128xf32>
    %244 = arith.addf %242, %243 : vector<8x128xf32>
    %245 = arith.index_cast %220 : i32 to index
    %c0_61 = arith.constant 0 : index
    %246 = vector.load %arg6[%245, %c0_61] : memref<64x128xf32, #tpu.memory_space<vmem>>, vector<8x128xf32>
    tpu.vector_store %arg6[%245, %c0_61], %244 {strides = array<i32>} : memref<64x128xf32, #tpu.memory_space<vmem>>, vector<8x128xf32>,
    %247 = arith.truncf %244 : vector<8x128xf32> to vector<8x128xbf16>
    %c8_i32_62 = arith.constant 8 : i32
    %c0_63 = arith.constant 0 : index
    %c0_64 = arith.constant 0 : index
    %248 = vector.load %arg8[%c0_63, %c0_64] : memref<8x128xf32, #tpu.memory_space<vmem>>, vector<8x128xf32>
    tpu.vector_store %arg8[%c0_63, %c0_64], %244 {strides = array<i32>} : memref<8x128xf32, #tpu.memory_space<vmem>>, vector<8x128xf32>,
    return
  }
  func.func @transform_0(%arg0: i32) -> (i32, i32) {
    %c0_i32 = arith.constant 0 : i32
    %c0_i32_0 = arith.constant 0 : i32
    return %arg0, %c0_i32 : i32, i32
  }
  func.func @transform_1(%arg0: i32) -> (i32, i32) {
    %c0_i32 = arith.constant 0 : i32
    %c0_i32_0 = arith.constant 0 : i32
    %c0_i32_1 = arith.constant 0 : i32
    return %c0_i32, %c0_i32_0 : i32, i32
  }
  func.func @transform_2(%arg0: i32) -> (i32, i32) {
    %c0_i32 = arith.constant 0 : i32
    %c0_i32_0 = arith.constant 0 : i32
    %c0_i32_1 = arith.constant 0 : i32
    return %c0_i32, %c0_i32_0 : i32, i32
  }
  func.func @transform_3(%arg0: i32) -> (i32, i32) {
    %c0_i32 = arith.constant 0 : i32
    %c0_i32_0 = arith.constant 0 : i32
    %c0_i32_1 = arith.constant 0 : i32
    return %c0_i32, %c0_i32_0 : i32, i32
  }
  func.func @transform_4(%arg0: i32) -> (i32, i32) {
    %c0_i32 = arith.constant 0 : i32
    %c0_i32_0 = arith.constant 0 : i32
    %c0_i32_1 = arith.constant 0 : i32
    return %c0_i32, %c0_i32_0 : i32, i32
  }
  func.func @transform_5(%arg0: i32) -> (i32, i32) {
    %c0_i32 = arith.constant 0 : i32
    %c0_i32_0 = arith.constant 0 : i32
    return %arg0, %c0_i32 : i32, i32
  }
}

</mosaic_0001>

<llo_original>
// kernel: tpu_custom_call.1
$region0: #{tpu_custom_call.1}
  #allocation0 [shape = 'u32[]', space=smem, size = 0x4, offset = 0x4, fixed_abs, tag = 'smem constant byte address 0x4 - core index']
  #allocation1 [shape = 'u32[72,128]{1,0:T(1,128)}', space=vmem, size = 0x9000, scoped, tag = 'internal scratch']
  #allocation2 [shape = 'f32[64,384]{1,0:T(8,128)}', space=vmem, size = 0x18000, scoped, tag = 'scratch operand']
  #allocation3 [shape = 'f32[8,128]{1,0:T(8,128)}', space=vmem, size = 0x1000, scoped, tag = 'scratch operand']
  %s0 = inlined_call_operand.vmem [shape: bf16[64,16], index: 0, kind: input, shape index: {}]
  %s1 = inlined_call_operand.vmem [shape: bf16[16,384], index: 1, kind: input, shape index: {}]
  %s2 = inlined_call_operand.vmem [shape: f32[1,384], index: 2, kind: input, shape index: {}]
  %s3 = inlined_call_operand.hbm [shape: bf16[128,384], index: 3, kind: input, shape index: {}]
  %s4 = inlined_call_operand.vmem [shape: f32[1,384], index: 4, kind: input, shape index: {}]
  %s5 = inlined_call_operand.hbm [shape: f32[64,128], index: 5, kind: output, shape index: {}]
  %s6 = sld [smem:[#allocation0]]
  $region38: #{tpu_custom_call.1} parent=0
    _
  %s8 = ssub.s32 1, %s6
  %s9 = scalar_select 0, %s8, %s6
  $region1: #{tpu_custom_call.1} parent=0
    #allocation4 [shape = 'u8[98304]{0}', space=vmem, size = 0x18000, scoped, tag = 'input window, operand 3, single buffered']
    #allocation5 [shape = 's32[1]{0}', space=sflag, size = 0x4, scoped, tag = 'scoped memory for tpu_custom_call.1']
    #allocation6 [shape = 's32[1]{0}', space=sflag, size = 0x4, scoped, tag = 'scoped memory for tpu_custom_call.1']
    #allocation7 [shape = 'u8[32768]{0}', space=vmem, size = 0x8000, scoped, tag = 'output window, operand 0, single buffered']
    %10 = vsyncpa [#allocation5], 0
    %11 = vsyncpa [#allocation6], 0
    // Predicated region
    $region2: #{tpu_custom_call.1} parent=1 // pred_check
      _
    $region3: #{tpu_custom_call.1} parent=1 // pred_check_branch
      %13 = sbr.rel (0) target = $region5
    $region4: #{tpu_custom_call.1} parent=1 // pred_region
      _
    $region5: #{tpu_custom_call.1} parent=1 // pred_fallthru
      _
    // Predicated region
    $region6: #{tpu_custom_call.1} parent=1 // pred_check
      _
    $region7: #{tpu_custom_call.1} parent=1 // pred_check_branch
      %15 = sbr.rel (0) target = $region9
    $region8: #{tpu_custom_call.1} parent=1 // pred_region
      _
    $region9: #{tpu_custom_call.1} parent=1 // pred_fallthru
      _
    // Predicated region
    $region10: #{tpu_custom_call.1} parent=1 // pred_check
      _
    $region11: #{tpu_custom_call.1} parent=1 // pred_check_branch
      %17 = sbr.rel (0) target = $region13
    $region12: #{tpu_custom_call.1} parent=1 // pred_region
      _
    $region13: #{tpu_custom_call.1} parent=1 // pred_fallthru
      _
    // Predicated region
    $region14: #{tpu_custom_call.1} parent=1 // pred_check
      _
    $region15: #{tpu_custom_call.1} parent=1 // pred_check_branch
      %19 = sbr.rel (0) target = $region17
    $region16: #{tpu_custom_call.1} parent=1 // pred_region
      %21 = vsyncadd [#allocation5], 0
      %s22 = sshll.u32 %s3, 4
      %s23 = int_to_ptr.hbm [resolvable:$true] %s22
      %s24 = sshll.u32 [#allocation4], 4
      %s25 = int_to_ptr.vmem [resolvable:$true] %s24
      %30 = dma.hbm_to_vmem [thread:$0]  %s23, 3072, %s25, [#allocation5], 192, 192, 12
    $region17: #{tpu_custom_call.1} parent=1 // pred_fallthru
      _
    // Predicated region
    $region18: #{tpu_custom_call.1} parent=1 // pred_check
      _
    $region19: #{tpu_custom_call.1} parent=1 // pred_check_branch
      %32 = sbr.rel (0) target = $region21
    $region20: #{tpu_custom_call.1} parent=1 // pred_region
      _
    $region21: #{tpu_custom_call.1} parent=1 // pred_fallthru
      _
    // Predicated region
    $region22: #{tpu_custom_call.1} parent=1 // pred_check
      _
    $region23: #{tpu_custom_call.1} parent=1 // pred_check_branch
      %34 = sbr.rel (0) target = $region25
    $region24: #{tpu_custom_call.1} parent=1 // pred_region
      %36 = dma.done [#allocation5], 3072
    $region25: #{tpu_custom_call.1} parent=1 // pred_fallthru
      _
    %p38 = scmp.eq.s32.totalorder 0, 0
    // Predicated region
    $region26: #{tpu_custom_call.1} parent=1 // pred_check
      %p39 = pneg %p38
    $region27: #{tpu_custom_call.1} parent=1 // pred_check_branch
      %41 = sbr.rel (%p39) target = $region29
    $region28: #{tpu_custom_call.1} parent=1 // pred_region
      %42 = vst [vmem:[#allocation3] sm:$0xff] 0.0
    $region29: #{tpu_custom_call.1} parent=1 // pred_fallthru
      _
    %v43 = vld [vmem:[%s0] sm:$0xf]
    %v44 = vld [vmem:[%s0 + $0x4] sm:$0xf]
    %v45 = vld [vmem:[%s0 + $0x8] sm:$0xf]
    %v46 = vld [vmem:[%s0 + $0xc] sm:$0xf]
    %v47 = vld [vmem:[%s0 + $0x10] sm:$0xf]
    %v48 = vld [vmem:[%s0 + $0x14] sm:$0xf]
    %v49 = vld [vmem:[%s0 + $0x18] sm:$0xf]
    %v50 = vld [vmem:[%s0 + $0x1c] sm:$0xf]
    %v51 = vld [vmem:[%s1] sm:$0xff]
    %v52 = vld [vmem:[%s1 + $0x8] sm:$0xf]
    %v53 = vld [vmem:[%s1 + $0xc] sm:$0xff]
    %v54 = vld [vmem:[%s1 + $0x14] sm:$0xf]
    %v55 = vld [vmem:[%s2] sm:$0x7]
    %v57 = vperm.slane %v55, 0
    %v58 = vperm.slane %v55, 1
    %v59 = vperm.slane %v55, 2
    %v71 = vunpack.c.l.b16 %v43
    %v72 = vunpack.c.l.b16 %v44
    %v73 = vunpack.c.l.b16 %v45
    %v74 = vunpack.c.l.b16 %v46
    %v75 = vunpack.c.l.b16 %v47
    %v76 = vunpack.c.l.b16 %v48
    %v77 = vunpack.c.l.b16 %v49
    %v78 = vunpack.c.l.b16 %v50
    %v79 = vpack.c.b16 %v72, %v71
    %v80 = vpack.c.b16 %v74, %v73
    %v81 = vpack.c.b16 %v76, %v75
    %v82 = vpack.c.b16 %v78, %v77
    %v87 = vunpack.c.l.b16 %v51
    %v88 = vunpack.c.h.b16 %v51
    %v89 = vunpack.c.l.b16 %v52
    %v90 = vunpack.c.l.b16 %v53
    %v91 = vunpack.c.h.b16 %v53
    %v92 = vunpack.c.l.b16 %v54
    %v93 = vpack.c.b16 %v90, %v87
    %v94 = vpack.c.b16 %v91, %v88
    %v95 = vpack.c.b16 %v92, %v89
    %vm99 = vcmask 130048
    %v101 = vsel %vm99, %v79, 0
    %v104 = vsel %vm99, %v80, 0
    %v107 = vsel %vm99, %v81, 0
    %v110 = vsel %vm99, %v82, 0
    %112 = vmatpush.bf16.msra.mxu0 0
    %113 = vmatpush.bf16.msra.mxu0 0
    %114 = vmatpush.bf16.msra.mxu0 0
    %115 = vmatpush.bf16.msra.mxu0 0
    %116 = vmatpush.bf16.msra.mxu0 0
    %117 = vmatpush.bf16.msra.mxu0 0
    %118 = vmatpush.bf16.msra.mxu0 0
    %119 = vmatpush.bf16.msra.mxu0 %v93
    %120 = vmatmul.bf16.gmra.mxu0 %v101
    %v121 = vpop.f32.mrf.mxu0
    %v122 = vadd.f32 %v57, %v121
    %v123 = vpop.f32.mrf.mxu0
    %v124 = vadd.f32 %v57, %v123
    %125 = vmatmul.bf16.gmra.mxu0 %v104
    %v126 = vpop.f32.mrf.mxu0
    %v127 = vadd.f32 %v57, %v126
    %v128 = vpop.f32.mrf.mxu0
    %v129 = vadd.f32 %v57, %v128
    %130 = vmatmul.bf16.gmra.mxu0 %v107
    %v131 = vpop.f32.mrf.mxu0
    %v132 = vadd.f32 %v57, %v131
    %v133 = vpop.f32.mrf.mxu0
    %v134 = vadd.f32 %v57, %v133
    %135 = vmatmul.bf16.gmra.mxu0 %v110
    %v136 = vpop.f32.mrf.mxu0
    %v137 = vadd.f32 %v57, %v136
    %v138 = vpop.f32.mrf.mxu0
    %v139 = vadd.f32 %v57, %v138
    %140 = vdwg.mxu0
    %141 = vmatpush.bf16.msra.mxu0 0
    %142 = vmatpush.bf16.msra.mxu0 0
    %143 = vmatpush.bf16.msra.mxu0 0
    %144 = vmatpush.bf16.msra.mxu0 0
    %145 = vmatpush.bf16.msra.mxu0 0
    %146 = vmatpush.bf16.msra.mxu0 0
    %147 = vmatpush.bf16.msra.mxu0 0
    %148 = vmatpush.bf16.msra.mxu0 %v94
    %149 = vmatmul.bf16.gmra.mxu0 %v101
    %v150 = vpop.f32.mrf.mxu0
    %v151 = vadd.f32 %v58, %v150
    %v152 = vpop.f32.mrf.mxu0
    %v153 = vadd.f32 %v58, %v152
    %154 = vmatmul.bf16.gmra.mxu0 %v104
    %v155 = vpop.f32.mrf.mxu0
    %v156 = vadd.f32 %v58, %v155
    %v157 = vpop.f32.mrf.mxu0
    %v158 = vadd.f32 %v58, %v157
    %159 = vmatmul.bf16.gmra.mxu0 %v107
    %v160 = vpop.f32.mrf.mxu0
    %v161 = vadd.f32 %v58, %v160
    %v162 = vpop.f32.mrf.mxu0
    %v163 = vadd.f32 %v58, %v162
    %164 = vmatmul.bf16.gmra.mxu0 %v110
    %v165 = vpop.f32.mrf.mxu0
    %v166 = vadd.f32 %v58, %v165
    %v167 = vpop.f32.mrf.mxu0
    %v168 = vadd.f32 %v58, %v167
    %169 = vdwg.mxu0
    %170 = vmatpush.bf16.msra.mxu0 0
    %171 = vmatpush.bf16.msra.mxu0 0
    %172 = vmatpush.bf16.msra.mxu0 0
    %173 = vmatpush.bf16.msra.mxu0 0
    %174 = vmatpush.bf16.msra.mxu0 0
    %175 = vmatpush.bf16.msra.mxu0 0
    %176 = vmatpush.bf16.msra.mxu0 0
    %177 = vmatpush.bf16.msra.mxu0 %v95
    %178 = vmatmul.bf16.gmra.mxu0 %v101
    %v179 = vpop.f32.mrf.mxu0
    %v180 = vadd.f32 %v59, %v179
    %v181 = vpop.f32.mrf.mxu0
    %v182 = vadd.f32 %v59, %v181
    %183 = vmatmul.bf16.gmra.mxu0 %v104
    %v184 = vpop.f32.mrf.mxu0
    %v185 = vadd.f32 %v59, %v184
    %v186 = vpop.f32.mrf.mxu0
    %v187 = vadd.f32 %v59, %v186
    %188 = vmatmul.bf16.gmra.mxu0 %v107
    %v189 = vpop.f32.mrf.mxu0
    %v190 = vadd.f32 %v59, %v189
    %v191 = vpop.f32.mrf.mxu0
    %v192 = vadd.f32 %v59, %v191
    %193 = vmatmul.bf16.gmra.mxu0 %v110
    %v194 = vpop.f32.mrf.mxu0
    %v195 = vadd.f32 %v59, %v194
    %v196 = vpop.f32.mrf.mxu0
    %v197 = vadd.f32 %v59, %v196
    %198 = vdwg.mxu0
    %199 = vst [vmem:[#allocation2] sm:$0xff] %v122
    %200 = vst [vmem:[#allocation2 + $0x8] sm:$0xff] %v151
    %201 = vst [vmem:[#allocation2 + $0x10] sm:$0xff] %v180
    %202 = vst [vmem:[#allocation2 + $0x18] sm:$0xff] %v124
    %203 = vst [vmem:[#allocation2 + $0x20] sm:$0xff] %v153
    %204 = vst [vmem:[#allocation2 + $0x28] sm:$0xff] %v182
    %205 = vst [vmem:[#allocation2 + $0x30] sm:$0xff] %v127
    %206 = vst [vmem:[#allocation2 + $0x38] sm:$0xff] %v156
    %207 = vst [vmem:[#allocation2 + $0x40] sm:$0xff] %v185
    %208 = vst [vmem:[#allocation2 + $0x48] sm:$0xff] %v129
    %209 = vst [vmem:[#allocation2 + $0x50] sm:$0xff] %v158
    %210 = vst [vmem:[#allocation2 + $0x58] sm:$0xff] %v187
    %211 = vst [vmem:[#allocation2 + $0x60] sm:$0xff] %v132
    %212 = vst [vmem:[#allocation2 + $0x68] sm:$0xff] %v161
    %213 = vst [vmem:[#allocation2 + $0x70] sm:$0xff] %v190
    %214 = vst [vmem:[#allocation2 + $0x78] sm:$0xff] %v134
    %215 = vst [vmem:[#allocation2 + $0x80] sm:$0xff] %v163
    %216 = vst [vmem:[#allocation2 + $0x88] sm:$0xff] %v192
    %217 = vst [vmem:[#allocation2 + $0x90] sm:$0xff] %v137
    %218 = vst [vmem:[#allocation2 + $0x98] sm:$0xff] %v166
    %219 = vst [vmem:[#allocation2 + $0xa0] sm:$0xff] %v195
    %220 = vst [vmem:[#allocation2 + $0xa8] sm:$0xff] %v139
    %221 = vst [vmem:[#allocation2 + $0xb0] sm:$0xff] %v168
    %222 = vst [vmem:[#allocation2 + $0xb8] sm:$0xff] %v197
    %v223 = vld [vmem:[#allocation4] sm:$0xff]
    %v224 = vld [vmem:[#allocation4 + $0x8] sm:$0xf]
    %v225 = vld [vmem:[#allocation4 + $0xc] sm:$0xff]
    %v226 = vld [vmem:[#allocation4 + $0x14] sm:$0xf]
    %v227 = vld [vmem:[#allocation4 + $0x18] sm:$0xff]
    %v228 = vld [vmem:[#allocation4 + $0x20] sm:$0xf]
    %v229 = vld [vmem:[#allocation4 + $0x24] sm:$0xff]
    %v230 = vld [vmem:[#allocation4 + $0x2c] sm:$0xf]
    %v231 = vld [vmem:[#allocation4 + $0x30] sm:$0xff]
    %v232 = vld [vmem:[#allocation4 + $0x38] sm:$0xf]
    %v233 = vld [vmem:[#allocation4 + $0x3c] sm:$0xff]
    %v234 = vld [vmem:[#allocation4 + $0x44] sm:$0xf]
    %v235 = vld [vmem:[#allocation4 + $0x48] sm:$0xff]
    %v236 = vld [vmem:[#allocation4 + $0x50] sm:$0xf]
    %v237 = vld [vmem:[#allocation4 + $0x54] sm:$0xff]
    %v238 = vld [vmem:[#allocation4 + $0x5c] sm:$0xf]
    %v239 = vld [vmem:[#allocation4 + $0x60] sm:$0xff]
    %v240 = vld [vmem:[#allocation4 + $0x68] sm:$0xf]
    %v241 = vld [vmem:[#allocation4 + $0x6c] sm:$0xff]
    %v242 = vld [vmem:[#allocation4 + $0x74] sm:$0xf]
    %v243 = vld [vmem:[#allocation4 + $0x78] sm:$0xff]
    %v244 = vld [vmem:[#allocation4 + $0x80] sm:$0xf]
    %v245 = vld [vmem:[#allocation4 + $0x84] sm:$0xff]
    %v246 = vld [vmem:[#allocation4 + $0x8c] sm:$0xf]
    %v247 = vld [vmem:[#allocation4 + $0x90] sm:$0xff]
    %v248 = vld [vmem:[#allocation4 + $0x98] sm:$0xf]
    %v249 = vld [vmem:[#allocation4 + $0x9c] sm:$0xff]
    %v250 = vld [vmem:[#allocation4 + $0xa4] sm:$0xf]
    %v251 = vld [vmem:[#allocation4 + $0xa8] sm:$0xff]
    %v252 = vld [vmem:[#allocation4 + $0xb0] sm:$0xf]
    %v253 = vld [vmem:[#allocation4 + $0xb4] sm:$0xff]
    %v254 = vld [vmem:[#allocation4 + $0xbc] sm:$0xf]
    %v255 = vld [vmem:[%s4] sm:$0x7]
    %v257 = vperm.slane %v255, 0
    %v258 = vperm.slane %v255, 1
    %v259 = vperm.slane %v255, 2
    %v263 = vld [vmem:[#allocation3] sm:$0xff]
    %v264 = vpack.c.bf16 %v263, %v263
    %s265 = smul.u32 0, 3
    %s266 = smul.addr %s265, 8
    %s267 = scalar_lea.vmem [#allocation2], %s266
    %v268 = vld [vmem:[%s267] sm:$0xff]
    %v269 = vld [vmem:[%s267 + $0x8] sm:$0xff]
    %v270 = vld [vmem:[%s267 + $0x10] sm:$0xff]
    %v303 = vunpack.c.l.b16 %v223
    %v304 = vunpack.c.h.b16 %v223
    %v305 = vunpack.c.l.b16 %v224
    %v306 = vunpack.c.l.b16 %v225
    %v307 = vunpack.c.h.b16 %v225
    %v308 = vunpack.c.l.b16 %v226
    %v309 = vunpack.c.l.b16 %v227
    %v310 = vunpack.c.h.b16 %v227
    %v311 = vunpack.c.l.b16 %v228
    %v312 = vunpack.c.l.b16 %v229
    %v313 = vunpack.c.h.b16 %v229
    %v314 = vunpack.c.l.b16 %v230
    %v315 = vunpack.c.l.b16 %v231
    %v316 = vunpack.c.h.b16 %v231
    %v317 = vunpack.c.l.b16 %v232
    %v318 = vunpack.c.l.b16 %v233
    %v319 = vunpack.c.h.b16 %v233
    %v320 = vunpack.c.l.b16 %v234
    %v321 = vunpack.c.l.b16 %v235
    %v322 = vunpack.c.h.b16 %v235
    %v323 = vunpack.c.l.b16 %v236
    %v324 = vunpack.c.l.b16 %v237
    %v325 = vunpack.c.h.b16 %v237
    %v326 = vunpack.c.l.b16 %v238
    %v327 = vunpack.c.l.b16 %v239
    %v328 = vunpack.c.h.b16 %v239
    %v329 = vunpack.c.l.b16 %v240
    %v330 = vunpack.c.l.b16 %v241
    %v331 = vunpack.c.h.b16 %v241
    %v332 = vunpack.c.l.b16 %v242
    %v333 = vunpack.c.l.b16 %v243
    %v334 = vunpack.c.h.b16 %v243
    %v335 = vunpack.c.l.b16 %v244
    %v336 = vunpack.c.l.b16 %v245
    %v337 = vunpack.c.h.b16 %v245
    %v338 = vunpack.c.l.b16 %v246
    %v339 = vunpack.c.l.b16 %v247
    %v340 = vunpack.c.h.b16 %v247
    %v341 = vunpack.c.l.b16 %v248
    %v342 = vunpack.c.l.b16 %v249
    %v343 = vunpack.c.h.b16 %v249
    %v344 = vunpack.c.l.b16 %v250
    %v345 = vunpack.c.l.b16 %v251
    %v346 = vunpack.c.h.b16 %v251
    %v347 = vunpack.c.l.b16 %v252
    %v348 = vunpack.c.l.b16 %v253
    %v349 = vunpack.c.h.b16 %v253
    %v350 = vunpack.c.l.b16 %v254
    %v351 = vpack.c.b16 %v306, %v303
    %v352 = vpack.c.b16 %v307, %v304
    %v353 = vpack.c.b16 %v308, %v305
    %v354 = vpack.c.b16 %v312, %v309
    %v355 = vpack.c.b16 %v313, %v310
    %v356 = vpack.c.b16 %v314, %v311
    %v357 = vpack.c.b16 %v318, %v315
    %v358 = vpack.c.b16 %v319, %v316
    %v359 = vpack.c.b16 %v320, %v317
    %v360 = vpack.c.b16 %v324, %v321
    %v361 = vpack.c.b16 %v325, %v322
    %v362 = vpack.c.b16 %v326, %v323
    %v363 = vpack.c.b16 %v330, %v327
    %v364 = vpack.c.b16 %v331, %v328
    %v365 = vpack.c.b16 %v332, %v329
    %v366 = vpack.c.b16 %v336, %v333
    %v367 = vpack.c.b16 %v337, %v334
    %v368 = vpack.c.b16 %v338, %v335
    %v369 = vpack.c.b16 %v342, %v339
    %v370 = vpack.c.b16 %v343, %v340
    %v371 = vpack.c.b16 %v344, %v341
    %v372 = vpack.c.b16 %v348, %v345
    %v373 = vpack.c.b16 %v349, %v346
    %v374 = vpack.c.b16 %v350, %v347
    %399 = vmatpush.bf16.msra.mxu0 %v372
    %400 = vmatpush.bf16.msra.mxu0 %v369
    %401 = vmatpush.bf16.msra.mxu0 %v366
    %402 = vmatpush.bf16.msra.mxu0 %v363
    %403 = vmatpush.bf16.msra.mxu0 %v360
    %404 = vmatpush.bf16.msra.mxu0 %v357
    %405 = vmatpush.bf16.msra.mxu0 %v354
    %406 = vmatpush.bf16.msra.mxu0 %v351
    %407 = vmatmul.bf16.gmra.mxu0 %v264
    %v408 = vpop.f32.mrf.mxu0
    %v409 = vadd.f32 %v257, %v408
    %v410 = vpop.f32.mrf.mxu0
    %411 = vdwg.mxu0
    %412 = vmatpush.bf16.msra.mxu0 %v373
    %413 = vmatpush.bf16.msra.mxu0 %v370
    %414 = vmatpush.bf16.msra.mxu0 %v367
    %415 = vmatpush.bf16.msra.mxu0 %v364
    %416 = vmatpush.bf16.msra.mxu0 %v361
    %417 = vmatpush.bf16.msra.mxu0 %v358
    %418 = vmatpush.bf16.msra.mxu0 %v355
    %419 = vmatpush.bf16.msra.mxu0 %v352
    %420 = vmatmul.bf16.gmra.mxu0 %v264
    %v421 = vpop.f32.mrf.mxu0
    %v422 = vadd.f32 %v258, %v421
    %v423 = vpop.f32.mrf.mxu0
    %424 = vdwg.mxu0
    %425 = vmatpush.bf16.msra.mxu0 %v374
    %426 = vmatpush.bf16.msra.mxu0 %v371
    %427 = vmatpush.bf16.msra.mxu0 %v368
    %428 = vmatpush.bf16.msra.mxu0 %v365
    %429 = vmatpush.bf16.msra.mxu0 %v362
    %430 = vmatpush.bf16.msra.mxu0 %v359
    %431 = vmatpush.bf16.msra.mxu0 %v356
    %432 = vmatpush.bf16.msra.mxu0 %v353
    %433 = vmatmul.bf16.gmra.mxu0 %v264
    %v434 = vpop.f32.mrf.mxu0
    %v435 = vadd.f32 %v259, %v434
    %v436 = vpop.f32.mrf.mxu0
    %437 = vdwg.mxu0
    %v438 = vadd.f32 %v268, %v409
    %v439 = vadd.f32 %v269, %v422
    %v440 = vxor.u32 %v438, 2147483648
    %v441 = vxor.u32 %v439, 2147483648
    %v442 = vmul.f32 %v440, 1.442695
    %v443 = vpow.pop %v442
    %v444 = vmul.f32 %v441, 1.442695
    %v445 = vpow.pop %v444
    %v446 = vadd.f32 %v443, 1.0
    %v447 = vadd.f32 %v445, 1.0
    %v448 = vrcp.pop %v446
    %v449 = vmul.f32 %v446, %v448
    %v450 = vsub.f32 1.0, %v449
    %v451 = vmul.f32 %v448, %v450
    %v452 = vadd.f32 %v448, %v451
    %vm453 = vweird.f32 %v446
    %vm454 = vweird.f32 %v448
    %vm455 = vmor %vm453, %vm454
    %v456 = vsel %vm455, %v448, %v452
    %v457 = vand.u32 2147483647, %v446
    %vm458 = vcmp.eq.f32.partialorder %v457, 8.507059e+37
    %v459 = vand.u32 %v446, 2147483648
    %v460 = vor.u32 1.1754944e-38, %v459
    %v461 = vsel %vm458, %v460, %v456
    %v462 = vmul.f32 1.0, %v461
    %v463 = vrcp.pop %v447
    %v464 = vmul.f32 %v447, %v463
    %v465 = vsub.f32 1.0, %v464
    %v466 = vmul.f32 %v463, %v465
    %v467 = vadd.f32 %v463, %v466
    %vm468 = vweird.f32 %v447
    %vm469 = vweird.f32 %v463
    %vm470 = vmor %vm468, %vm469
    %v471 = vsel %vm470, %v463, %v467
    %v472 = vand.u32 2147483647, %v447
    %vm473 = vcmp.eq.f32.partialorder %v472, 8.507059e+37
    %v474 = vand.u32 %v447, 2147483648
    %v475 = vor.u32 1.1754944e-38, %v474
    %v476 = vsel %vm473, %v475, %v471
    %v477 = vmul.f32 1.0, %v476
    %v478 = vmul.f32 %v462, %v435
    %v479 = vadd.f32 %v270, %v478
    %v480 = vtanh.pop %v479
    %v481 = vsub.f32 1.0, %v477
    %v482 = vmul.f32 %v481, %v480
    %v483 = vmul.f32 %v477, %v263
    %v484 = vadd.f32 %v482, %v483
    %485 = vst [vmem:[#allocation7] sm:$0xff] %v484
    %v486 = vpack.c.bf16 %v484, %v484
    %s487 = smul.u32 1, 3
    %s488 = smul.addr %s487, 8
    %s489 = scalar_lea.vmem [#allocation2], %s488
    %v490 = vld [vmem:[%s489] sm:$0xff]
    %v491 = vld [vmem:[%s489 + $0x8] sm:$0xff]
    %v492 = vld [vmem:[%s489 + $0x10] sm:$0xff]
    %493 = vmatpush.bf16.msra.mxu0 %v372
    %494 = vmatpush.bf16.msra.mxu0 %v369
    %495 = vmatpush.bf16.msra.mxu0 %v366
    %496 = vmatpush.bf16.msra.mxu0 %v363
    %497 = vmatpush.bf16.msra.mxu0 %v360
    %498 = vmatpush.bf16.msra.mxu0 %v357
    %499 = vmatpush.bf16.msra.mxu0 %v354
    %500 = vmatpush.bf16.msra.mxu0 %v351
    %501 = vmatmul.bf16.gmra.mxu0 %v486
    %v502 = vpop.f32.mrf.mxu0
    %v503 = vadd.f32 %v257, %v502
    %v504 = vpop.f32.mrf.mxu0
    %505 = vdwg.mxu0
    %506 = vmatpush.bf16.msra.mxu0 %v373
    %507 = vmatpush.bf16.msra.mxu0 %v370
    %508 = vmatpush.bf16.msra.mxu0 %v367
    %509 = vmatpush.bf16.msra.mxu0 %v364
    %510 = vmatpush.bf16.msra.mxu0 %v361
    %511 = vmatpush.bf16.msra.mxu0 %v358
    %512 = vmatpush.bf16.msra.mxu0 %v355
    %513 = vmatpush.bf16.msra.mxu0 %v352
    %514 = vmatmul.bf16.gmra.mxu0 %v486
    %v515 = vpop.f32.mrf.mxu0
    %v516 = vadd.f32 %v258, %v515
    %v517 = vpop.f32.mrf.mxu0
    %518 = vdwg.mxu0
    %519 = vmatpush.bf16.msra.mxu0 %v374
    %520 = vmatpush.bf16.msra.mxu0 %v371
    %521 = vmatpush.bf16.msra.mxu0 %v368
    %522 = vmatpush.bf16.msra.mxu0 %v365
    %523 = vmatpush.bf16.msra.mxu0 %v362
    %524 = vmatpush.bf16.msra.mxu0 %v359
    %525 = vmatpush.bf16.msra.mxu0 %v356
    %526 = vmatpush.bf16.msra.mxu0 %v353
    %527 = vmatmul.bf16.gmra.mxu0 %v486
    %v528 = vpop.f32.mrf.mxu0
    %v529 = vadd.f32 %v259, %v528
    %v530 = vpop.f32.mrf.mxu0
    %531 = vdwg.mxu0
    %v532 = vadd.f32 %v490, %v503
    %v533 = vadd.f32 %v491, %v516
    %v534 = vxor.u32 %v532, 2147483648
    %v535 = vxor.u32 %v533, 2147483648
    %v536 = vmul.f32 %v534, 1.442695
    %v537 = vpow.pop %v536
    %v538 = vmul.f32 %v535, 1.442695
    %v539 = vpow.pop %v538
    %v540 = vadd.f32 %v537, 1.0
    %v541 = vadd.f32 %v539, 1.0
    %v542 = vrcp.pop %v540
    %v543 = vmul.f32 %v540, %v542
    %v544 = vsub.f32 1.0, %v543
    %v545 = vmul.f32 %v542, %v544
    %v546 = vadd.f32 %v542, %v545
    %vm547 = vweird.f32 %v540
    %vm548 = vweird.f32 %v542
    %vm549 = vmor %vm547, %vm548
    %v550 = vsel %vm549, %v542, %v546
    %v551 = vand.u32 2147483647, %v540
    %vm552 = vcmp.eq.f32.partialorder %v551, 8.507059e+37
    %v553 = vand.u32 %v540, 2147483648
    %v554 = vor.u32 1.1754944e-38, %v553
    %v555 = vsel %vm552, %v554, %v550
    %v556 = vmul.f32 1.0, %v555
    %v557 = vrcp.pop %v541
    %v558 = vmul.f32 %v541, %v557
    %v559 = vsub.f32 1.0, %v558
    %v560 = vmul.f32 %v557, %v559
    %v561 = vadd.f32 %v557, %v560
    %vm562 = vweird.f32 %v541
    %vm563 = vweird.f32 %v557
    %vm564 = vmor %vm562, %vm563
    %v565 = vsel %vm564, %v557, %v561
    %v566 = vand.u32 2147483647, %v541
    %vm567 = vcmp.eq.f32.partialorder %v566, 8.507059e+37
    %v568 = vand.u32 %v541, 2147483648
    %v569 = vor.u32 1.1754944e-38, %v568
    %v570 = vsel %vm567, %v569, %v565
    %v571 = vmul.f32 1.0, %v570
    %v572 = vmul.f32 %v556, %v529
    %v573 = vadd.f32 %v492, %v572
    %v574 = vtanh.pop %v573
    %v575 = vsub.f32 1.0, %v571
    %v576 = vmul.f32 %v575, %v574
    %v577 = vmul.f32 %v571, %v484
    %v578 = vadd.f32 %v576, %v577
    %s579 = scalar_lea.vmem [#allocation7], 8
    %580 = vst [vmem:[%s579] sm:$0xff] %v578
    %v581 = vpack.c.bf16 %v578, %v578
    %s582 = smul.u32 2, 3
    %s583 = smul.addr %s582, 8
    %s584 = scalar_lea.vmem [#allocation2], %s583
    %v585 = vld [vmem:[%s584] sm:$0xff]
    %v586 = vld [vmem:[%s584 + $0x8] sm:$0xff]
    %v587 = vld [vmem:[%s584 + $0x10] sm:$0xff]
    %588 = vmatpush.bf16.msra.mxu0 %v372
    %589 = vmatpush.bf16.msra.mxu0 %v369
    %590 = vmatpush.bf16.msra.mxu0 %v366
    %591 = vmatpush.bf16.msra.mxu0 %v363
    %592 = vmatpush.bf16.msra.mxu0 %v360
    %593 = vmatpush.bf16.msra.mxu0 %v357
    %594 = vmatpush.bf16.msra.mxu0 %v354
    %595 = vmatpush.bf16.msra.mxu0 %v351
    %596 = vmatmul.bf16.gmra.mxu0 %v581
    %v597 = vpop.f32.mrf.mxu0
    %v598 = vadd.f32 %v257, %v597
    %v599 = vpop.f32.mrf.mxu0
    %600 = vdwg.mxu0
    %601 = vmatpush.bf16.msra.mxu0 %v373
    %602 = vmatpush.bf16.msra.mxu0 %v370
    %603 = vmatpush.bf16.msra.mxu0 %v367
    %604 = vmatpush.bf16.msra.mxu0 %v364
    %605 = vmatpush.bf16.msra.mxu0 %v361
    %606 = vmatpush.bf16.msra.mxu0 %v358
    %607 = vmatpush.bf16.msra.mxu0 %v355
    %608 = vmatpush.bf16.msra.mxu0 %v352
    %609 = vmatmul.bf16.gmra.mxu0 %v581
    %v610 = vpop.f32.mrf.mxu0
    %v611 = vadd.f32 %v258, %v610
    %v612 = vpop.f32.mrf.mxu0
    %613 = vdwg.mxu0
    %614 = vmatpush.bf16.msra.mxu0 %v374
    %615 = vmatpush.bf16.msra.mxu0 %v371
    %616 = vmatpush.bf16.msra.mxu0 %v368
    %617 = vmatpush.bf16.msra.mxu0 %v365
    %618 = vmatpush.bf16.msra.mxu0 %v362
    %619 = vmatpush.bf16.msra.mxu0 %v359
    %620 = vmatpush.bf16.msra.mxu0 %v356
    %621 = vmatpush.bf16.msra.mxu0 %v353
    %622 = vmatmul.bf16.gmra.mxu0 %v581
    %v623 = vpop.f32.mrf.mxu0
    %v624 = vadd.f32 %v259, %v623
    %v625 = vpop.f32.mrf.mxu0
    %626 = vdwg.mxu0
    %v627 = vadd.f32 %v585, %v598
    %v628 = vadd.f32 %v586, %v611
    %v629 = vxor.u32 %v627, 2147483648
    %v630 = vxor.u32 %v628, 2147483648
    %v631 = vmul.f32 %v629, 1.442695
    %v632 = vpow.pop %v631
    %v633 = vmul.f32 %v630, 1.442695
    %v634 = vpow.pop %v633
    %v635 = vadd.f32 %v632, 1.0
    %v636 = vadd.f32 %v634, 1.0
    %v637 = vrcp.pop %v635
    %v638 = vmul.f32 %v635, %v637
    %v639 = vsub.f32 1.0, %v638
    %v640 = vmul.f32 %v637, %v639
    %v641 = vadd.f32 %v637, %v640
    %vm642 = vweird.f32 %v635
    %vm643 = vweird.f32 %v637
    %vm644 = vmor %vm642, %vm643
    %v645 = vsel %vm644, %v637, %v641
    %v646 = vand.u32 2147483647, %v635
    %vm647 = vcmp.eq.f32.partialorder %v646, 8.507059e+37
    %v648 = vand.u32 %v635, 2147483648
    %v649 = vor.u32 1.1754944e-38, %v648
    %v650 = vsel %vm647, %v649, %v645
    %v651 = vmul.f32 1.0, %v650
    %v652 = vrcp.pop %v636
    %v653 = vmul.f32 %v636, %v652
    %v654 = vsub.f32 1.0, %v653
    %v655 = vmul.f32 %v652, %v654
    %v656 = vadd.f32 %v652, %v655
    %vm657 = vweird.f32 %v636
    %vm658 = vweird.f32 %v652
    %vm659 = vmor %vm657, %vm658
    %v660 = vsel %vm659, %v652, %v656
    %v661 = vand.u32 2147483647, %v636
    %vm662 = vcmp.eq.f32.partialorder %v661, 8.507059e+37
    %v663 = vand.u32 %v636, 2147483648
    %v664 = vor.u32 1.1754944e-38, %v663
    %v665 = vsel %vm662, %v664, %v660
    %v666 = vmul.f32 1.0, %v665
    %v667 = vmul.f32 %v651, %v624
    %v668 = vadd.f32 %v587, %v667
    %v669 = vtanh.pop %v668
    %v670 = vsub.f32 1.0, %v666
    %v671 = vmul.f32 %v670, %v669
    %v672 = vmul.f32 %v666, %v578
    %v673 = vadd.f32 %v671, %v672
    %s674 = scalar_lea.vmem [#allocation7], 16
    %675 = vst [vmem:[%s674] sm:$0xff] %v673
    %v676 = vpack.c.bf16 %v673, %v673
    %s677 = smul.u32 3, 3
    %s678 = smul.addr %s677, 8
    %s679 = scalar_lea.vmem [#allocation2], %s678
    %v680 = vld [vmem:[%s679] sm:$0xff]
    %v681 = vld [vmem:[%s679 + $0x8] sm:$0xff]
    %v682 = vld [vmem:[%s679 + $0x10] sm:$0xff]
    %683 = vmatpush.bf16.msra.mxu0 %v372
    %684 = vmatpush.bf16.msra.mxu0 %v369
    %685 = vmatpush.bf16.msra.mxu0 %v366
    %686 = vmatpush.bf16.msra.mxu0 %v363
    %687 = vmatpush.bf16.msra.mxu0 %v360
    %688 = vmatpush.bf16.msra.mxu0 %v357
    %689 = vmatpush.bf16.msra.mxu0 %v354
    %690 = vmatpush.bf16.msra.mxu0 %v351
    %691 = vmatmul.bf16.gmra.mxu0 %v676
    %v692 = vpop.f32.mrf.mxu0
    %v693 = vadd.f32 %v257, %v692
    %v694 = vpop.f32.mrf.mxu0
    %695 = vdwg.mxu0
    %696 = vmatpush.bf16.msra.mxu0 %v373
    %697 = vmatpush.bf16.msra.mxu0 %v370
    %698 = vmatpush.bf16.msra.mxu0 %v367
    %699 = vmatpush.bf16.msra.mxu0 %v364
    %700 = vmatpush.bf16.msra.mxu0 %v361
    %701 = vmatpush.bf16.msra.mxu0 %v358
    %702 = vmatpush.bf16.msra.mxu0 %v355
    %703 = vmatpush.bf16.msra.mxu0 %v352
    %704 = vmatmul.bf16.gmra.mxu0 %v676
    %v705 = vpop.f32.mrf.mxu0
    %v706 = vadd.f32 %v258, %v705
    %v707 = vpop.f32.mrf.mxu0
    %708 = vdwg.mxu0
    %709 = vmatpush.bf16.msra.mxu0 %v374
    %710 = vmatpush.bf16.msra.mxu0 %v371
    %711 = vmatpush.bf16.msra.mxu0 %v368
    %712 = vmatpush.bf16.msra.mxu0 %v365
    %713 = vmatpush.bf16.msra.mxu0 %v362
    %714 = vmatpush.bf16.msra.mxu0 %v359
    %715 = vmatpush.bf16.msra.mxu0 %v356
    %716 = vmatpush.bf16.msra.mxu0 %v353
    %717 = vmatmul.bf16.gmra.mxu0 %v676
    %v718 = vpop.f32.mrf.mxu0
    %v719 = vadd.f32 %v259, %v718
    %v720 = vpop.f32.mrf.mxu0
    %721 = vdwg.mxu0
    %v722 = vadd.f32 %v680, %v693
    %v723 = vadd.f32 %v681, %v706
    %v724 = vxor.u32 %v722, 2147483648
    %v725 = vxor.u32 %v723, 2147483648
    %v726 = vmul.f32 %v724, 1.442695
    %v727 = vpow.pop %v726
    %v728 = vmul.f32 %v725, 1.442695
    %v729 = vpow.pop %v728
    %v730 = vadd.f32 %v727, 1.0
    %v731 = vadd.f32 %v729, 1.0
    %v732 = vrcp.pop %v730
    %v733 = vmul.f32 %v730, %v732
    %v734 = vsub.f32 1.0, %v733
    %v735 = vmul.f32 %v732, %v734
    %v736 = vadd.f32 %v732, %v735
    %vm737 = vweird.f32 %v730
    %vm738 = vweird.f32 %v732
    %vm739 = vmor %vm737, %vm738
    %v740 = vsel %vm739, %v732, %v736
    %v741 = vand.u32 2147483647, %v730
    %vm742 = vcmp.eq.f32.partialorder %v741, 8.507059e+37
    %v743 = vand.u32 %v730, 2147483648
    %v744 = vor.u32 1.1754944e-38, %v743
    %v745 = vsel %vm742, %v744, %v740
    %v746 = vmul.f32 1.0, %v745
    %v747 = vrcp.pop %v731
    %v748 = vmul.f32 %v731, %v747
    %v749 = vsub.f32 1.0, %v748
    %v750 = vmul.f32 %v747, %v749
    %v751 = vadd.f32 %v747, %v750
    %vm752 = vweird.f32 %v731
    %vm753 = vweird.f32 %v747
    %vm754 = vmor %vm752, %vm753
    %v755 = vsel %vm754, %v747, %v751
    %v756 = vand.u32 2147483647, %v731
    %vm757 = vcmp.eq.f32.partialorder %v756, 8.507059e+37
    %v758 = vand.u32 %v731, 2147483648
    %v759 = vor.u32 1.1754944e-38, %v758
    %v760 = vsel %vm757, %v759, %v755
    %v761 = vmul.f32 1.0, %v760
    %v762 = vmul.f32 %v746, %v719
    %v763 = vadd.f32 %v682, %v762
    %v764 = vtanh.pop %v763
    %v765 = vsub.f32 1.0, %v761
    %v766 = vmul.f32 %v765, %v764
    %v767 = vmul.f32 %v761, %v673
    %v768 = vadd.f32 %v766, %v767
    %s769 = scalar_lea.vmem [#allocation7], 24
    %770 = vst [vmem:[%s769] sm:$0xff] %v768
    %v771 = vpack.c.bf16 %v768, %v768
    %s772 = smul.u32 4, 3
    %s773 = smul.addr %s772, 8
    %s774 = scalar_lea.vmem [#allocation2], %s773
    %v775 = vld [vmem:[%s774] sm:$0xff]
    %v776 = vld [vmem:[%s774 + $0x8] sm:$0xff]
    %v777 = vld [vmem:[%s774 + $0x10] sm:$0xff]
    %778 = vmatpush.bf16.msra.mxu0 %v372
    %779 = vmatpush.bf16.msra.mxu0 %v369
    %780 = vmatpush.bf16.msra.mxu0 %v366
    %781 = vmatpush.bf16.msra.mxu0 %v363
    %782 = vmatpush.bf16.msra.mxu0 %v360
    %783 = vmatpush.bf16.msra.mxu0 %v357
    %784 = vmatpush.bf16.msra.mxu0 %v354
    %785 = vmatpush.bf16.msra.mxu0 %v351
    %786 = vmatmul.bf16.gmra.mxu0 %v771
    %v787 = vpop.f32.mrf.mxu0
    %v788 = vadd.f32 %v257, %v787
    %v789 = vpop.f32.mrf.mxu0
    %790 = vdwg.mxu0
    %791 = vmatpush.bf16.msra.mxu0 %v373
    %792 = vmatpush.bf16.msra.mxu0 %v370
    %793 = vmatpush.bf16.msra.mxu0 %v367
    %794 = vmatpush.bf16.msra.mxu0 %v364
    %795 = vmatpush.bf16.msra.mxu0 %v361
    %796 = vmatpush.bf16.msra.mxu0 %v358
    %797 = vmatpush.bf16.msra.mxu0 %v355
    %798 = vmatpush.bf16.msra.mxu0 %v352
    %799 = vmatmul.bf16.gmra.mxu0 %v771
    %v800 = vpop.f32.mrf.mxu0
    %v801 = vadd.f32 %v258, %v800
    %v802 = vpop.f32.mrf.mxu0
    %803 = vdwg.mxu0
    %804 = vmatpush.bf16.msra.mxu0 %v374
    %805 = vmatpush.bf16.msra.mxu0 %v371
    %806 = vmatpush.bf16.msra.mxu0 %v368
    %807 = vmatpush.bf16.msra.mxu0 %v365
    %808 = vmatpush.bf16.msra.mxu0 %v362
    %809 = vmatpush.bf16.msra.mxu0 %v359
    %810 = vmatpush.bf16.msra.mxu0 %v356
    %811 = vmatpush.bf16.msra.mxu0 %v353
    %812 = vmatmul.bf16.gmra.mxu0 %v771
    %v813 = vpop.f32.mrf.mxu0
    %v814 = vadd.f32 %v259, %v813
    %v815 = vpop.f32.mrf.mxu0
    %816 = vdwg.mxu0
    %v817 = vadd.f32 %v775, %v788
    %v818 = vadd.f32 %v776, %v801
    %v819 = vxor.u32 %v817, 2147483648
    %v820 = vxor.u32 %v818, 2147483648
    %v821 = vmul.f32 %v819, 1.442695
    %v822 = vpow.pop %v821
    %v823 = vmul.f32 %v820, 1.442695
    %v824 = vpow.pop %v823
    %v825 = vadd.f32 %v822, 1.0
    %v826 = vadd.f32 %v824, 1.0
    %v827 = vrcp.pop %v825
    %v828 = vmul.f32 %v825, %v827
    %v829 = vsub.f32 1.0, %v828
    %v830 = vmul.f32 %v827, %v829
    %v831 = vadd.f32 %v827, %v830
    %vm832 = vweird.f32 %v825
    %vm833 = vweird.f32 %v827
    %vm834 = vmor %vm832, %vm833
    %v835 = vsel %vm834, %v827, %v831
    %v836 = vand.u32 2147483647, %v825
    %vm837 = vcmp.eq.f32.partialorder %v836, 8.507059e+37
    %v838 = vand.u32 %v825, 2147483648
    %v839 = vor.u32 1.1754944e-38, %v838
    %v840 = vsel %vm837, %v839, %v835
    %v841 = vmul.f32 1.0, %v840
    %v842 = vrcp.pop %v826
    %v843 = vmul.f32 %v826, %v842
    %v844 = vsub.f32 1.0, %v843
    %v845 = vmul.f32 %v842, %v844
    %v846 = vadd.f32 %v842, %v845
    %vm847 = vweird.f32 %v826
    %vm848 = vweird.f32 %v842
    %vm849 = vmor %vm847, %vm848
    %v850 = vsel %vm849, %v842, %v846
    %v851 = vand.u32 2147483647, %v826
    %vm852 = vcmp.eq.f32.partialorder %v851, 8.507059e+37
    %v853 = vand.u32 %v826, 2147483648
    %v854 = vor.u32 1.1754944e-38, %v853
    %v855 = vsel %vm852, %v854, %v850
    %v856 = vmul.f32 1.0, %v855
    %v857 = vmul.f32 %v841, %v814
    %v858 = vadd.f32 %v777, %v857
    %v859 = vtanh.pop %v858
    %v860 = vsub.f32 1.0, %v856
    %v861 = vmul.f32 %v860, %v859
    %v862 = vmul.f32 %v856, %v768
    %v863 = vadd.f32 %v861, %v862
    %s864 = scalar_lea.vmem [#allocation7], 32
    %865 = vst [vmem:[%s864] sm:$0xff] %v863
    %v866 = vpack.c.bf16 %v863, %v863
    %s867 = smul.u32 5, 3
    %s868 = smul.addr %s867, 8
    %s869 = scalar_lea.vmem [#allocation2], %s868
    %v870 = vld [vmem:[%s869] sm:$0xff]
    %v871 = vld [vmem:[%s869 + $0x8] sm:$0xff]
    %v872 = vld [vmem:[%s869 + $0x10] sm:$0xff]
    %873 = vmatpush.bf16.msra.mxu0 %v372
    %874 = vmatpush.bf16.msra.mxu0 %v369
    %875 = vmatpush.bf16.msra.mxu0 %v366
    %876 = vmatpush.bf16.msra.mxu0 %v363
    %877 = vmatpush.bf16.msra.mxu0 %v360
    %878 = vmatpush.bf16.msra.mxu0 %v357
    %879 = vmatpush.bf16.msra.mxu0 %v354
    %880 = vmatpush.bf16.msra.mxu0 %v351
    %881 = vmatmul.bf16.gmra.mxu0 %v866
    %v882 = vpop.f32.mrf.mxu0
    %v883 = vadd.f32 %v257, %v882
    %v884 = vpop.f32.mrf.mxu0
    %885 = vdwg.mxu0
    %886 = vmatpush.bf16.msra.mxu0 %v373
    %887 = vmatpush.bf16.msra.mxu0 %v370
    %888 = vmatpush.bf16.msra.mxu0 %v367
    %889 = vmatpush.bf16.msra.mxu0 %v364
    %890 = vmatpush.bf16.msra.mxu0 %v361
    %891 = vmatpush.bf16.msra.mxu0 %v358
    %892 = vmatpush.bf16.msra.mxu0 %v355
    %893 = vmatpush.bf16.msra.mxu0 %v352
    %894 = vmatmul.bf16.gmra.mxu0 %v866
    %v895 = vpop.f32.mrf.mxu0
    %v896 = vadd.f32 %v258, %v895
    %v897 = vpop.f32.mrf.mxu0
    %898 = vdwg.mxu0
    %899 = vmatpush.bf16.msra.mxu0 %v374
    %900 = vmatpush.bf16.msra.mxu0 %v371
    %901 = vmatpush.bf16.msra.mxu0 %v368
    %902 = vmatpush.bf16.msra.mxu0 %v365
    %903 = vmatpush.bf16.msra.mxu0 %v362
    %904 = vmatpush.bf16.msra.mxu0 %v359
    %905 = vmatpush.bf16.msra.mxu0 %v356
    %906 = vmatpush.bf16.msra.mxu0 %v353
    %907 = vmatmul.bf16.gmra.mxu0 %v866
    %v908 = vpop.f32.mrf.mxu0
    %v909 = vadd.f32 %v259, %v908
    %v910 = vpop.f32.mrf.mxu0
    %911 = vdwg.mxu0
    %v912 = vadd.f32 %v870, %v883
    %v913 = vadd.f32 %v871, %v896
    %v914 = vxor.u32 %v912, 2147483648
    %v915 = vxor.u32 %v913, 2147483648
    %v916 = vmul.f32 %v914, 1.442695
    %v917 = vpow.pop %v916
    %v918 = vmul.f32 %v915, 1.442695
    %v919 = vpow.pop %v918
    %v920 = vadd.f32 %v917, 1.0
    %v921 = vadd.f32 %v919, 1.0
    %v922 = vrcp.pop %v920
    %v923 = vmul.f32 %v920, %v922
    %v924 = vsub.f32 1.0, %v923
    %v925 = vmul.f32 %v922, %v924
    %v926 = vadd.f32 %v922, %v925
    %vm927 = vweird.f32 %v920
    %vm928 = vweird.f32 %v922
    %vm929 = vmor %vm927, %vm928
    %v930 = vsel %vm929, %v922, %v926
    %v931 = vand.u32 2147483647, %v920
    %vm932 = vcmp.eq.f32.partialorder %v931, 8.507059e+37
    %v933 = vand.u32 %v920, 2147483648
    %v934 = vor.u32 1.1754944e-38, %v933
    %v935 = vsel %vm932, %v934, %v930
    %v936 = vmul.f32 1.0, %v935
    %v937 = vrcp.pop %v921
    %v938 = vmul.f32 %v921, %v937
    %v939 = vsub.f32 1.0, %v938
    %v940 = vmul.f32 %v937, %v939
    %v941 = vadd.f32 %v937, %v940
    %vm942 = vweird.f32 %v921
    %vm943 = vweird.f32 %v937
    %vm944 = vmor %vm942, %vm943
    %v945 = vsel %vm944, %v937, %v941
    %v946 = vand.u32 2147483647, %v921
    %vm947 = vcmp.eq.f32.partialorder %v946, 8.507059e+37
    %v948 = vand.u32 %v921, 2147483648
    %v949 = vor.u32 1.1754944e-38, %v948
    %v950 = vsel %vm947, %v949, %v945
    %v951 = vmul.f32 1.0, %v950
    %v952 = vmul.f32 %v936, %v909
    %v953 = vadd.f32 %v872, %v952
    %v954 = vtanh.pop %v953
    %v955 = vsub.f32 1.0, %v951
    %v956 = vmul.f32 %v955, %v954
    %v957 = vmul.f32 %v951, %v863
    %v958 = vadd.f32 %v956, %v957
    %s959 = scalar_lea.vmem [#allocation7], 40
    %960 = vst [vmem:[%s959] sm:$0xff] %v958
    %v961 = vpack.c.bf16 %v958, %v958
    %s962 = smul.u32 6, 3
    %s963 = smul.addr %s962, 8
    %s964 = scalar_lea.vmem [#allocation2], %s963
    %v965 = vld [vmem:[%s964] sm:$0xff]
    %v966 = vld [vmem:[%s964 + $0x8] sm:$0xff]
    %v967 = vld [vmem:[%s964 + $0x10] sm:$0xff]
    %968 = vmatpush.bf16.msra.mxu0 %v372
    %969 = vmatpush.bf16.msra.mxu0 %v369
    %970 = vmatpush.bf16.msra.mxu0 %v366
    %971 = vmatpush.bf16.msra.mxu0 %v363
    %972 = vmatpush.bf16.msra.mxu0 %v360
    %973 = vmatpush.bf16.msra.mxu0 %v357
    %974 = vmatpush.bf16.msra.mxu0 %v354
    %975 = vmatpush.bf16.msra.mxu0 %v351
    %976 = vmatmul.bf16.gmra.mxu0 %v961
    %v977 = vpop.f32.mrf.mxu0
    %v978 = vadd.f32 %v257, %v977
    %v979 = vpop.f32.mrf.mxu0
    %980 = vdwg.mxu0
    %981 = vmatpush.bf16.msra.mxu0 %v373
    %982 = vmatpush.bf16.msra.mxu0 %v370
    %983 = vmatpush.bf16.msra.mxu0 %v367
    %984 = vmatpush.bf16.msra.mxu0 %v364
    %985 = vmatpush.bf16.msra.mxu0 %v361
    %986 = vmatpush.bf16.msra.mxu0 %v358
    %987 = vmatpush.bf16.msra.mxu0 %v355
    %988 = vmatpush.bf16.msra.mxu0 %v352
    %989 = vmatmul.bf16.gmra.mxu0 %v961
    %v990 = vpop.f32.mrf.mxu0
    %v991 = vadd.f32 %v258, %v990
    %v992 = vpop.f32.mrf.mxu0
    %993 = vdwg.mxu0
    %994 = vmatpush.bf16.msra.mxu0 %v374
    %995 = vmatpush.bf16.msra.mxu0 %v371
    %996 = vmatpush.bf16.msra.mxu0 %v368
    %997 = vmatpush.bf16.msra.mxu0 %v365
    %998 = vmatpush.bf16.msra.mxu0 %v362
    %999 = vmatpush.bf16.msra.mxu0 %v359
    %1000 = vmatpush.bf16.msra.mxu0 %v356
    %1001 = vmatpush.bf16.msra.mxu0 %v353
    %1002 = vmatmul.bf16.gmra.mxu0 %v961
    %v1003 = vpop.f32.mrf.mxu0
    %v1004 = vadd.f32 %v259, %v1003
    %v1005 = vpop.f32.mrf.mxu0
    %1006 = vdwg.mxu0
    %v1007 = vadd.f32 %v965, %v978
    %v1008 = vadd.f32 %v966, %v991
    %v1009 = vxor.u32 %v1007, 2147483648
    %v1010 = vxor.u32 %v1008, 2147483648
    %v1011 = vmul.f32 %v1009, 1.442695
    %v1012 = vpow.pop %v1011
    %v1013 = vmul.f32 %v1010, 1.442695
    %v1014 = vpow.pop %v1013
    %v1015 = vadd.f32 %v1012, 1.0
    %v1016 = vadd.f32 %v1014, 1.0
    %v1017 = vrcp.pop %v1015
    %v1018 = vmul.f32 %v1015, %v1017
    %v1019 = vsub.f32 1.0, %v1018
    %v1020 = vmul.f32 %v1017, %v1019
    %v1021 = vadd.f32 %v1017, %v1020
    %vm1022 = vweird.f32 %v1015
    %vm1023 = vweird.f32 %v1017
    %vm1024 = vmor %vm1022, %vm1023
    %v1025 = vsel %vm1024, %v1017, %v1021
    %v1026 = vand.u32 2147483647, %v1015
    %vm1027 = vcmp.eq.f32.partialorder %v1026, 8.507059e+37
    %v1028 = vand.u32 %v1015, 2147483648
    %v1029 = vor.u32 1.1754944e-38, %v1028
    %v1030 = vsel %vm1027, %v1029, %v1025
    %v1031 = vmul.f32 1.0, %v1030
    %v1032 = vrcp.pop %v1016
    %v1033 = vmul.f32 %v1016, %v1032
    %v1034 = vsub.f32 1.0, %v1033
    %v1035 = vmul.f32 %v1032, %v1034
    %v1036 = vadd.f32 %v1032, %v1035
    %vm1037 = vweird.f32 %v1016
    %vm1038 = vweird.f32 %v1032
    %vm1039 = vmor %vm1037, %vm1038
    %v1040 = vsel %vm1039, %v1032, %v1036
    %v1041 = vand.u32 2147483647, %v1016
    %vm1042 = vcmp.eq.f32.partialorder %v1041, 8.507059e+37
    %v1043 = vand.u32 %v1016, 2147483648
    %v1044 = vor.u32 1.1754944e-38, %v1043
    %v1045 = vsel %vm1042, %v1044, %v1040
    %v1046 = vmul.f32 1.0, %v1045
    %v1047 = vmul.f32 %v1031, %v1004
    %v1048 = vadd.f32 %v967, %v1047
    %v1049 = vtanh.pop %v1048
    %v1050 = vsub.f32 1.0, %v1046
    %v1051 = vmul.f32 %v1050, %v1049
    %v1052 = vmul.f32 %v1046, %v958
    %v1053 = vadd.f32 %v1051, %v1052
    %s1054 = scalar_lea.vmem [#allocation7], 48
    %1055 = vst [vmem:[%s1054] sm:$0xff] %v1053
    %v1056 = vpack.c.bf16 %v1053, %v1053
    %s1057 = smul.u32 7, 3
    %s1058 = smul.addr %s1057, 8
    %s1059 = scalar_lea.vmem [#allocation2], %s1058
    %v1060 = vld [vmem:[%s1059] sm:$0xff]
    %v1061 = vld [vmem:[%s1059 + $0x8] sm:$0xff]
    %v1062 = vld [vmem:[%s1059 + $0x10] sm:$0xff]
    %1063 = vmatpush.bf16.msra.mxu0 %v372
    %1064 = vmatpush.bf16.msra.mxu0 %v369
    %1065 = vmatpush.bf16.msra.mxu0 %v366
    %1066 = vmatpush.bf16.msra.mxu0 %v363
    %1067 = vmatpush.bf16.msra.mxu0 %v360
    %1068 = vmatpush.bf16.msra.mxu0 %v357
    %1069 = vmatpush.bf16.msra.mxu0 %v354
    %1070 = vmatpush.bf16.msra.mxu0 %v351
    %1071 = vmatmul.bf16.gmra.mxu0 %v1056
    %v1072 = vpop.f32.mrf.mxu0
    %v1073 = vadd.f32 %v257, %v1072
    %v1074 = vpop.f32.mrf.mxu0
    %1075 = vdwg.mxu0
    %1076 = vmatpush.bf16.msra.mxu0 %v373
    %1077 = vmatpush.bf16.msra.mxu0 %v370
    %1078 = vmatpush.bf16.msra.mxu0 %v367
    %1079 = vmatpush.bf16.msra.mxu0 %v364
    %1080 = vmatpush.bf16.msra.mxu0 %v361
    %1081 = vmatpush.bf16.msra.mxu0 %v358
    %1082 = vmatpush.bf16.msra.mxu0 %v355
    %1083 = vmatpush.bf16.msra.mxu0 %v352
    %1084 = vmatmul.bf16.gmra.mxu0 %v1056
    %v1085 = vpop.f32.mrf.mxu0
    %v1086 = vadd.f32 %v258, %v1085
    %v1087 = vpop.f32.mrf.mxu0
    %1088 = vdwg.mxu0
    %1089 = vmatpush.bf16.msra.mxu0 %v374
    %1090 = vmatpush.bf16.msra.mxu0 %v371
    %1091 = vmatpush.bf16.msra.mxu0 %v368
    %1092 = vmatpush.bf16.msra.mxu0 %v365
    %1093 = vmatpush.bf16.msra.mxu0 %v362
    %1094 = vmatpush.bf16.msra.mxu0 %v359
    %1095 = vmatpush.bf16.msra.mxu0 %v356
    %1096 = vmatpush.bf16.msra.mxu0 %v353
    %1097 = vmatmul.bf16.gmra.mxu0 %v1056
    %v1098 = vpop.f32.mrf.mxu0
    %v1099 = vadd.f32 %v259, %v1098
    %v1100 = vpop.f32.mrf.mxu0
    %1101 = vdwg.mxu0
    %v1102 = vadd.f32 %v1060, %v1073
    %v1103 = vadd.f32 %v1061, %v1086
    %v1104 = vxor.u32 %v1102, 2147483648
    %v1105 = vxor.u32 %v1103, 2147483648
    %v1106 = vmul.f32 %v1104, 1.442695
    %v1107 = vpow.pop %v1106
    %v1108 = vmul.f32 %v1105, 1.442695
    %v1109 = vpow.pop %v1108
    %v1110 = vadd.f32 %v1107, 1.0
    %v1111 = vadd.f32 %v1109, 1.0
    %v1112 = vrcp.pop %v1110
    %v1113 = vmul.f32 %v1110, %v1112
    %v1114 = vsub.f32 1.0, %v1113
    %v1115 = vmul.f32 %v1112, %v1114
    %v1116 = vadd.f32 %v1112, %v1115
    %vm1117 = vweird.f32 %v1110
    %vm1118 = vweird.f32 %v1112
    %vm1119 = vmor %vm1117, %vm1118
    %v1120 = vsel %vm1119, %v1112, %v1116
    %v1121 = vand.u32 2147483647, %v1110
    %vm1122 = vcmp.eq.f32.partialorder %v1121, 8.507059e+37
    %v1123 = vand.u32 %v1110, 2147483648
    %v1124 = vor.u32 1.1754944e-38, %v1123
    %v1125 = vsel %vm1122, %v1124, %v1120
    %v1126 = vmul.f32 1.0, %v1125
    %v1127 = vrcp.pop %v1111
    %v1128 = vmul.f32 %v1111, %v1127
    %v1129 = vsub.f32 1.0, %v1128
    %v1130 = vmul.f32 %v1127, %v1129
    %v1131 = vadd.f32 %v1127, %v1130
    %vm1132 = vweird.f32 %v1111
    %vm1133 = vweird.f32 %v1127
    %vm1134 = vmor %vm1132, %vm1133
    %v1135 = vsel %vm1134, %v1127, %v1131
    %v1136 = vand.u32 2147483647, %v1111
    %vm1137 = vcmp.eq.f32.partialorder %v1136, 8.507059e+37
    %v1138 = vand.u32 %v1111, 2147483648
    %v1139 = vor.u32 1.1754944e-38, %v1138
    %v1140 = vsel %vm1137, %v1139, %v1135
    %v1141 = vmul.f32 1.0, %v1140
    %v1142 = vmul.f32 %v1126, %v1099
    %v1143 = vadd.f32 %v1062, %v1142
    %v1144 = vtanh.pop %v1143
    %v1145 = vsub.f32 1.0, %v1141
    %v1146 = vmul.f32 %v1145, %v1144
    %v1147 = vmul.f32 %v1141, %v1053
    %v1148 = vadd.f32 %v1146, %v1147
    %s1149 = scalar_lea.vmem [#allocation7], 56
    %1150 = vst [vmem:[%s1149] sm:$0xff] %v1148
    %1151 = vst [vmem:[#allocation3] sm:$0xff] %v1148
    // Predicated region
    $region30: #{tpu_custom_call.1} parent=1 // pred_check
      _
    $region31: #{tpu_custom_call.1} parent=1 // pred_check_branch
      %1153 = sbr.rel (0) target = $region33
    $region32: #{tpu_custom_call.1} parent=1 // pred_region
      %1155 = vsyncadd [#allocation6], 0
      %s1156 = sshll.u32 [#allocation7], 4
      %s1157 = int_to_ptr.vmem [resolvable:$true] %s1156
      %s1158 = sshll.u32 %s5, 4
      %s1159 = int_to_ptr.hbm [resolvable:$true] %s1158
      %1164 = dma.vmem_to_hbm [thread:$0]  %s1157, 1024, %s1159, [#allocation6], 128, 128, 8
    $region33: #{tpu_custom_call.1} parent=1 // pred_fallthru
      _
    // Predicated region
    $region34: #{tpu_custom_call.1} parent=1 // pred_check
      _
    $region35: #{tpu_custom_call.1} parent=1 // pred_check_branch
      %1166 = sbr.rel (0) target = $region37
    $region36: #{tpu_custom_call.1} parent=1 // pred_region
      %1168 = dma.done [#allocation6], 1024
    $region37: #{tpu_custom_call.1} parent=1 // pred_fallthru
      _
    %1169 = vsyncpa [#allocation5], 1
    %1170 = vsyncpa [#allocation6], 1

// kernel: tpu_custom_call.1
$region0: #{tpu_custom_call.1}
  #allocation0 [shape = 'u32[]', space=smem, size = 0x4, offset = 0x4, fixed_abs, tag = 'smem constant byte address 0x4 - core index']
  #allocation1 [shape = 'u32[72,128]{1,0:T(1,128)}', space=vmem, size = 0x9000, scoped, tag = 'internal scratch']
  #allocation2 [shape = 'f32[64,384]{1,0:T(8,128)}', space=vmem, size = 0x18000, scoped, tag = 'scratch operand']
  #allocation3 [shape = 'f32[8,128]{1,0:T(8,128)}', space=vmem, size = 0x1000, scoped, tag = 'scratch operand']
  %s0 = inlined_call_operand.vmem [shape: bf16[64,16], index: 0, kind: input, shape index: {}]
  %s1 = inlined_call_operand.vmem [shape: bf16[16,384], index: 1, kind: input, shape index: {}]
  %s2 = inlined_call_operand.vmem [shape: f32[1,384], index: 2, kind: input, shape index: {}]
  %s3 = inlined_call_operand.hbm [shape: bf16[128,384], index: 3, kind: input, shape index: {}]
  %s4 = inlined_call_operand.vmem [shape: f32[1,384], index: 4, kind: input, shape index: {}]
  %s5 = inlined_call_operand.hbm [shape: f32[64,128], index: 5, kind: output, shape index: {}]
  %s6 = sld [smem:[#allocation0]]
  $region38: #{tpu_custom_call.1} parent=0
    _
  %s8 = ssub.s32 1, %s6
  %s9 = scalar_select 0, %s8, %s6
  $region1: #{tpu_custom_call.1} parent=0
    #allocation4 [shape = 'u8[98304]{0}', space=vmem, size = 0x18000, scoped, tag = 'input window, operand 3, single buffered']
    #allocation5 [shape = 's32[1]{0}', space=sflag, size = 0x4, scoped, tag = 'scoped memory for tpu_custom_call.1']
    #allocation6 [shape = 's32[1]{0}', space=sflag, size = 0x4, scoped, tag = 'scoped memory for tpu_custom_call.1']
    #allocation7 [shape = 'u8[32768]{0}', space=vmem, size = 0x8000, scoped, tag = 'output window, operand 0, single buffered']
    %10 = vsyncpa [#allocation5], 0
    %11 = vsyncpa [#allocation6], 0
    // Predicated region
    $region2: #{tpu_custom_call.1} parent=1 // pred_check
      _
    $region3: #{tpu_custom_call.1} parent=1 // pred_check_branch
      %13 = sbr.rel (0) target = $region5
    $region4: #{tpu_custom_call.1} parent=1 // pred_region
      _
    $region5: #{tpu_custom_call.1} parent=1 // pred_fallthru
      _
    // Predicated region
    $region6: #{tpu_custom_call.1} parent=1 // pred_check
      _
    $region7: #{tpu_custom_call.1} parent=1 // pred_check_branch
      %15 = sbr.rel (0) target = $region9
    $region8: #{tpu_custom_call.1} parent=1 // pred_region
      _
    $region9: #{tpu_custom_call.1} parent=1 // pred_fallthru
      _
    // Predicated region
    $region10: #{tpu_custom_call.1} parent=1 // pred_check
      _
    $region11: #{tpu_custom_call.1} parent=1 // pred_check_branch
      %17 = sbr.rel (0) target = $region13
    $region12: #{tpu_custom_call.1} parent=1 // pred_region
      _
    $region13: #{tpu_custom_call.1} parent=1 // pred_fallthru
      _
    // Predicated region
    $region14: #{tpu_custom_call.1} parent=1 // pred_check
      _
    $region15: #{tpu_custom_call.1} parent=1 // pred_check_branch
      %19 = sbr.rel (0) target = $region17
    $region16: #{tpu_custom_call.1} parent=1 // pred_region
      %21 = vsyncadd [#allocation5], 0
      %s22 = sshll.u32 %s3, 4
      %s23 = int_to_ptr.hbm [resolvable:$true] %s22
      %s24 = sshll.u32 [#allocation4], 4
      %s25 = int_to_ptr.vmem [resolvable:$true] %s24
      %30 = dma.hbm_to_vmem [thread:$0]  %s23, 3072, %s25, [#allocation5], 192, 192, 12
    $region17: #{tpu_custom_call.1} parent=1 // pred_fallthru
      _
    // Predicated region
    $region18: #{tpu_custom_call.1} parent=1 // pred_check
      _
    $region19: #{tpu_custom_call.1} parent=1 // pred_check_branch
      %32 = sbr.rel (0) target = $region21
    $region20: #{tpu_custom_call.1} parent=1 // pred_region
      _
    $region21: #{tpu_custom_call.1} parent=1 // pred_fallthru
      _
    // Predicated region
    $region22: #{tpu_custom_call.1} parent=1 // pred_check
      _
    $region23: #{tpu_custom_call.1} parent=1 // pred_check_branch
      %34 = sbr.rel (0) target = $region25
    $region24: #{tpu_custom_call.1} parent=1 // pred_region
      %36 = dma.done [#allocation5], 3072
    $region25: #{tpu_custom_call.1} parent=1 // pred_fallthru
      _
    %p38 = scmp.eq.s32.totalorder 0, 0
    // Predicated region
    $region26: #{tpu_custom_call.1} parent=1 // pred_check
      %p39 = pneg %p38
    $region27: #{tpu_custom_call.1} parent=1 // pred_check_branch
      %41 = sbr.rel (%p39) target = $region29
    $region28: #{tpu_custom_call.1} parent=1 // pred_region
      %42 = vst [vmem:[#allocation3] sm:$0xff] 0.0
    $region29: #{tpu_custom_call.1} parent=1 // pred_fallthru
      _
    %v43 = vld [vmem:[%s0] sm:$0xf]
    %v44 = vld [vmem:[%s0 + $0x4] sm:$0xf]
    %v45 = vld [vmem:[%s0 + $0x8] sm:$0xf]
    %v46 = vld [vmem:[%s0 + $0xc] sm:$0xf]
    %v47 = vld [vmem:[%s0 + $0x10] sm:$0xf]
    %v48 = vld [vmem:[%s0 + $0x14] sm:$0xf]
    %v49 = vld [vmem:[%s0 + $0x18] sm:$0xf]
    %v50 = vld [vmem:[%s0 + $0x1c] sm:$0xf]
    %v51 = vld [vmem:[%s1] sm:$0xff]
    %v52 = vld [vmem:[%s1 + $0x8] sm:$0xf]
    %v53 = vld [vmem:[%s1 + $0xc] sm:$0xff]
    %v54 = vld [vmem:[%s1 + $0x14] sm:$0xf]
    %v55 = vld [vmem:[%s2] sm:$0x7]
    %v57 = vperm.slane %v55, 0
    %v58 = vperm.slane %v55, 1
    %v59 = vperm.slane %v55, 2
    %v71 = vunpack.c.l.b16 %v43
    %v72 = vunpack.c.l.b16 %v44
    %v73 = vunpack.c.l.b16 %v45
    %v74 = vunpack.c.l.b16 %v46
    %v75 = vunpack.c.l.b16 %v47
    %v76 = vunpack.c.l.b16 %v48
    %v77 = vunpack.c.l.b16 %v49
    %v78 = vunpack.c.l.b16 %v50
    %v79 = vpack.c.b16 %v72, %v71
    %v80 = vpack.c.b16 %v74, %v73
    %v81 = vpack.c.b16 %v76, %v75
    %v82 = vpack.c.b16 %v78, %v77
    %v87 = vunpack.c.l.b16 %v51
    %v88 = vunpack.c.h.b16 %v51
    %v89 = vunpack.c.l.b16 %v52
    %v90 = vunpack.c.l.b16 %v53
    %v91 = vunpack.c.h.b16 %v53
    %v92 = vunpack.c.l.b16 %v54
    %v93 = vpack.c.b16 %v90, %v87
    %v94 = vpack.c.b16 %v91, %v88
    %v95 = vpack.c.b16 %v92, %v89
    %vm99 = vcmask 130048
    %v101 = vsel %vm99, %v79, 0
    %v104 = vsel %vm99, %v80, 0
    %v107 = vsel %vm99, %v81, 0
    %v110 = vsel %vm99, %v82, 0
    %112 = vmatpush.bf16.msra.mxu0 0
    %113 = vmatpush.bf16.msra.mxu0 0
    %114 = vmatpush.bf16.msra.mxu0 0
    %115 = vmatpush.bf16.msra.mxu0 0
    %116 = vmatpush.bf16.msra.mxu0 0
    %117 = vmatpush.bf16.msra.mxu0 0
    %118 = vmatpush.bf16.msra.mxu0 0
    %119 = vmatpush.bf16.msra.mxu0 %v93
    %120 = vmatmul.bf16.gmra.mxu0 %v101
    %v121 = vpop.f32.mrf.mxu0
    %v122 = vadd.f32 %v57, %v121
    %v123 = vpop.f32.mrf.mxu0
    %v124 = vadd.f32 %v57, %v123
    %125 = vmatmul.bf16.gmra.mxu0 %v104
    %v126 = vpop.f32.mrf.mxu0
    %v127 = vadd.f32 %v57, %v126
    %v128 = vpop.f32.mrf.mxu0
    %v129 = vadd.f32 %v57, %v128
    %130 = vmatmul.bf16.gmra.mxu0 %v107
    %v131 = vpop.f32.mrf.mxu0
    %v132 = vadd.f32 %v57, %v131
    %v133 = vpop.f32.mrf.mxu0
    %v134 = vadd.f32 %v57, %v133
    %135 = vmatmul.bf16.gmra.mxu0 %v110
    %v136 = vpop.f32.mrf.mxu0
    %v137 = vadd.f32 %v57, %v136
    %v138 = vpop.f32.mrf.mxu0
    %v139 = vadd.f32 %v57, %v138
    %140 = vdwg.mxu0
    %141 = vmatpush.bf16.msra.mxu0 0
    %142 = vmatpush.bf16.msra.mxu0 0
    %143 = vmatpush.bf16.msra.mxu0 0
    %144 = vmatpush.bf16.msra.mxu0 0
    %145 = vmatpush.bf16.msra.mxu0 0
    %146 = vmatpush.bf16.msra.mxu0 0
    %147 = vmatpush.bf16.msra.mxu0 0
    %148 = vmatpush.bf16.msra.mxu0 %v94
    %149 = vmatmul.bf16.gmra.mxu0 %v101
    %v150 = vpop.f32.mrf.mxu0
    %v151 = vadd.f32 %v58, %v150
    %v152 = vpop.f32.mrf.mxu0
    %v153 = vadd.f32 %v58, %v152
    %154 = vmatmul.bf16.gmra.mxu0 %v104
    %v155 = vpop.f32.mrf.mxu0
    %v156 = vadd.f32 %v58, %v155
    %v157 = vpop.f32.mrf.mxu0
    %v158 = vadd.f32 %v58, %v157
    %159 = vmatmul.bf16.gmra.mxu0 %v107
    %v160 = vpop.f32.mrf.mxu0
    %v161 = vadd.f32 %v58, %v160
    %v162 = vpop.f32.mrf.mxu0
    %v163 = vadd.f32 %v58, %v162
    %164 = vmatmul.bf16.gmra.mxu0 %v110
    %v165 = vpop.f32.mrf.mxu0
    %v166 = vadd.f32 %v58, %v165
    %v167 = vpop.f32.mrf.mxu0
    %v168 = vadd.f32 %v58, %v167
    %169 = vdwg.mxu0
    %170 = vmatpush.bf16.msra.mxu0 0
    %171 = vmatpush.bf16.msra.mxu0 0
    %172 = vmatpush.bf16.msra.mxu0 0
    %173 = vmatpush.bf16.msra.mxu0 0
    %174 = vmatpush.bf16.msra.mxu0 0
    %175 = vmatpush.bf16.msra.mxu0 0
    %176 = vmatpush.bf16.msra.mxu0 0
    %177 = vmatpush.bf16.msra.mxu0 %v95
    %178 = vmatmul.bf16.gmra.mxu0 %v101
    %v179 = vpop.f32.mrf.mxu0
    %v180 = vadd.f32 %v59, %v179
    %v181 = vpop.f32.mrf.mxu0
    %v182 = vadd.f32 %v59, %v181
    %183 = vmatmul.bf16.gmra.mxu0 %v104
    %v184 = vpop.f32.mrf.mxu0
    %v185 = vadd.f32 %v59, %v184
    %v186 = vpop.f32.mrf.mxu0
    %v187 = vadd.f32 %v59, %v186
    %188 = vmatmul.bf16.gmra.mxu0 %v107
    %v189 = vpop.f32.mrf.mxu0
    %v190 = vadd.f32 %v59, %v189
    %v191 = vpop.f32.mrf.mxu0
    %v192 = vadd.f32 %v59, %v191
    %193 = vmatmul.bf16.gmra.mxu0 %v110
    %v194 = vpop.f32.mrf.mxu0
    %v195 = vadd.f32 %v59, %v194
    %v196 = vpop.f32.mrf.mxu0
    %v197 = vadd.f32 %v59, %v196
    %198 = vdwg.mxu0
    %199 = vst [vmem:[#allocation2] sm:$0xff] %v122
    %200 = vst [vmem:[#allocation2 + $0x8] sm:$0xff] %v151
    %201 = vst [vmem:[#allocation2 + $0x10] sm:$0xff] %v180
    %202 = vst [vmem:[#allocation2 + $0x18] sm:$0xff] %v124
    %203 = vst [vmem:[#allocation2 + $0x20] sm:$0xff] %v153
    %204 = vst [vmem:[#allocation2 + $0x28] sm:$0xff] %v182
    %205 = vst [vmem:[#allocation2 + $0x30] sm:$0xff] %v127
    %206 = vst [vmem:[#allocation2 + $0x38] sm:$0xff] %v156
    %207 = vst [vmem:[#allocation2 + $0x40] sm:$0xff] %v185
    %208 = vst [vmem:[#allocation2 + $0x48] sm:$0xff] %v129
    %209 = vst [vmem:[#allocation2 + $0x50] sm:$0xff] %v158
    %210 = vst [vmem:[#allocation2 + $0x58] sm:$0xff] %v187
    %211 = vst [vmem:[#allocation2 + $0x60] sm:$0xff] %v132
    %212 = vst [vmem:[#allocation2 + $0x68] sm:$0xff] %v161
    %213 = vst [vmem:[#allocation2 + $0x70] sm:$0xff] %v190
    %214 = vst [vmem:[#allocation2 + $0x78] sm:$0xff] %v134
    %215 = vst [vmem:[#allocation2 + $0x80] sm:$0xff] %v163
    %216 = vst [vmem:[#allocation2 + $0x88] sm:$0xff] %v192
    %217 = vst [vmem:[#allocation2 + $0x90] sm:$0xff] %v137
    %218 = vst [vmem:[#allocation2 + $0x98] sm:$0xff] %v166
    %219 = vst [vmem:[#allocation2 + $0xa0] sm:$0xff] %v195
    %220 = vst [vmem:[#allocation2 + $0xa8] sm:$0xff] %v139
    %221 = vst [vmem:[#allocation2 + $0xb0] sm:$0xff] %v168
    %222 = vst [vmem:[#allocation2 + $0xb8] sm:$0xff] %v197
    %v223 = vld [vmem:[#allocation4] sm:$0xff]
    %v224 = vld [vmem:[#allocation4 + $0x8] sm:$0xf]
    %v225 = vld [vmem:[#allocation4 + $0xc] sm:$0xff]
    %v226 = vld [vmem:[#allocation4 + $0x14] sm:$0xf]
    %v227 = vld [vmem:[#allocation4 + $0x18] sm:$0xff]
    %v228 = vld [vmem:[#allocation4 + $0x20] sm:$0xf]
    %v229 = vld [vmem:[#allocation4 + $0x24] sm:$0xff]
    %v230 = vld [vmem:[#allocation4 + $0x2c] sm:$0xf]
    %v231 = vld [vmem:[#allocation4 + $0x30] sm:$0xff]
    %v232 = vld [vmem:[#allocation4 + $0x38] sm:$0xf]
    %v233 = vld [vmem:[#allocation4 + $0x3c] sm:$0xff]
    %v234 = vld [vmem:[#allocation4 + $0x44] sm:$0xf]
    %v235 = vld [vmem:[#allocation4 + $0x48] sm:$0xff]
    %v236 = vld [vmem:[#allocation4 + $0x50] sm:$0xf]
    %v237 = vld [vmem:[#allocation4 + $0x54] sm:$0xff]
    %v238 = vld [vmem:[#allocation4 + $0x5c] sm:$0xf]
    %v239 = vld [vmem:[#allocation4 + $0x60] sm:$0xff]
    %v240 = vld [vmem:[#allocation4 + $0x68] sm:$0xf]
    %v241 = vld [vmem:[#allocation4 + $0x6c] sm:$0xff]
    %v242 = vld [vmem:[#allocation4 + $0x74] sm:$0xf]
    %v243 = vld [vmem:[#allocation4 + $0x78] sm:$0xff]
    %v244 = vld [vmem:[#allocation4 + $0x80] sm:$0xf]
    %v245 = vld [vmem:[#allocation4 + $0x84] sm:$0xff]
    %v246 = vld [vmem:[#allocation4 + $0x8c] sm:$0xf]
    %v247 = vld [vmem:[#allocation4 + $0x90] sm:$0xff]
    %v248 = vld [vmem:[#allocation4 + $0x98] sm:$0xf]
    %v249 = vld [vmem:[#allocation4 + $0x9c] sm:$0xff]
    %v250 = vld [vmem:[#allocation4 + $0xa4] sm:$0xf]
    %v251 = vld [vmem:[#allocation4 + $0xa8] sm:$0xff]
    %v252 = vld [vmem:[#allocation4 + $0xb0] sm:$0xf]
    %v253 = vld [vmem:[#allocation4 + $0xb4] sm:$0xff]
    %v254 = vld [vmem:[#allocation4 + $0xbc] sm:$0xf]
    %v255 = vld [vmem:[%s4] sm:$0x7]
    %v257 = vperm.slane %v255, 0
    %v258 = vperm.slane %v255, 1
    %v259 = vperm.slane %v255, 2
    %v263 = vld [vmem:[#allocation3] sm:$0xff]
    %v264 = vpack.c.bf16 %v263, %v263
    %s265 = smul.u32 0, 3
    %s266 = smul.addr %s265, 8
    %s267 = scalar_lea.vmem [#allocation2], %s266
    %v268 = vld [vmem:[%s267] sm:$0xff]
    %v269 = vld [vmem:[%s267 + $0x8] sm:$0xff]
    %v270 = vld [vmem:[%s267 + $0x10] sm:$0xff]
    %v303 = vunpack.c.l.b16 %v223
    %v304 = vunpack.c.h.b16 %v223
    %v305 = vunpack.c.l.b16 %v224
    %v306 = vunpack.c.l.b16 %v225
    %v307 = vunpack.c.h.b16 %v225
    %v308 = vunpack.c.l.b16 %v226
    %v309 = vunpack.c.l.b16 %v227
    %v310 = vunpack.c.h.b16 %v227
    %v311 = vunpack.c.l.b16 %v228
    %v312 = vunpack.c.l.b16 %v229
    %v313 = vunpack.c.h.b16 %v229
    %v314 = vunpack.c.l.b16 %v230
    %v315 = vunpack.c.l.b16 %v231
    %v316 = vunpack.c.h.b16 %v231
    %v317 = vunpack.c.l.b16 %v232
    %v318 = vunpack.c.l.b16 %v233
    %v319 = vunpack.c.h.b16 %v233
    %v320 = vunpack.c.l.b16 %v234
    %v321 = vunpack.c.l.b16 %v235
    %v322 = vunpack.c.h.b16 %v235
    %v323 = vunpack.c.l.b16 %v236
    %v324 = vunpack.c.l.b16 %v237
    %v325 = vunpack.c.h.b16 %v237
    %v326 = vunpack.c.l.b16 %v238
    %v327 = vunpack.c.l.b16 %v239
    %v328 = vunpack.c.h.b16 %v239
    %v329 = vunpack.c.l.b16 %v240
    %v330 = vunpack.c.l.b16 %v241
    %v331 = vunpack.c.h.b16 %v241
    %v332 = vunpack.c.l.b16 %v242
    %v333 = vunpack.c.l.b16 %v243
    %v334 = vunpack.c.h.b16 %v243
    %v335 = vunpack.c.l.b16 %v244
    %v336 = vunpack.c.l.b16 %v245
    %v337 = vunpack.c.h.b16 %v245
    %v338 = vunpack.c.l.b16 %v246
    %v339 = vunpack.c.l.b16 %v247
    %v340 = vunpack.c.h.b16 %v247
    %v341 = vunpack.c.l.b16 %v248
    %v342 = vunpack.c.l.b16 %v249
    %v343 = vunpack.c.h.b16 %v249
    %v344 = vunpack.c.l.b16 %v250
    %v345 = vunpack.c.l.b16 %v251
    %v346 = vunpack.c.h.b16 %v251
    %v347 = vunpack.c.l.b16 %v252
    %v348 = vunpack.c.l.b16 %v253
    %v349 = vunpack.c.h.b16 %v253
    %v350 = vunpack.c.l.b16 %v254
    %v351 = vpack.c.b16 %v306, %v303
    %v352 = vpack.c.b16 %v307, %v304
    %v353 = vpack.c.b16 %v308, %v305
    %v354 = vpack.c.b16 %v312, %v309
    %v355 = vpack.c.b16 %v313, %v310
    %v356 = vpack.c.b16 %v314, %v311
    %v357 = vpack.c.b16 %v318, %v315
    %v358 = vpack.c.b16 %v319, %v316
    %v359 = vpack.c.b16 %v320, %v317
    %v360 = vpack.c.b16 %v324, %v321
    %v361 = vpack.c.b16 %v325, %v322
    %v362 = vpack.c.b16 %v326, %v323
    %v363 = vpack.c.b16 %v330, %v327
    %v364 = vpack.c.b16 %v331, %v328
    %v365 = vpack.c.b16 %v332, %v329
    %v366 = vpack.c.b16 %v336, %v333
    %v367 = vpack.c.b16 %v337, %v334
    %v368 = vpack.c.b16 %v338, %v335
    %v369 = vpack.c.b16 %v342, %v339
    %v370 = vpack.c.b16 %v343, %v340
    %v371 = vpack.c.b16 %v344, %v341
    %v372 = vpack.c.b16 %v348, %v345
    %v373 = vpack.c.b16 %v349, %v346
    %v374 = vpack.c.b16 %v350, %v347
    %399 = vmatpush.bf16.msra.mxu0 %v372
    %400 = vmatpush.bf16.msra.mxu0 %v369
    %401 = vmatpush.bf16.msra.mxu0 %v366
    %402 = vmatpush.bf16.msra.mxu0 %v363
    %403 = vmatpush.bf16.msra.mxu0 %v360
    %404 = vmatpush.bf16.msra.mxu0 %v357
    %405 = vmatpush.bf16.msra.mxu0 %v354
    %406 = vmatpush.bf16.msra.mxu0 %v351
    %407 = vmatmul.bf16.gmra.mxu0 %v264
    %v408 = vpop.f32.mrf.mxu0
    %v409 = vadd.f32 %v257, %v408
    %v410 = vpop.f32.mrf.mxu0
    %411 = vdwg.mxu0
    %412 = vmatpush.bf16.msra.mxu0 %v373
    %413 = vmatpush.bf16.msra.mxu0 %v370
    %414 = vmatpush.bf16.msra.mxu0 %v367
    %415 = vmatpush.bf16.msra.mxu0 %v364
    %416 = vmatpush.bf16.msra.mxu0 %v361
    %417 = vmatpush.bf16.msra.mxu0 %v358
    %418 = vmatpush.bf16.msra.mxu0 %v355
    %419 = vmatpush.bf16.msra.mxu0 %v352
    %420 = vmatmul.bf16.gmra.mxu0 %v264
    %v421 = vpop.f32.mrf.mxu0
    %v422 = vadd.f32 %v258, %v421
    %v423 = vpop.f32.mrf.mxu0
    %424 = vdwg.mxu0
    %425 = vmatpush.bf16.msra.mxu0 %v374
    %426 = vmatpush.bf16.msra.mxu0 %v371
    %427 = vmatpush.bf16.msra.mxu0 %v368
    %428 = vmatpush.bf16.msra.mxu0 %v365
    %429 = vmatpush.bf16.msra.mxu0 %v362
    %430 = vmatpush.bf16.msra.mxu0 %v359
    %431 = vmatpush.bf16.msra.mxu0 %v356
    %432 = vmatpush.bf16.msra.mxu0 %v353
    %433 = vmatmul.bf16.gmra.mxu0 %v264
    %v434 = vpop.f32.mrf.mxu0
    %v435 = vadd.f32 %v259, %v434
    %v436 = vpop.f32.mrf.mxu0
    %437 = vdwg.mxu0
    %v438 = vadd.f32 %v268, %v409
    %v439 = vadd.f32 %v269, %v422
    %v440 = vxor.u32 %v438, 2147483648
    %v441 = vxor.u32 %v439, 2147483648
    %v442 = vmul.f32 %v440, 1.442695
    %v443 = vpow.pop %v442
    %v444 = vmul.f32 %v441, 1.442695
    %v445 = vpow.pop %v444
    %v446 = vadd.f32 %v443, 1.0
    %v447 = vadd.f32 %v445, 1.0
    %v448 = vrcp.pop %v446
    %v449 = vmul.f32 %v446, %v448
    %v450 = vsub.f32 1.0, %v449
    %v451 = vmul.f32 %v448, %v450
    %v452 = vadd.f32 %v448, %v451
    %vm453 = vweird.f32 %v446
    %vm454 = vweird.f32 %v448
    %vm455 = vmor %vm453, %vm454
    %v456 = vsel %vm455, %v448, %v452
    %v457 = vand.u32 2147483647, %v446
    %vm458 = vcmp.eq.f32.partialorder %v457, 8.507059e+37
    %v459 = vand.u32 %v446, 2147483648
    %v460 = vor.u32 1.1754944e-38, %v459
    %v461 = vsel %vm458, %v460, %v456
    %v462 = vmul.f32 1.0, %v461
    %v463 = vrcp.pop %v447
    %v464 = vmul.f32 %v447, %v463
    %v465 = vsub.f32 1.0, %v464
    %v466 = vmul.f32 %v463, %v465
    %v467 = vadd.f32 %v463, %v466
    %vm468 = vweird.f32 %v447
    %vm469 = vweird.f32 %v463
    %vm470 = vmor %vm468, %vm469
    %v471 = vsel %vm470, %v463, %v467
    %v472 = vand.u32 2147483647, %v447
    %vm473 = vcmp.eq.f32.partialorder %v472, 8.507059e+37
    %v474 = vand.u32 %v447, 2147483648
    %v475 = vor.u32 1.1754944e-38, %v474
    %v476 = vsel %vm473, %v475, %v471
    %v477 = vmul.f32 1.0, %v476
    %v478 = vmul.f32 %v462, %v435
    %v479 = vadd.f32 %v270, %v478
    %v480 = vtanh.pop %v479
    %v481 = vsub.f32 1.0, %v477
    %v482 = vmul.f32 %v481, %v480
    %v483 = vmul.f32 %v477, %v263
    %v484 = vadd.f32 %v482, %v483
    %485 = vst [vmem:[#allocation7] sm:$0xff] %v484
    %v486 = vpack.c.bf16 %v484, %v484
    %s487 = smul.u32 1, 3
    %s488 = smul.addr %s487, 8
    %s489 = scalar_lea.vmem [#allocation2], %s488
    %v490 = vld [vmem:[%s489] sm:$0xff]
    %v491 = vld [vmem:[%s489 + $0x8] sm:$0xff]
    %v492 = vld [vmem:[%s489 + $0x10] sm:$0xff]
    %493 = vmatpush.bf16.msra.mxu0 %v372
    %494 = vmatpush.bf16.msra.mxu0 %v369
    %495 = vmatpush.bf16.msra.mxu0 %v366
    %496 = vmatpush.bf16.msra.mxu0 %v363
    %497 = vmatpush.bf16.msra.mxu0 %v360
    %498 = vmatpush.bf16.msra.mxu0 %v357
    %499 = vmatpush.bf16.msra.mxu0 %v354
    %500 = vmatpush.bf16.msra.mxu0 %v351
    %501 = vmatmul.bf16.gmra.mxu0 %v486
    %v502 = vpop.f32.mrf.mxu0
    %v503 = vadd.f32 %v257, %v502
    %v504 = vpop.f32.mrf.mxu0
    %505 = vdwg.mxu0
    %506 = vmatpush.bf16.msra.mxu0 %v373
    %507 = vmatpush.bf16.msra.mxu0 %v370
    %508 = vmatpush.bf16.msra.mxu0 %v367
    %509 = vmatpush.bf16.msra.mxu0 %v364
    %510 = vmatpush.bf16.msra.mxu0 %v361
    %511 = vmatpush.bf16.msra.mxu0 %v358
    %512 = vmatpush.bf16.msra.mxu0 %v355
    %513 = vmatpush.bf16.msra.mxu0 %v352
    %514 = vmatmul.bf16.gmra.mxu0 %v486
    %v515 = vpop.f32.mrf.mxu0
    %v516 = vadd.f32 %v258, %v515
    %v517 = vpop.f32.mrf.mxu0
    %518 = vdwg.mxu0
    %519 = vmatpush.bf16.msra.mxu0 %v374
    %520 = vmatpush.bf16.msra.mxu0 %v371
    %521 = vmatpush.bf16.msra.mxu0 %v368
    %522 = vmatpush.bf16.msra.mxu0 %v365
    %523 = vmatpush.bf16.msra.mxu0 %v362
    %524 = vmatpush.bf16.msra.mxu0 %v359
    %525 = vmatpush.bf16.msra.mxu0 %v356
    %526 = vmatpush.bf16.msra.mxu0 %v353
    %527 = vmatmul.bf16.gmra.mxu0 %v486
    %v528 = vpop.f32.mrf.mxu0
    %v529 = vadd.f32 %v259, %v528
    %v530 = vpop.f32.mrf.mxu0
    %531 = vdwg.mxu0
    %v532 = vadd.f32 %v490, %v503
    %v533 = vadd.f32 %v491, %v516
    %v534 = vxor.u32 %v532, 2147483648
    %v535 = vxor.u32 %v533, 2147483648
    %v536 = vmul.f32 %v534, 1.442695
    %v537 = vpow.pop %v536
    %v538 = vmul.f32 %v535, 1.442695
    %v539 = vpow.pop %v538
    %v540 = vadd.f32 %v537, 1.0
    %v541 = vadd.f32 %v539, 1.0
    %v542 = vrcp.pop %v540
    %v543 = vmul.f32 %v540, %v542
    %v544 = vsub.f32 1.0, %v543
    %v545 = vmul.f32 %v542, %v544
    %v546 = vadd.f32 %v542, %v545
    %vm547 = vweird.f32 %v540
    %vm548 = vweird.f32 %v542
    %vm549 = vmor %vm547, %vm548
    %v550 = vsel %vm549, %v542, %v546
    %v551 = vand.u32 2147483647, %v540
    %vm552 = vcmp.eq.f32.partialorder %v551, 8.507059e+37
    %v553 = vand.u32 %v540, 2147483648
    %v554 = vor.u32 1.1754944e-38, %v553
    %v555 = vsel %vm552, %v554, %v550
    %v556 = vmul.f32 1.0, %v555
    %v557 = vrcp.pop %v541
    %v558 = vmul.f32 %v541, %v557
    %v559 = vsub.f32 1.0, %v558
    %v560 = vmul.f32 %v557, %v559
    %v561 = vadd.f32 %v557, %v560
    %vm562 = vweird.f32 %v541
    %vm563 = vweird.f32 %v557
    %vm564 = vmor %vm562, %vm563
    %v565 = vsel %vm564, %v557, %v561
    %v566 = vand.u32 2147483647, %v541
    %vm567 = vcmp.eq.f32.partialorder %v566, 8.507059e+37
    %v568 = vand.u32 %v541, 2147483648
    %v569 = vor.u32 1.1754944e-38, %v568
    %v570 = vsel %vm567, %v569, %v565
    %v571 = vmul.f32 1.0, %v570
    %v572 = vmul.f32 %v556, %v529
    %v573 = vadd.f32 %v492, %v572
    %v574 = vtanh.pop %v573
    %v575 = vsub.f32 1.0, %v571
    %v576 = vmul.f32 %v575, %v574
    %v577 = vmul.f32 %v571, %v484
    %v578 = vadd.f32 %v576, %v577
    %s579 = scalar_lea.vmem [#allocation7], 8
    %580 = vst [vmem:[%s579] sm:$0xff] %v578
    %v581 = vpack.c.bf16 %v578, %v578
    %s582 = smul.u32 2, 3
    %s583 = smul.addr %s582, 8
    %s584 = scalar_lea.vmem [#allocation2], %s583
    %v585 = vld [vmem:[%s584] sm:$0xff]
    %v586 = vld [vmem:[%s584 + $0x8] sm:$0xff]
    %v587 = vld [vmem:[%s584 + $0x10] sm:$0xff]
    %588 = vmatpush.bf16.msra.mxu0 %v372
    %589 = vmatpush.bf16.msra.mxu0 %v369
    %590 = vmatpush.bf16.msra.mxu0 %v366
    %591 = vmatpush.bf16.msra.mxu0 %v363
    %592 = vmatpush.bf16.msra.mxu0 %v360
    %593 = vmatpush.bf16.msra.mxu0 %v357
    %594 = vmatpush.bf16.msra.mxu0 %v354
    %595 = vmatpush.bf16.msra.mxu0 %v351
    %596 = vmatmul.bf16.gmra.mxu0 %v581
    %v597 = vpop.f32.mrf.mxu0
    %v598 = vadd.f32 %v257, %v597
    %v599 = vpop.f32.mrf.mxu0
    %600 = vdwg.mxu0
    %601 = vmatpush.bf16.msra.mxu0 %v373
    %602 = vmatpush.bf16.msra.mxu0 %v370
    %603 = vmatpush.bf16.msra.mxu0 %v367
    %604 = vmatpush.bf16.msra.mxu0 %v364
    %605 = vmatpush.bf16.msra.mxu0 %v361
    %606 = vmatpush.bf16.msra.mxu0 %v358
    %607 = vmatpush.bf16.msra.mxu0 %v355
    %608 = vmatpush.bf16.msra.mxu0 %v352
    %609 = vmatmul.bf16.gmra.mxu0 %v581
    %v610 = vpop.f32.mrf.mxu0
    %v611 = vadd.f32 %v258, %v610
    %v612 = vpop.f32.mrf.mxu0
    %613 = vdwg.mxu0
    %614 = vmatpush.bf16.msra.mxu0 %v374
    %615 = vmatpush.bf16.msra.mxu0 %v371
    %616 = vmatpush.bf16.msra.mxu0 %v368
    %617 = vmatpush.bf16.msra.mxu0 %v365
    %618 = vmatpush.bf16.msra.mxu0 %v362
    %619 = vmatpush.bf16.msra.mxu0 %v359
    %620 = vmatpush.bf16.msra.mxu0 %v356
    %621 = vmatpush.bf16.msra.mxu0 %v353
    %622 = vmatmul.bf16.gmra.mxu0 %v581
    %v623 = vpop.f32.mrf.mxu0
    %v624 = vadd.f32 %v259, %v623
    %v625 = vpop.f32.mrf.mxu0
    %626 = vdwg.mxu0
    %v627 = vadd.f32 %v585, %v598
    %v628 = vadd.f32 %v586, %v611
    %v629 = vxor.u32 %v627, 2147483648
    %v630 = vxor.u32 %v628, 2147483648
    %v631 = vmul.f32 %v629, 1.442695
    %v632 = vpow.pop %v631
    %v633 = vmul.f32 %v630, 1.442695
    %v634 = vpow.pop %v633
    %v635 = vadd.f32 %v632, 1.0
    %v636 = vadd.f32 %v634, 1.0
    %v637 = vrcp.pop %v635
    %v638 = vmul.f32 %v635, %v637
    %v639 = vsub.f32 1.0, %v638
    %v640 = vmul.f32 %v637, %v639
    %v641 = vadd.f32 %v637, %v640
    %vm642 = vweird.f32 %v635
    %vm643 = vweird.f32 %v637
    %vm644 = vmor %vm642, %vm643
    %v645 = vsel %vm644, %v637, %v641
    %v646 = vand.u32 2147483647, %v635
    %vm647 = vcmp.eq.f32.partialorder %v646, 8.507059e+37
    %v648 = vand.u32 %v635, 2147483648
    %v649 = vor.u32 1.1754944e-38, %v648
    %v650 = vsel %vm647, %v649, %v645
    %v651 = vmul.f32 1.0, %v650
    %v652 = vrcp.pop %v636
    %v653 = vmul.f32 %v636, %v652
    %v654 = vsub.f32 1.0, %v653
    %v655 = vmul.f32 %v652, %v654
    %v656 = vadd.f32 %v652, %v655
    %vm657 = vweird.f32 %v636
    %vm658 = vweird.f32 %v652
    %vm659 = vmor %vm657, %vm658
    %v660 = vsel %vm659, %v652, %v656
    %v661 = vand.u32 2147483647, %v636
    %vm662 = vcmp.eq.f32.partialorder %v661, 8.507059e+37
    %v663 = vand.u32 %v636, 2147483648
    %v664 = vor.u32 1.1754944e-38, %v663
    %v665 = vsel %vm662, %v664, %v660
    %v666 = vmul.f32 1.0, %v665
    %v667 = vmul.f32 %v651, %v624
    %v668 = vadd.f32 %v587, %v667
    %v669 = vtanh.pop %v668
    %v670 = vsub.f32 1.0, %v666
    %v671 = vmul.f32 %v670, %v669
    %v672 = vmul.f32 %v666, %v578
    %v673 = vadd.f32 %v671, %v672
    %s674 = scalar_lea.vmem [#allocation7], 16
    %675 = vst [vmem:[%s674] sm:$0xff] %v673
    %v676 = vpack.c.bf16 %v673, %v673
    %s677 = smul.u32 3, 3
    %s678 = smul.addr %s677, 8
    %s679 = scalar_lea.vmem [#allocation2], %s678
    %v680 = vld [vmem:[%s679] sm:$0xff]
    %v681 = vld [vmem:[%s679 + $0x8] sm:$0xff]
    %v682 = vld [vmem:[%s679 + $0x10] sm:$0xff]
    %683 = vmatpush.bf16.msra.mxu0 %v372
    %684 = vmatpush.bf16.msra.mxu0 %v369
    %685 = vmatpush.bf16.msra.mxu0 %v366
    %686 = vmatpush.bf16.msra.mxu0 %v363
    %687 = vmatpush.bf16.msra.mxu0 %v360
    %688 = vmatpush.bf16.msra.mxu0 %v357
    %689 = vmatpush.bf16.msra.mxu0 %v354
    %690 = vmatpush.bf16.msra.mxu0 %v351
    %691 = vmatmul.bf16.gmra.mxu0 %v676
    %v692 = vpop.f32.mrf.mxu0
    %v693 = vadd.f32 %v257, %v692
    %v694 = vpop.f32.mrf.mxu0
    %695 = vdwg.mxu0
    %696 = vmatpush.bf16.msra.mxu0 %v373
    %697 = vmatpush.bf16.msra.mxu0 %v370
    %698 = vmatpush.bf16.msra.mxu0 %v367
    %699 = vmatpush.bf16.msra.mxu0 %v364
    %700 = vmatpush.bf16.msra.mxu0 %v361
    %701 = vmatpush.bf16.msra.mxu0 %v358
    %702 = vmatpush.bf16.msra.mxu0 %v355
    %703 = vmatpush.bf16.msra.mxu0 %v352
    %704 = vmatmul.bf16.gmra.mxu0 %v676
    %v705 = vpop.f32.mrf.mxu0
    %v706 = vadd.f32 %v258, %v705
    %v707 = vpop.f32.mrf.mxu0
    %708 = vdwg.mxu0
    %709 = vmatpush.bf16.msra.mxu0 %v374
    %710 = vmatpush.bf16.msra.mxu0 %v371
    %711 = vmatpush.bf16.msra.mxu0 %v368
    %712 = vmatpush.bf16.msra.mxu0 %v365
    %713 = vmatpush.bf16.msra.mxu0 %v362
    %714 = vmatpush.bf16.msra.mxu0 %v359
    %715 = vmatpush.bf16.msra.mxu0 %v356
    %716 = vmatpush.bf16.msra.mxu0 %v353
    %717 = vmatmul.bf16.gmra.mxu0 %v676
    %v718 = vpop.f32.mrf.mxu0
    %v719 = vadd.f32 %v259, %v718
    %v720 = vpop.f32.mrf.mxu0
    %721 = vdwg.mxu0
    %v722 = vadd.f32 %v680, %v693
    %v723 = vadd.f32 %v681, %v706
    %v724 = vxor.u32 %v722, 2147483648
    %v725 = vxor.u32 %v723, 2147483648
    %v726 = vmul.f32 %v724, 1.442695
    %v727 = vpow.pop %v726
    %v728 = vmul.f32 %v725, 1.442695
    %v729 = vpow.pop %v728
    %v730 = vadd.f32 %v727, 1.0
    %v731 = vadd.f32 %v729, 1.0
    %v732 = vrcp.pop %v730
    %v733 = vmul.f32 %v730, %v732
    %v734 = vsub.f32 1.0, %v733
    %v735 = vmul.f32 %v732, %v734
    %v736 = vadd.f32 %v732, %v735
    %vm737 = vweird.f32 %v730
    %vm738 = vweird.f32 %v732
    %vm739 = vmor %vm737, %vm738
    %v740 = vsel %vm739, %v732, %v736
    %v741 = vand.u32 2147483647, %v730
    %vm742 = vcmp.eq.f32.partialorder %v741, 8.507059e+37
    %v743 = vand.u32 %v730, 2147483648
    %v744 = vor.u32 1.1754944e-38, %v743
    %v745 = vsel %vm742, %v744, %v740
    %v746 = vmul.f32 1.0, %v745
    %v747 = vrcp.pop %v731
    %v748 = vmul.f32 %v731, %v747
    %v749 = vsub.f32 1.0, %v748
    %v750 = vmul.f32 %v747, %v749
    %v751 = vadd.f32 %v747, %v750
    %vm752 = vweird.f32 %v731
    %vm753 = vweird.f32 %v747
    %vm754 = vmor %vm752, %vm753
    %v755 = vsel %vm754, %v747, %v751
    %v756 = vand.u32 2147483647, %v731
    %vm757 = vcmp.eq.f32.partialorder %v756, 8.507059e+37
    %v758 = vand.u32 %v731, 2147483648
    %v759 = vor.u32 1.1754944e-38, %v758
    %v760 = vsel %vm757, %v759, %v755
    %v761 = vmul.f32 1.0, %v760
    %v762 = vmul.f32 %v746, %v719
    %v763 = vadd.f32 %v682, %v762
    %v764 = vtanh.pop %v763
    %v765 = vsub.f32 1.0, %v761
    %v766 = vmul.f32 %v765, %v764
    %v767 = vmul.f32 %v761, %v673
    %v768 = vadd.f32 %v766, %v767
    %s769 = scalar_lea.vmem [#allocation7], 24
    %770 = vst [vmem:[%s769] sm:$0xff] %v768
    %v771 = vpack.c.bf16 %v768, %v768
    %s772 = smul.u32 4, 3
    %s773 = smul.addr %s772, 8
    %s774 = scalar_lea.vmem [#allocation2], %s773
    %v775 = vld [vmem:[%s774] sm:$0xff]
    %v776 = vld [vmem:[%s774 + $0x8] sm:$0xff]
    %v777 = vld [vmem:[%s774 + $0x10] sm:$0xff]
    %778 = vmatpush.bf16.msra.mxu0 %v372
    %779 = vmatpush.bf16.msra.mxu0 %v369
    %780 = vmatpush.bf16.msra.mxu0 %v366
    %781 = vmatpush.bf16.msra.mxu0 %v363
    %782 = vmatpush.bf16.msra.mxu0 %v360
    %783 = vmatpush.bf16.msra.mxu0 %v357
    %784 = vmatpush.bf16.msra.mxu0 %v354
    %785 = vmatpush.bf16.msra.mxu0 %v351
    %786 = vmatmul.bf16.gmra.mxu0 %v771
    %v787 = vpop.f32.mrf.mxu0
    %v788 = vadd.f32 %v257, %v787
    %v789 = vpop.f32.mrf.mxu0
    %790 = vdwg.mxu0
    %791 = vmatpush.bf16.msra.mxu0 %v373
    %792 = vmatpush.bf16.msra.mxu0 %v370
    %793 = vmatpush.bf16.msra.mxu0 %v367
    %794 = vmatpush.bf16.msra.mxu0 %v364
    %795 = vmatpush.bf16.msra.mxu0 %v361
    %796 = vmatpush.bf16.msra.mxu0 %v358
    %797 = vmatpush.bf16.msra.mxu0 %v355
    %798 = vmatpush.bf16.msra.mxu0 %v352
    %799 = vmatmul.bf16.gmra.mxu0 %v771
    %v800 = vpop.f32.mrf.mxu0
    %v801 = vadd.f32 %v258, %v800
    %v802 = vpop.f32.mrf.mxu0
    %803 = vdwg.mxu0
    %804 = vmatpush.bf16.msra.mxu0 %v374
    %805 = vmatpush.bf16.msra.mxu0 %v371
    %806 = vmatpush.bf16.msra.mxu0 %v368
    %807 = vmatpush.bf16.msra.mxu0 %v365
    %808 = vmatpush.bf16.msra.mxu0 %v362
    %809 = vmatpush.bf16.msra.mxu0 %v359
    %810 = vmatpush.bf16.msra.mxu0 %v356
    %811 = vmatpush.bf16.msra.mxu0 %v353
    %812 = vmatmul.bf16.gmra.mxu0 %v771
    %v813 = vpop.f32.mrf.mxu0
    %v814 = vadd.f32 %v259, %v813
    %v815 = vpop.f32.mrf.mxu0
    %816 = vdwg.mxu0
    %v817 = vadd.f32 %v775, %v788
    %v818 = vadd.f32 %v776, %v801
    %v819 = vxor.u32 %v817, 2147483648
    %v820 = vxor.u32 %v818, 2147483648
    %v821 = vmul.f32 %v819, 1.442695
    %v822 = vpow.pop %v821
    %v823 = vmul.f32 %v820, 1.442695
    %v824 = vpow.pop %v823
    %v825 = vadd.f32 %v822, 1.0
    %v826 = vadd.f32 %v824, 1.0
    %v827 = vrcp.pop %v825
    %v828 = vmul.f32 %v825, %v827
    %v829 = vsub.f32 1.0, %v828
    %v830 = vmul.f32 %v827, %v829
    %v831 = vadd.f32 %v827, %v830
    %vm832 = vweird.f32 %v825
    %vm833 = vweird.f32 %v827
    %vm834 = vmor %vm832, %vm833
    %v835 = vsel %vm834, %v827, %v831
    %v836 = vand.u32 2147483647, %v825
    %vm837 = vcmp.eq.f32.partialorder %v836, 8.507059e+37
    %v838 = vand.u32 %v825, 2147483648
    %v839 = vor.u32 1.1754944e-38, %v838
    %v840 = vsel %vm837, %v839, %v835
    %v841 = vmul.f32 1.0, %v840
    %v842 = vrcp.pop %v826
    %v843 = vmul.f32 %v826, %v842
    %v844 = vsub.f32 1.0, %v843
    %v845 = vmul.f32 %v842, %v844
    %v846 = vadd.f32 %v842, %v845
    %vm847 = vweird.f32 %v826
    %vm848 = vweird.f32 %v842
    %vm849 = vmor %vm847, %vm848
    %v850 = vsel %vm849, %v842, %v846
    %v851 = vand.u32 2147483647, %v826
    %vm852 = vcmp.eq.f32.partialorder %v851, 8.507059e+37
    %v853 = vand.u32 %v826, 2147483648
    %v854 = vor.u32 1.1754944e-38, %v853
    %v855 = vsel %vm852, %v854, %v850
    %v856 = vmul.f32 1.0, %v855
    %v857 = vmul.f32 %v841, %v814
    %v858 = vadd.f32 %v777, %v857
    %v859 = vtanh.pop %v858
    %v860 = vsub.f32 1.0, %v856
    %v861 = vmul.f32 %v860, %v859
    %v862 = vmul.f32 %v856, %v768
    %v863 = vadd.f32 %v861, %v862
    %s864 = scalar_lea.vmem [#allocation7], 32
    %865 = vst [vmem:[%s864] sm:$0xff] %v863
    %v866 = vpack.c.bf16 %v863, %v863
    %s867 = smul.u32 5, 3
    %s868 = smul.addr %s867, 8
    %s869 = scalar_lea.vmem [#allocation2], %s868
    %v870 = vld [vmem:[%s869] sm:$0xff]
    %v871 = vld [vmem:[%s869 + $0x8] sm:$0xff]
    %v872 = vld [vmem:[%s869 + $0x10] sm:$0xff]
    %873 = vmatpush.bf16.msra.mxu0 %v372
    %874 = vmatpush.bf16.msra.mxu0 %v369
    %875 = vmatpush.bf16.msra.mxu0 %v366
    %876 = vmatpush.bf16.msra.mxu0 %v363
    %877 = vmatpush.bf16.msra.mxu0 %v360
    %878 = vmatpush.bf16.msra.mxu0 %v357
    %879 = vmatpush.bf16.msra.mxu0 %v354
    %880 = vmatpush.bf16.msra.mxu0 %v351
    %881 = vmatmul.bf16.gmra.mxu0 %v866
    %v882 = vpop.f32.mrf.mxu0
    %v883 = vadd.f32 %v257, %v882
    %v884 = vpop.f32.mrf.mxu0
    %885 = vdwg.mxu0
    %886 = vmatpush.bf16.msra.mxu0 %v373
    %887 = vmatpush.bf16.msra.mxu0 %v370
    %888 = vmatpush.bf16.msra.mxu0 %v367
    %889 = vmatpush.bf16.msra.mxu0 %v364
    %890 = vmatpush.bf16.msra.mxu0 %v361
    %891 = vmatpush.bf16.msra.mxu0 %v358
    %892 = vmatpush.bf16.msra.mxu0 %v355
    %893 = vmatpush.bf16.msra.mxu0 %v352
    %894 = vmatmul.bf16.gmra.mxu0 %v866
    %v895 = vpop.f32.mrf.mxu0
    %v896 = vadd.f32 %v258, %v895
    %v897 = vpop.f32.mrf.mxu0
    %898 = vdwg.mxu0
    %899 = vmatpush.bf16.msra.mxu0 %v374
    %900 = vmatpush.bf16.msra.mxu0 %v371
    %901 = vmatpush.bf16.msra.mxu0 %v368
    %902 = vmatpush.bf16.msra.mxu0 %v365
    %903 = vmatpush.bf16.msra.mxu0 %v362
    %904 = vmatpush.bf16.msra.mxu0 %v359
    %905 = vmatpush.bf16.msra.mxu0 %v356
    %906 = vmatpush.bf16.msra.mxu0 %v353
    %907 = vmatmul.bf16.gmra.mxu0 %v866
    %v908 = vpop.f32.mrf.mxu0
    %v909 = vadd.f32 %v259, %v908
    %v910 = vpop.f32.mrf.mxu0
    %911 = vdwg.mxu0
    %v912 = vadd.f32 %v870, %v883
    %v913 = vadd.f32 %v871, %v896
    %v914 = vxor.u32 %v912, 2147483648
    %v915 = vxor.u32 %v913, 2147483648
    %v916 = vmul.f32 %v914, 1.442695
    %v917 = vpow.pop %v916
    %v918 = vmul.f32 %v915, 1.442695
    %v919 = vpow.pop %v918
    %v920 = vadd.f32 %v917, 1.0
    %v921 = vadd.f32 %v919, 1.0
    %v922 = vrcp.pop %v920
    %v923 = vmul.f32 %v920, %v922
    %v924 = vsub.f32 1.0, %v923
    %v925 = vmul.f32 %v922, %v924
    %v926 = vadd.f32 %v922, %v925
    %vm927 = vweird.f32 %v920
    %vm928 = vweird.f32 %v922
    %vm929 = vmor %vm927, %vm928
    %v930 = vsel %vm929, %v922, %v926
    %v931 = vand.u32 2147483647, %v920
    %vm932 = vcmp.eq.f32.partialorder %v931, 8.507059e+37
    %v933 = vand.u32 %v920, 2147483648
    %v934 = vor.u32 1.1754944e-38, %v933
    %v935 = vsel %vm932, %v934, %v930
    %v936 = vmul.f32 1.0, %v935
    %v937 = vrcp.pop %v921
    %v938 = vmul.f32 %v921, %v937
    %v939 = vsub.f32 1.0, %v938
    %v940 = vmul.f32 %v937, %v939
    %v941 = vadd.f32 %v937, %v940
    %vm942 = vweird.f32 %v921
    %vm943 = vweird.f32 %v937
    %vm944 = vmor %vm942, %vm943
    %v945 = vsel %vm944, %v937, %v941
    %v946 = vand.u32 2147483647, %v921
    %vm947 = vcmp.eq.f32.partialorder %v946, 8.507059e+37
    %v948 = vand.u32 %v921, 2147483648
    %v949 = vor.u32 1.1754944e-38, %v948
    %v950 = vsel %vm947, %v949, %v945
    %v951 = vmul.f32 1.0, %v950
    %v952 = vmul.f32 %v936, %v909
    %v953 = vadd.f32 %v872, %v952
    %v954 = vtanh.pop %v953
    %v955 = vsub.f32 1.0, %v951
    %v956 = vmul.f32 %v955, %v954
    %v957 = vmul.f32 %v951, %v863
    %v958 = vadd.f32 %v956, %v957
    %s959 = scalar_lea.vmem [#allocation7], 40
    %960 = vst [vmem:[%s959] sm:$0xff] %v958
    %v961 = vpack.c.bf16 %v958, %v958
    %s962 = smul.u32 6, 3
    %s963 = smul.addr %s962, 8
    %s964 = scalar_lea.vmem [#allocation2], %s963
    %v965 = vld [vmem:[%s964] sm:$0xff]
    %v966 = vld [vmem:[%s964 + $0x8] sm:$0xff]
    %v967 = vld [vmem:[%s964 + $0x10] sm:$0xff]
    %968 = vmatpush.bf16.msra.mxu0 %v372
    %969 = vmatpush.bf16.msra.mxu0 %v369
    %970 = vmatpush.bf16.msra.mxu0 %v366
    %971 = vmatpush.bf16.msra.mxu0 %v363
    %972 = vmatpush.bf16.msra.mxu0 %v360
    %973 = vmatpush.bf16.msra.mxu0 %v357
    %974 = vmatpush.bf16.msra.mxu0 %v354
    %975 = vmatpush.bf16.msra.mxu0 %v351
    %976 = vmatmul.bf16.gmra.mxu0 %v961
    %v977 = vpop.f32.mrf.mxu0
    %v978 = vadd.f32 %v257, %v977
    %v979 = vpop.f32.mrf.mxu0
    %980 = vdwg.mxu0
    %981 = vmatpush.bf16.msra.mxu0 %v373
    %982 = vmatpush.bf16.msra.mxu0 %v370
    %983 = vmatpush.bf16.msra.mxu0 %v367
    %984 = vmatpush.bf16.msra.mxu0 %v364
    %985 = vmatpush.bf16.msra.mxu0 %v361
    %986 = vmatpush.bf16.msra.mxu0 %v358
    %987 = vmatpush.bf16.msra.mxu0 %v355
    %988 = vmatpush.bf16.msra.mxu0 %v352
    %989 = vmatmul.bf16.gmra.mxu0 %v961
    %v990 = vpop.f32.mrf.mxu0
    %v991 = vadd.f32 %v258, %v990
    %v992 = vpop.f32.mrf.mxu0
    %993 = vdwg.mxu0
    %994 = vmatpush.bf16.msra.mxu0 %v374
    %995 = vmatpush.bf16.msra.mxu0 %v371
    %996 = vmatpush.bf16.msra.mxu0 %v368
    %997 = vmatpush.bf16.msra.mxu0 %v365
    %998 = vmatpush.bf16.msra.mxu0 %v362
    %999 = vmatpush.bf16.msra.mxu0 %v359
    %1000 = vmatpush.bf16.msra.mxu0 %v356
    %1001 = vmatpush.bf16.msra.mxu0 %v353
    %1002 = vmatmul.bf16.gmra.mxu0 %v961
    %v1003 = vpop.f32.mrf.mxu0
    %v1004 = vadd.f32 %v259, %v1003
    %v1005 = vpop.f32.mrf.mxu0
    %1006 = vdwg.mxu0
    %v1007 = vadd.f32 %v965, %v978
    %v1008 = vadd.f32 %v966, %v991
    %v1009 = vxor.u32 %v1007, 2147483648
    %v1010 = vxor.u32 %v1008, 2147483648
    %v1011 = vmul.f32 %v1009, 1.442695
    %v1012 = vpow.pop %v1011
    %v1013 = vmul.f32 %v1010, 1.442695
    %v1014 = vpow.pop %v1013
    %v1015 = vadd.f32 %v1012, 1.0
    %v1016 = vadd.f32 %v1014, 1.0
    %v1017 = vrcp.pop %v1015
    %v1018 = vmul.f32 %v1015, %v1017
    %v1019 = vsub.f32 1.0, %v1018
    %v1020 = vmul.f32 %v1017, %v1019
    %v1021 = vadd.f32 %v1017, %v1020
    %vm1022 = vweird.f32 %v1015
    %vm1023 = vweird.f32 %v1017
    %vm1024 = vmor %vm1022, %vm1023
    %v1025 = vsel %vm1024, %v1017, %v1021
    %v1026 = vand.u32 2147483647, %v1015
    %vm1027 = vcmp.eq.f32.partialorder %v1026, 8.507059e+37
    %v1028 = vand.u32 %v1015, 2147483648
    %v1029 = vor.u32 1.1754944e-38, %v1028
    %v1030 = vsel %vm1027, %v1029, %v1025
    %v1031 = vmul.f32 1.0, %v1030
    %v1032 = vrcp.pop %v1016
    %v1033 = vmul.f32 %v1016, %v1032
    %v1034 = vsub.f32 1.0, %v1033
    %v1035 = vmul.f32 %v1032, %v1034
    %v1036 = vadd.f32 %v1032, %v1035
    %vm1037 = vweird.f32 %v1016
    %vm1038 = vweird.f32 %v1032
    %vm1039 = vmor %vm1037, %vm1038
    %v1040 = vsel %vm1039, %v1032, %v1036
    %v1041 = vand.u32 2147483647, %v1016
    %vm1042 = vcmp.eq.f32.partialorder %v1041, 8.507059e+37
    %v1043 = vand.u32 %v1016, 2147483648
    %v1044 = vor.u32 1.1754944e-38, %v1043
    %v1045 = vsel %vm1042, %v1044, %v1040
    %v1046 = vmul.f32 1.0, %v1045
    %v1047 = vmul.f32 %v1031, %v1004
    %v1048 = vadd.f32 %v967, %v1047
    %v1049 = vtanh.pop %v1048
    %v1050 = vsub.f32 1.0, %v1046
    %v1051 = vmul.f32 %v1050, %v1049
    %v1052 = vmul.f32 %v1046, %v958
    %v1053 = vadd.f32 %v1051, %v1052
    %s1054 = scalar_lea.vmem [#allocation7], 48
    %1055 = vst [vmem:[%s1054] sm:$0xff] %v1053
    %v1056 = vpack.c.bf16 %v1053, %v1053
    %s1057 = smul.u32 7, 3
    %s1058 = smul.addr %s1057, 8
    %s1059 = scalar_lea.vmem [#allocation2], %s1058
    %v1060 = vld [vmem:[%s1059] sm:$0xff]
    %v1061 = vld [vmem:[%s1059 + $0x8] sm:$0xff]
    %v1062 = vld [vmem:[%s1059 + $0x10] sm:$0xff]
    %1063 = vmatpush.bf16.msra.mxu0 %v372
    %1064 = vmatpush.bf16.msra.mxu0 %v369
    %1065 = vmatpush.bf16.msra.mxu0 %v366
    %1066 = vmatpush.bf16.msra.mxu0 %v363
    %1067 = vmatpush.bf16.msra.mxu0 %v360
    %1068 = vmatpush.bf16.msra.mxu0 %v357
    %1069 = vmatpush.bf16.msra.mxu0 %v354
    %1070 = vmatpush.bf16.msra.mxu0 %v351
    %1071 = vmatmul.bf16.gmra.mxu0 %v1056
    %v1072 = vpop.f32.mrf.mxu0
    %v1073 = vadd.f32 %v257, %v1072
    %v1074 = vpop.f32.mrf.mxu0
    %1075 = vdwg.mxu0
    %1076 = vmatpush.bf16.msra.mxu0 %v373
    %1077 = vmatpush.bf16.msra.mxu0 %v370
    %1078 = vmatpush.bf16.msra.mxu0 %v367
    %1079 = vmatpush.bf16.msra.mxu0 %v364
    %1080 = vmatpush.bf16.msra.mxu0 %v361
    %1081 = vmatpush.bf16.msra.mxu0 %v358
    %1082 = vmatpush.bf16.msra.mxu0 %v355
    %1083 = vmatpush.bf16.msra.mxu0 %v352
    %1084 = vmatmul.bf16.gmra.mxu0 %v1056
    %v1085 = vpop.f32.mrf.mxu0
    %v1086 = vadd.f32 %v258, %v1085
    %v1087 = vpop.f32.mrf.mxu0
    %1088 = vdwg.mxu0
    %1089 = vmatpush.bf16.msra.mxu0 %v374
    %1090 = vmatpush.bf16.msra.mxu0 %v371
    %1091 = vmatpush.bf16.msra.mxu0 %v368
    %1092 = vmatpush.bf16.msra.mxu0 %v365
    %1093 = vmatpush.bf16.msra.mxu0 %v362
    %1094 = vmatpush.bf16.msra.mxu0 %v359
    %1095 = vmatpush.bf16.msra.mxu0 %v356
    %1096 = vmatpush.bf16.msra.mxu0 %v353
    %1097 = vmatmul.bf16.gmra.mxu0 %v1056
    %v1098 = vpop.f32.mrf.mxu0
    %v1099 = vadd.f32 %v259, %v1098
    %v1100 = vpop.f32.mrf.mxu0
    %1101 = vdwg.mxu0
    %v1102 = vadd.f32 %v1060, %v1073
    %v1103 = vadd.f32 %v1061, %v1086
    %v1104 = vxor.u32 %v1102, 2147483648
    %v1105 = vxor.u32 %v1103, 2147483648
    %v1106 = vmul.f32 %v1104, 1.442695
    %v1107 = vpow.pop %v1106
    %v1108 = vmul.f32 %v1105, 1.442695
    %v1109 = vpow.pop %v1108
    %v1110 = vadd.f32 %v1107, 1.0
    %v1111 = vadd.f32 %v1109, 1.0
    %v1112 = vrcp.pop %v1110
    %v1113 = vmul.f32 %v1110, %v1112
    %v1114 = vsub.f32 1.0, %v1113
    %v1115 = vmul.f32 %v1112, %v1114
    %v1116 = vadd.f32 %v1112, %v1115
    %vm1117 = vweird.f32 %v1110
    %vm1118 = vweird.f32 %v1112
    %vm1119 = vmor %vm1117, %vm1118
    %v1120 = vsel %vm1119, %v1112, %v1116
    %v1121 = vand.u32 2147483647, %v1110
    %vm1122 = vcmp.eq.f32.partialorder %v1121, 8.507059e+37
    %v1123 = vand.u32 %v1110, 2147483648
    %v1124 = vor.u32 1.1754944e-38, %v1123
    %v1125 = vsel %vm1122, %v1124, %v1120
    %v1126 = vmul.f32 1.0, %v1125
    %v1127 = vrcp.pop %v1111
    %v1128 = vmul.f32 %v1111, %v1127
    %v1129 = vsub.f32 1.0, %v1128
    %v1130 = vmul.f32 %v1127, %v1129
    %v1131 = vadd.f32 %v1127, %v1130
    %vm1132 = vweird.f32 %v1111
    %vm1133 = vweird.f32 %v1127
    %vm1134 = vmor %vm1132, %vm1133
    %v1135 = vsel %vm1134, %v1127, %v1131
    %v1136 = vand.u32 2147483647, %v1111
    %vm1137 = vcmp.eq.f32.partialorder %v1136, 8.507059e+37
    %v1138 = vand.u32 %v1111, 2147483648
    %v1139 = vor.u32 1.1754944e-38, %v1138
    %v1140 = vsel %vm1137, %v1139, %v1135
    %v1141 = vmul.f32 1.0, %v1140
    %v1142 = vmul.f32 %v1126, %v1099
    %v1143 = vadd.f32 %v1062, %v1142
    %v1144 = vtanh.pop %v1143
    %v1145 = vsub.f32 1.0, %v1141
    %v1146 = vmul.f32 %v1145, %v1144
    %v1147 = vmul.f32 %v1141, %v1053
    %v1148 = vadd.f32 %v1146, %v1147
    %s1149 = scalar_lea.vmem [#allocation7], 56
    %1150 = vst [vmem:[%s1149] sm:$0xff] %v1148
    %1151 = vst [vmem:[#allocation3] sm:$0xff] %v1148
    // Predicated region
    $region30: #{tpu_custom_call.1} parent=1 // pred_check
      _
    $region31: #{tpu_custom_call.1} parent=1 // pred_check_branch
      %1153 = sbr.rel (0) target = $region33
    $region32: #{tpu_custom_call.1} parent=1 // pred_region
      %1155 = vsyncadd [#allocation6], 0
      %s1156 = sshll.u32 [#allocation7], 4
      %s1157 = int_to_ptr.vmem [resolvable:$true] %s1156
      %s1158 = sshll.u32 %s5, 4
      %s1159 = int_to_ptr.hbm [resolvable:$true] %s1158
      %1164 = dma.vmem_to_hbm [thread:$0]  %s1157, 1024, %s1159, [#allocation6], 128, 128, 8
    $region33: #{tpu_custom_call.1} parent=1 // pred_fallthru
      _
    // Predicated region
    $region34: #{tpu_custom_call.1} parent=1 // pred_check
      _
    $region35: #{tpu_custom_call.1} parent=1 // pred_check_branch
      %1166 = sbr.rel (0) target = $region37
    $region36: #{tpu_custom_call.1} parent=1 // pred_region
      %1168 = dma.done [#allocation6], 1024
    $region37: #{tpu_custom_call.1} parent=1 // pred_fallthru
      _
    %1169 = vsyncpa [#allocation5], 1
    %1170 = vsyncpa [#allocation6], 1

</llo_original>
